<compile_context>
chip_gen: v5e
topology: v5e:2x2
jax: 0.10.0
libtpu: 0.0.40
codegen_flags: <defaults>
</compile_context>

<pallas_src>
import math
from functools import partial

import jax
import jax.numpy as jnp
from jax import lax
from jax.experimental import pallas as pl
from jax.experimental.pallas import tpu as pltpu

# Whole-array VMEM residency (single copy, no windowing / double buffering).
_VMEM_FULL = pl.BlockSpec(memory_space=pltpu.MemorySpace.VMEM)

_VMEM_LIMIT_CACHE = None


def _vmem_limit_bytes():
    """Generation-aware scoped-VMEM budget: ~48 MiB on v7x, ~96 MiB on v5e/v6e."""
    global _VMEM_LIMIT_CACHE
    if _VMEM_LIMIT_CACHE is None:
        cap = 128 * 1024 * 1024
        try:
            cap = int(getattr(pltpu.get_tpu_info(), "vmem_capacity_bytes", cap)) or cap
        except Exception:
            pass
        _VMEM_LIMIT_CACHE = int(min(cap * 3 // 4, 100 * 1024 * 1024))
    return _VMEM_LIMIT_CACHE


def _cparams(n_grid_axes=0):
    if n_grid_axes:
        return pltpu.CompilerParams(
            dimension_semantics=("parallel",) * n_grid_axes,
            vmem_limit_bytes=_vmem_limit_bytes())
    return pltpu.CompilerParams(vmem_limit_bytes=_vmem_limit_bytes())


def _round_up(x, m):
    return (x + m - 1) // m * m


def _ln_f32(x32, g_ref, b_ref):
    # fp32 LayerNorm (fp16-safe LayerNorm subclass), eps = 1e-5.
    mean = jnp.mean(x32, axis=-1, keepdims=True)
    var = jnp.mean((x32 - mean) ** 2, axis=-1, keepdims=True)
    y = (x32 - mean) * lax.rsqrt(var + 1e-5)
    return y * g_ref[...].astype(jnp.float32) + b_ref[...].astype(jnp.float32)


# ----------------------------- Pallas kernels --------------------------------
def _attn_block_kernel(x_ref, pre_g_ref, pre_b_ref, g_ref, b_ref,
                       wqkv_ref, bqkv_ref, wo_ref, bo_ref, o_ref,
                       k_buf, v_buf, attn_buf,
                       *, causal, fuse_ln_pre, tkv):
    # fused: [ln_pre ->] base + out_proj(flash_MHA(ln_1(base)))
    # One batch element per grid step; KV length tiled by tkv (online softmax).
    x = x_ref[...]                                       # (1, L, D)
    _, L, D = x.shape
    H, L_pad, hd = k_buf.shape
    n_kv = L_pad // tkv

    xf = x.astype(jnp.float32)
    base = _ln_f32(xf, pre_g_ref, pre_b_ref) if fuse_ln_pre else xf  # residual base
    xn = _ln_f32(base, g_ref, b_ref).astype(jnp.bfloat16)            # (1, L, D)

    # Batched-head QKV projection (bf16 MXU operands, f32 accumulation).
    xb = jnp.broadcast_to(xn, (H, L, D))
    qkv = jnp.einsum('hld,hde->hle', xb, wqkv_ref[...],
                     preferred_element_type=jnp.float32)              # (H, L, 3*hd)
    qkv = qkv + bqkv_ref[...].astype(jnp.float32)                     # Q pre-scaled
    q = qkv[..., 0:hd].astype(jnp.bfloat16)
    k = qkv[..., hd:2 * hd].astype(jnp.bfloat16)
    v = qkv[..., 2 * hd:3 * hd].astype(jnp.bfloat16)

    if L_pad == L:
        k_buf[...] = k
        v_buf[...] = v
    else:
        zpad = jnp.zeros((H, L_pad - L, hd), jnp.bfloat16)
        k_buf[:, 0:L, :] = k
        v_buf[:, 0:L, :] = v
        k_buf[:, L:L_pad, :] = zpad
        v_buf[:, L:L_pad, :] = zpad

    row = lax.broadcasted_iota(jnp.int32, (L, tkv), 0)    # hoisted (no per-iter bcast)
    col0 = lax.broadcasted_iota(jnp.int32, (L, tkv), 1)

    def kv_step(i, carry):
        m, l, acc = carry
        start = pl.multiple_of(i * tkv, 8)
        kt = k_buf[:, pl.ds(start, tkv), :]               # (H, tkv, hd) bf16
        vt = v_buf[:, pl.ds(start, tkv), :]
        s = jnp.einsum('hld,hmd->hlm', q, kt,
                       preferred_element_type=jnp.float32)            # (H, L, tkv)
        col = col0 + start
        invalid = None
        if causal:
            invalid = col > row                           # build_attention_mask()
        if L_pad != L:
            oob = col >= L
            invalid = oob if invalid is None else (invalid | oob)
        if invalid is not None:
            s = jnp.where(invalid[None, :, :], -1e30, s)
        m_new = jnp.maximum(m, jnp.max(s, axis=-1, keepdims=True))
        alpha = jnp.exp(m - m_new)
        p = jnp.exp(s - m_new)
        l_new = alpha * l + jnp.sum(p, axis=-1, keepdims=True)
        acc_new = alpha * acc + jnp.einsum(
            'hlm,hmd->hld', p.astype(jnp.bfloat16), vt,
            preferred_element_type=jnp.float32)
        return m_new, l_new, acc_new

    m0 = jnp.full((H, L, 1), -jnp.inf, jnp.float32)
    l0 = jnp.zeros((H, L, 1), jnp.float32)
    a0 = jnp.zeros((H, L, hd), jnp.float32)
    m, l, acc = lax.fori_loop(0, n_kv, kv_step, (m0, l0, a0), unroll=(n_kv <= 2))

    # Normalize, lay heads lane-contiguously, then ONE K=D out-projection.
    attn = (acc * pl.reciprocal(l, approx=True)).astype(jnp.bfloat16)  # (H, L, hd)
    for h in range(H):                                    # static: H lane-slice stores
        attn_buf[:, h * hd:(h + 1) * hd] = attn[h]
    out = jnp.dot(attn_buf[...], wo_ref[...], preferred_element_type=jnp.float32)
    out = out + bo_ref[...].astype(jnp.float32)           # (L, D)
    o_ref[...] = (base + out[None, :, :]).astype(o_ref.dtype)


def _mlp_block_kernel(x_ref, g_ref, b_ref, w1_ref, b1_ref, w2_ref, b2_ref, o_ref):
    # fused: x + c_proj(QuickGELU(c_fc(ln_2(x))))   -- row tile of (B*L, D).
    xf = x_ref[...].astype(jnp.float32)
    xn = _ln_f32(xf, g_ref, b_ref)

    h = jnp.dot(xn.astype(jnp.bfloat16), w1_ref[...],
                preferred_element_type=jnp.float32)
    h = h + b1_ref[...].astype(jnp.float32)
    h = h * jax.nn.sigmoid(1.702 * h)                      # QuickGELU (EUP)
    out = jnp.dot(h.astype(jnp.bfloat16), w2_ref[...],
                  preferred_element_type=jnp.float32)
    out = out + b2_ref[...].astype(jnp.float32)
    o_ref[...] = (xf + out).astype(o_ref.dtype)


def _ln_proj_kernel(x_ref, g_ref, b_ref, p_ref, o_ref):
    # fused LayerNorm + projection (ln_post @ proj / ln_final @ text_projection).
    xn = _ln_f32(x_ref[...].astype(jnp.float32), g_ref, b_ref)
    proj = p_ref[...]
    o_ref[...] = jnp.dot(xn.astype(proj.dtype), proj,
                         preferred_element_type=jnp.float32).astype(o_ref.dtype)


def _logits_kernel(img_ref, txt_ref, scale_ref, o_ref):
    img = img_ref[...].astype(jnp.float32)                 # (B, E)
    txt = txt_ref[...].astype(jnp.float32)                 # (B, E)
    img = img * lax.rsqrt(jnp.sum(img * img, axis=-1, keepdims=True))
    txt = txt * lax.rsqrt(jnp.sum(txt * txt, axis=-1, keepdims=True))
    scale = jnp.exp(scale_ref[...].astype(jnp.float32))    # (1, 1)
    logits = lax.dot_general(img, txt, (((1,), (1,)), ((), ())),
                             preferred_element_type=jnp.float32)   # img @ txt.T
    o_ref[...] = (scale * logits).astype(o_ref.dtype)


# ----------------------------- Pallas wrappers --------------------------------
def attn_block(x, p, causal, ln_pre=None):
    B, L, D = x.shape
    H, _, hd3 = p['wqkv_h'].shape
    hd = hd3 // 3
    tkv = min(256, _round_up(L, 8))
    n_kv = pl.cdiv(L, tkv)
    L_pad = n_kv * tkv
    fuse_pre = ln_pre is not None
    pre_g, pre_b = ln_pre if fuse_pre else (p['ln1_g'], p['ln1_b'])   # dummies if unused
    return pl.pallas_call(
        partial(_attn_block_kernel, causal=causal, fuse_ln_pre=fuse_pre, tkv=tkv),
        out_shape=jax.ShapeDtypeStruct(x.shape, x.dtype),
        grid=(B,),
        in_specs=[
            pl.BlockSpec((1, L, D), lambda b: (b, 0, 0)),  # activations (streamed)
            _VMEM_FULL, _VMEM_FULL,                        # ln_pre gamma/beta
            _VMEM_FULL, _VMEM_FULL,                        # ln_1 gamma/beta
            _VMEM_FULL,                                    # wqkv  (H, D, 3hd) bf16
            _VMEM_FULL,                                    # bqkv  (H, 1, 3hd) f32
            _VMEM_FULL,                                    # wo    (D, D)      bf16
            _VMEM_FULL,                                    # bo    (1, D)      f32
        ],
        out_specs=pl.BlockSpec((1, L, D), lambda b: (b, 0, 0)),
        scratch_shapes=[
            pltpu.VMEM((H, L_pad, hd), jnp.bfloat16),      # K buffer (padded to tkv)
            pltpu.VMEM((H, L_pad, hd), jnp.bfloat16),      # V buffer
            pltpu.VMEM((L, D), jnp.bfloat16),              # concat-head attention
        ],
        compiler_params=_cparams(1),
    )(x, pre_g, pre_b, p['ln1_g'], p['ln1_b'],
      p['wqkv_h'], p['bqkv_h'], p['wo_t'], p['bo'])


def mlp_block(x, p):
    B, L, D = x.shape
    R = B * L
    x2 = x.reshape(R, D)
    # Larger row tiles when VMEM allows (v5e/v6e); 256 keeps v7x comfortable.
    tm_cap = 512 if _vmem_limit_bytes() >= 64 * 1024 * 1024 else 256
    tm = min(tm_cap, _round_up(R, 8))
    out = pl.pallas_call(
        _mlp_block_kernel,
        out_shape=jax.ShapeDtypeStruct((R, D), x.dtype),
        grid=(pl.cdiv(R, tm),),                            # masked partial last block
        in_specs=[
            pl.BlockSpec((tm, D), lambda i: (i, 0)),
            _VMEM_FULL, _VMEM_FULL,                        # ln_2 gamma/beta
            _VMEM_FULL, _VMEM_FULL,                        # c_fc   weight/bias
            _VMEM_FULL, _VMEM_FULL,                        # c_proj weight/bias
        ],
        out_specs=pl.BlockSpec((tm, D), lambda i: (i, 0)),
        compiler_params=_cparams(1),
    )(x2, p['ln2_g'], p['ln2_b'], p['w1_t'], p['b1'], p['w2_t'], p['b2'])
    return out.reshape(B, L, D)


def ln_proj(x, gamma, beta, proj):
    B, D = x.shape
    E = proj.shape[1]
    return pl.pallas_call(
        _ln_proj_kernel,
        out_shape=jax.ShapeDtypeStruct((B, E), x.dtype),
        in_specs=[_VMEM_FULL] * 4,
        out_specs=_VMEM_FULL,
        compiler_params=_cparams(),
    )(x, gamma.reshape(1, D), beta.reshape(1, D), proj)


def compute_logits(image_features, text_features, logit_scale):
    return pl.pallas_call(
        _logits_kernel,
        out_shape=jax.ShapeDtypeStruct(
            (image_features.shape[0], text_features.shape[0]), jnp.float32),
        in_specs=[_VMEM_FULL] * 3,
        out_specs=_VMEM_FULL,
        compiler_params=_cparams(),
    )(image_features, text_features, logit_scale)


# ----------------------------- model glue --------------------------------
def encode_image(image, vp):
    # image: (B, N_tokens, vision_width) -- see layout note at top of file.
    x = image
    for i, blk in enumerate(vp['blocks']):
        pre = (vp['ln_pre_g'], vp['ln_pre_b']) if i == 0 else None  # ln_pre fused here
        x = attn_block(x, blk, causal=False, ln_pre=pre)            # vision mask = None
        x = mlp_block(x, blk)
    cls = x[:, 0, :]                                                # class token
    return ln_proj(cls, vp['ln_post_g'], vp['ln_post_b'], vp['proj'])


def encode_text(text_tokens, tp):
    B, L = text_tokens.shape
    x = tp['token_emb'][text_tokens] + tp['pos_emb'][None, :, :]    # embedding gather (glue)
    for blk in tp['blocks']:
        x = attn_block(x, blk, causal=True)                         # causal mask in-kernel
        x = mlp_block(x, blk)
    # LayerNorm is per-token, so gathering the EOT token before ln_final is equivalent.
    pooled = x[jnp.arange(B), jnp.argmax(text_tokens, axis=-1)]     # EOT gather (glue)
    return ln_proj(pooled, tp['ln_final_g'], tp['ln_final_b'], tp['text_projection'])


def clip_forward(image, text_tokens, params):
    image_features = encode_image(image, params['visual'])
    text_features = encode_text(text_tokens, params['text'])
    logits_per_image = compute_logits(image_features, text_features, params['logit_scale'])
    logits_per_text = logits_per_image.T
    return logits_per_image, logits_per_text


# ----------------------------- deterministic init --------------------------------
class Cfg:
    embed_dim = 32
    vision_width = 64
    vision_layers = 2
    vision_heads = 64 // 64            # vision_width // 64
    vision_tokens = 8                  # token-sequence length of the "image" input
    context_length = 8
    vocab_size = 100
    transformer_width = 64
    transformer_heads = 2
    transformer_layers = 2


def _normal(key, shape, std):
    return std * jax.random.normal(key, shape, dtype=jnp.float32)


def init_block_params(key, width, attn_std, proj_std, fc_std):
    # PyTorch-layout parameters (out, in), matching CLIP.initialize_parameters.
    ks = jax.random.split(key, 4)
    return dict(
        ln1_g=jnp.ones((width,), jnp.float32), ln1_b=jnp.zeros((width,), jnp.float32),
        wqkv=_normal(ks[0], (3 * width, width), attn_std),       # in_proj_weight
        bqkv=jnp.zeros((3 * width,), jnp.float32),
        wo=_normal(ks[1], (width, width), proj_std),             # out_proj.weight
        bo=jnp.zeros((width,), jnp.float32),
        ln2_g=jnp.ones((width,), jnp.float32), ln2_b=jnp.zeros((width,), jnp.float32),
        w1=_normal(ks[2], (4 * width, width), fc_std),           # c_fc.weight
        b1=jnp.zeros((4 * width,), jnp.float32),
        w2=_normal(ks[3], (width, 4 * width), proj_std),         # c_proj.weight
        b2=jnp.zeros((width,), jnp.float32),
    )


def prepare_block(blk, n_head):
    """One-time host-side re-layout into MXU-native bf16 weights.

    QKV is split per head -> (H, D, 3*hd) with 1/sqrt(hd) folded into Q; the
    out-projection stays a single (D, D) = Wo.T matrix so the kernel can run
    ONE concat-head contraction with K = D.
    """
    D = blk['wqkv'].shape[1]
    hd = D // n_head
    scale = hd ** -0.5
    wqkv_t = blk['wqkv'].T                               # (D, 3D): x @ wqkv_t == x @ W_in.T
    wq = wqkv_t[:, 0:D].reshape(D, n_head, hd) * scale   # fold 1/sqrt(hd) into Q
    wk = wqkv_t[:, D:2 * D].reshape(D, n_head, hd)
    wv = wqkv_t[:, 2 * D:3 * D].reshape(D, n_head, hd)
    wqkv_h = jnp.transpose(jnp.concatenate([wq, wk, wv], axis=-1),
                           (1, 0, 2)).astype(jnp.bfloat16)          # (H, D, 3hd)
    bq = blk['bqkv'][0:D].reshape(n_head, 1, hd) * scale
    bk = blk['bqkv'][D:2 * D].reshape(n_head, 1, hd)
    bv = blk['bqkv'][2 * D:3 * D].reshape(n_head, 1, hd)
    bqkv_h = jnp.concatenate([bq, bk, bv], axis=-1)      # (H, 1, 3hd) f32
    wo_t = blk['wo'].T.astype(jnp.bfloat16)              # (D, D): concat(attn_h) @ Wo.T
    return dict(
        ln1_g=blk['ln1_g'].reshape(1, D), ln1_b=blk['ln1_b'].reshape(1, D),
        wqkv_h=wqkv_h, bqkv_h=bqkv_h, wo_t=wo_t, bo=blk['bo'].reshape(1, D),
        ln2_g=blk['ln2_g'].reshape(1, D), ln2_b=blk['ln2_b'].reshape(1, D),
        w1_t=blk['w1'].T.astype(jnp.bfloat16), b1=blk['b1'].reshape(1, -1),
        w2_t=blk['w2'].T.astype(jnp.bfloat16), b2=blk['b2'].reshape(1, D),
    )


def init_clip_params(key, cfg):
    keys = jax.random.split(key, 6)
    vw = cfg.vision_width
    v_proj_std = vw ** -0.5 * (2 * cfg.vision_layers) ** -0.5
    v_attn_std = vw ** -0.5
    v_fc_std = (2 * vw) ** -0.5
    vblocks = [init_block_params(k, vw, v_attn_std, v_proj_std, v_fc_std)
               for k in jax.random.split(keys[0], cfg.vision_layers)]
    visual = dict(
        ln_pre_g=jnp.ones((vw,), jnp.float32), ln_pre_b=jnp.zeros((vw,), jnp.float32),
        blocks=vblocks,
        ln_post_g=jnp.ones((vw,), jnp.float32), ln_post_b=jnp.zeros((vw,), jnp.float32),
        proj=_normal(keys[1], (vw, cfg.embed_dim), vw ** -0.5),
    )
    tw = cfg.transformer_width
    t_proj_std = tw ** -0.5 * (2 * cfg.transformer_layers) ** -0.5
    t_attn_std = tw ** -0.5
    t_fc_std = (2 * tw) ** -0.5
    tblocks = [init_block_params(k, tw, t_attn_std, t_proj_std, t_fc_std)
               for k in jax.random.split(keys[2], cfg.transformer_layers)]
    text = dict(
        token_emb=_normal(keys[3], (cfg.vocab_size, tw), 0.02),
        pos_emb=_normal(keys[4], (cfg.context_length, tw), 0.01),
        blocks=tblocks,
        ln_final_g=jnp.ones((tw,), jnp.float32), ln_final_b=jnp.zeros((tw,), jnp.float32),
        text_projection=_normal(keys[5], (tw, cfg.embed_dim), tw ** -0.5),
    )
    logit_scale = jnp.full((1, 1), math.log(1.0 / 0.07), jnp.float32)
    return dict(visual=visual, text=text, logit_scale=logit_scale)


def prepare_params(raw, cfg):
    v, t = raw['visual'], raw['text']
    return dict(
        visual=dict(
            ln_pre_g=v['ln_pre_g'].reshape(1, -1), ln_pre_b=v['ln_pre_b'].reshape(1, -1),
            blocks=[prepare_block(b, cfg.vision_heads) for b in v['blocks']],
            ln_post_g=v['ln_post_g'], ln_post_b=v['ln_post_b'],
            proj=v['proj'],
        ),
        text=dict(
            token_emb=t['token_emb'], pos_emb=t['pos_emb'],
            blocks=[prepare_block(b, cfg.transformer_heads) for b in t['blocks']],
            ln_final_g=t['ln_final_g'], ln_final_b=t['ln_final_b'],
            text_projection=t['text_projection'],
        ),
        logit_scale=raw['logit_scale'],
    )


# TODO(synk): conv1 / class_embedding / positional_embedding of the vision tower are dead
# code on the CLIP.forward path (prompt=None never calls forward_init_token), so they are
# not materialized.

if __name__ == "__main__":
    cfg = Cfg()
    key = jax.random.PRNGKey(0)
    k_params, k_img, k_txt = jax.random.split(key, 3)
    params = prepare_params(init_clip_params(k_params, cfg), cfg)

    image = jax.random.normal(k_img, (2, cfg.vision_tokens, cfg.vision_width), jnp.float32)
    text = jax.random.randint(k_txt, (2, cfg.context_length), 0, cfg.vocab_size,
                              dtype=jnp.int32)

    fwd = jax.jit(clip_forward)
    logits_per_image, logits_per_text = fwd(image, text, params)
    jax.block_until_ready((logits_per_image, logits_per_text))
    assert logits_per_image.shape == (2, 2) and logits_per_text.shape == (2, 2)
    print("KERNEL_OK")
</pallas_src>

<mosaic_0001>
module attributes {stable_mosaic.version = 11 : i64} {
  func.func @_attn_block_kernel(%arg0: i32, %arg1: memref<1x8x64xf32, #tpu.memory_space<vmem>>, %arg2: memref<1x64xf32, #tpu.memory_space<vmem>>, %arg3: memref<1x64xf32, #tpu.memory_space<vmem>>, %arg4: memref<1x64xf32, #tpu.memory_space<vmem>>, %arg5: memref<1x64xf32, #tpu.memory_space<vmem>>, %arg6: memref<2x64x96xbf16, #tpu.memory_space<vmem>>, %arg7: memref<2x1x96xf32, #tpu.memory_space<vmem>>, %arg8: memref<64x64xbf16, #tpu.memory_space<vmem>>, %arg9: memref<1x64xf32, #tpu.memory_space<vmem>>, %arg10: memref<1x8x64xf32, #tpu.memory_space<vmem>>, %arg11: memref<2x8x32xbf16, #tpu.memory_space<vmem>>, %arg12: memref<2x8x32xbf16, #tpu.memory_space<vmem>>, %arg13: memref<8x64xbf16, #tpu.memory_space<vmem>>) attributes {dimension_semantics = [#tpu.dimension_semantics<parallel>], iteration_bounds = array<i64: 2>, scalar_prefetch = 0 : i64, scratch_operands = 3 : i64, tpu.core_type = #tpu.core_type<tc>, window_params = [{transform_indices = @transform_0, window_bounds = array<i64: 1, 8, 64>}, {pipeline_mode = #tpu.pipeline_mode<synchronous>, transform_indices = @transform_1, window_bounds = array<i64: 1, 64>}, {pipeline_mode = #tpu.pipeline_mode<synchronous>, transform_indices = @transform_2, window_bounds = array<i64: 1, 64>}, {pipeline_mode = #tpu.pipeline_mode<synchronous>, transform_indices = @transform_3, window_bounds = array<i64: 1, 64>}, {pipeline_mode = #tpu.pipeline_mode<synchronous>, transform_indices = @transform_4, window_bounds = array<i64: 1, 64>}, {pipeline_mode = #tpu.pipeline_mode<synchronous>, transform_indices = @transform_5, window_bounds = array<i64: 2, 64, 96>}, {pipeline_mode = #tpu.pipeline_mode<synchronous>, transform_indices = @transform_6, window_bounds = array<i64: 2, 1, 96>}, {pipeline_mode = #tpu.pipeline_mode<synchronous>, transform_indices = @transform_7, window_bounds = array<i64: 64, 64>}, {pipeline_mode = #tpu.pipeline_mode<synchronous>, transform_indices = @transform_8, window_bounds = array<i64: 1, 64>}, {transform_indices = @transform_9, window_bounds = array<i64: 1, 8, 64>}]} {
    %c0 = arith.constant 0 : index
    %c0_0 = arith.constant 0 : index
    %c0_1 = arith.constant 0 : index
    %0 = vector.load %arg1[%c0, %c0_0, %c0_1] : memref<1x8x64xf32, #tpu.memory_space<vmem>>, vector<1x8x64xf32>
    %cst = arith.constant dense<0.000000e+00> : vector<1x8xf32>
    %1 = vector.multi_reduction <add>, %0, %cst [2] : vector<1x8x64xf32> to vector<1x8xf32>
    %2 = vector.shape_cast %1 : vector<1x8xf32> to vector<1x8x1xf32>
    %cst_2 = arith.constant 6.400000e+01 : f32
    %3 = vector.broadcast %cst_2 : f32 to vector<1x8x1xf32>
    %4 = arith.divf %2, %3 : vector<1x8x1xf32>
    %5 = vector.broadcast %4 : vector<1x8x1xf32> to vector<1x8x64xf32>
    %6 = arith.subf %0, %5 : vector<1x8x64xf32>
    %7 = arith.mulf %6, %6 : vector<1x8x64xf32>
    %cst_3 = arith.constant dense<0.000000e+00> : vector<1x8xf32>
    %8 = vector.multi_reduction <add>, %7, %cst_3 [2] : vector<1x8x64xf32> to vector<1x8xf32>
    %9 = vector.shape_cast %8 : vector<1x8xf32> to vector<1x8x1xf32>
    %cst_4 = arith.constant 6.400000e+01 : f32
    %10 = vector.broadcast %cst_4 : f32 to vector<1x8x1xf32>
    %11 = arith.divf %9, %10 : vector<1x8x1xf32>
    %12 = vector.broadcast %4 : vector<1x8x1xf32> to vector<1x8x64xf32>
    %13 = arith.subf %0, %12 : vector<1x8x64xf32>
    %cst_5 = arith.constant 9.99999974E-6 : f32
    %14 = vector.broadcast %cst_5 : f32 to vector<1x8x1xf32>
    %15 = arith.addf %11, %14 : vector<1x8x1xf32>
    %16 = math.rsqrt %15 : vector<1x8x1xf32>
    %17 = vector.broadcast %16 : vector<1x8x1xf32> to vector<1x8x64xf32>
    %18 = arith.mulf %13, %17 : vector<1x8x64xf32>
    %c0_6 = arith.constant 0 : index
    %c0_7 = arith.constant 0 : index
    %19 = vector.load %arg4[%c0_6, %c0_7] : memref<1x64xf32, #tpu.memory_space<vmem>>, vector<1x64xf32>
    %20 = vector.shape_cast %19 : vector<1x64xf32> to vector<1x1x64xf32>
    %21 = vector.broadcast %20 : vector<1x1x64xf32> to vector<1x8x64xf32>
    %22 = arith.mulf %18, %21 : vector<1x8x64xf32>
    %c0_8 = arith.constant 0 : index
    %c0_9 = arith.constant 0 : index
    %23 = vector.load %arg5[%c0_8, %c0_9] : memref<1x64xf32, #tpu.memory_space<vmem>>, vector<1x64xf32>
    %24 = vector.shape_cast %23 : vector<1x64xf32> to vector<1x1x64xf32>
    %25 = vector.broadcast %24 : vector<1x1x64xf32> to vector<1x8x64xf32>
    %26 = arith.addf %22, %25 : vector<1x8x64xf32>
    %27 = arith.truncf %26 : vector<1x8x64xf32> to vector<1x8x64xbf16>
    %28 = vector.shape_cast %27 : vector<1x8x64xbf16> to vector<1x8x64xbf16>
    %29 = vector.broadcast %28 : vector<1x8x64xbf16> to vector<2x8x64xbf16>
    %c0_10 = arith.constant 0 : index
    %c0_11 = arith.constant 0 : index
    %c0_12 = arith.constant 0 : index
    %30 = vector.load %arg6[%c0_10, %c0_11, %c0_12] : memref<2x64x96xbf16, #tpu.memory_space<vmem>>, vector<2x64x96xbf16>
    "tpu.trace_start"() <{level = 10 : i32, message = "hld,hde->hle"}> : () -> ()
    %cst_13 = arith.constant dense<0.000000e+00> : vector<2x8x96xf32>
    %31 = tpu.matmul %29, %30, %cst_13 {dimension_numbers = #tpu.dot_dimension_numbers<[2], [1], [1], [2], [0, 0, 0, 1, 1, 2], [0], [0]>} : vector<2x8x64xbf16>, vector<2x64x96xbf16>, vector<2x8x96xf32> -> vector<2x8x96xf32>
    "tpu.trace_stop"() : () -> ()
    %c0_14 = arith.constant 0 : index
    %c0_15 = arith.constant 0 : index
    %c0_16 = arith.constant 0 : index
    %32 = vector.load %arg7[%c0_14, %c0_15, %c0_16] : memref<2x1x96xf32, #tpu.memory_space<vmem>>, vector<2x1x96xf32>
    %33 = vector.broadcast %32 : vector<2x1x96xf32> to vector<2x8x96xf32>
    %34 = arith.addf %31, %33 : vector<2x8x96xf32>
    %35 = vector.extract_strided_slice %34 {offsets = [0, 0, 0], sizes = [2, 8, 32], strides = [1, 1, 1]} : vector<2x8x96xf32> to vector<2x8x32xf32>
    %36 = arith.truncf %35 : vector<2x8x32xf32> to vector<2x8x32xbf16>
    %37 = vector.extract_strided_slice %34 {offsets = [0, 0, 32], sizes = [2, 8, 32], strides = [1, 1, 1]} : vector<2x8x96xf32> to vector<2x8x32xf32>
    %38 = arith.truncf %37 : vector<2x8x32xf32> to vector<2x8x32xbf16>
    %39 = vector.extract_strided_slice %34 {offsets = [0, 0, 64], sizes = [2, 8, 32], strides = [1, 1, 1]} : vector<2x8x96xf32> to vector<2x8x32xf32>
    %40 = arith.truncf %39 : vector<2x8x32xf32> to vector<2x8x32xbf16>
    %c0_17 = arith.constant 0 : index
    %c0_18 = arith.constant 0 : index
    %c0_19 = arith.constant 0 : index
    %41 = vector.load %arg11[%c0_17, %c0_18, %c0_19] : memref<2x8x32xbf16, #tpu.memory_space<vmem>>, vector<2x8x32xbf16>
    tpu.vector_store %arg11[%c0_17, %c0_18, %c0_19], %38 {strides = array<i32>} : memref<2x8x32xbf16, #tpu.memory_space<vmem>>, vector<2x8x32xbf16>,
    %c0_20 = arith.constant 0 : index
    %c0_21 = arith.constant 0 : index
    %c0_22 = arith.constant 0 : index
    %42 = vector.load %arg12[%c0_20, %c0_21, %c0_22] : memref<2x8x32xbf16, #tpu.memory_space<vmem>>, vector<2x8x32xbf16>
    tpu.vector_store %arg12[%c0_20, %c0_21, %c0_22], %40 {strides = array<i32>} : memref<2x8x32xbf16, #tpu.memory_space<vmem>>, vector<2x8x32xbf16>,
    %43 = tpu.iota {dimensions = array<i32: 0>} : vector<8x8xi32>
    %44 = tpu.iota {dimensions = array<i32: 1>} : vector<8x8xi32>
    %cst_23 = arith.constant 0xFF800000 : f32
    %45 = vector.broadcast %cst_23 : f32 to vector<2x8x1xf32>
    %cst_24 = arith.constant 0.000000e+00 : f32
    %46 = vector.broadcast %cst_24 : f32 to vector<2x8x1xf32>
    %cst_25 = arith.constant 0.000000e+00 : f32
    %47 = vector.broadcast %cst_25 : f32 to vector<2x8x32xf32>
    %c0_i32 = arith.constant 0 : i32
    %c8_i32 = arith.constant 8 : i32
    %48 = arith.muli %c0_i32, %c8_i32 : i32
    %49 = tpu.assume_multiple %48, 8 : i32
    %c0_26 = arith.constant 0 : index
    %50 = arith.index_cast %49 : i32 to index
    %c0_27 = arith.constant 0 : index
    %51 = vector.load %arg11[%c0_26, %50, %c0_27] : memref<2x8x32xbf16, #tpu.memory_space<vmem>>, vector<2x8x32xbf16>
    %c0_28 = arith.constant 0 : index
    %52 = arith.index_cast %49 : i32 to index
    %c0_29 = arith.constant 0 : index
    %53 = vector.load %arg12[%c0_28, %52, %c0_29] : memref<2x8x32xbf16, #tpu.memory_space<vmem>>, vector<2x8x32xbf16>
    "tpu.trace_start"() <{level = 10 : i32, message = "hld,hmd->hlm"}> : () -> ()
    %cst_30 = arith.constant dense<0.000000e+00> : vector<2x8x8xf32>
    %54 = tpu.matmul %36, %51, %cst_30 {dimension_numbers = #tpu.dot_dimension_numbers<[2], [2], [1], [1], [0, 0, 0, 1, 1, 1], [0], [0]>} : vector<2x8x32xbf16>, vector<2x8x32xbf16>, vector<2x8x8xf32> -> vector<2x8x8xf32>
    "tpu.trace_stop"() : () -> ()
    %55 = vector.broadcast %49 : i32 to vector<8x8xi32>
    %56 = arith.addi %44, %55 : vector<8x8xi32>
    %57 = arith.cmpi sgt, %56, %43 : vector<8x8xi32>
    %58 = vector.shape_cast %57 : vector<8x8xi1> to vector<1x8x8xi1>
    %cst_31 = arith.constant -1.000000e+30 : f32
    %59 = vector.shape_cast %58 : vector<1x8x8xi1> to vector<1x8x8xi1>
    %60 = vector.broadcast %59 : vector<1x8x8xi1> to vector<2x8x8xi1>
    %61 = vector.broadcast %cst_31 : f32 to vector<2x8x8xf32>
    %62 = arith.select %60, %61, %54 : vector<2x8x8xi1>, vector<2x8x8xf32>
    %cst_32 = arith.constant dense<0xFF800000> : vector<2x8xf32>
    %63 = vector.multi_reduction <maximumf>, %62, %cst_32 [2] : vector<2x8x8xf32> to vector<2x8xf32>
    %64 = vector.shape_cast %63 : vector<2x8xf32> to vector<2x8x1xf32>
    %65 = arith.maximumf %45, %64 : vector<2x8x1xf32>
    %66 = arith.subf %45, %65 : vector<2x8x1xf32>
    %67 = math.exp %66 : vector<2x8x1xf32>
    %68 = vector.broadcast %65 : vector<2x8x1xf32> to vector<2x8x8xf32>
    %69 = arith.subf %62, %68 : vector<2x8x8xf32>
    %70 = math.exp %69 : vector<2x8x8xf32>
    %71 = arith.mulf %67, %46 : vector<2x8x1xf32>
    %cst_33 = arith.constant dense<0.000000e+00> : vector<2x8xf32>
    %72 = vector.multi_reduction <add>, %70, %cst_33 [2] : vector<2x8x8xf32> to vector<2x8xf32>
    %73 = vector.shape_cast %72 : vector<2x8xf32> to vector<2x8x1xf32>
    %74 = arith.addf %71, %73 : vector<2x8x1xf32>
    %75 = vector.broadcast %67 : vector<2x8x1xf32> to vector<2x8x32xf32>
    %76 = arith.mulf %75, %47 : vector<2x8x32xf32>
    %77 = arith.truncf %70 : vector<2x8x8xf32> to vector<2x8x8xbf16>
    "tpu.trace_start"() <{level = 10 : i32, message = "hlm,hmd->hld"}> : () -> ()
    %cst_34 = arith.constant dense<0.000000e+00> : vector<2x8x32xf32>
    %78 = tpu.matmul %77, %53, %cst_34 {dimension_numbers = #tpu.dot_dimension_numbers<[2], [1], [1], [2], [0, 0, 0, 1, 1, 2], [0], [0]>} : vector<2x8x8xbf16>, vector<2x8x32xbf16>, vector<2x8x32xf32> -> vector<2x8x32xf32>
    "tpu.trace_stop"() : () -> ()
    %79 = arith.addf %76, %78 : vector<2x8x32xf32>
    %c1_i32 = arith.constant 1 : i32
    %80 = tpu.reciprocal %74 {approx = true} : vector<2x8x1xf32> -> vector<2x8x1xf32>
    %81 = vector.broadcast %80 : vector<2x8x1xf32> to vector<2x8x32xf32>
    %82 = arith.mulf %79, %81 : vector<2x8x32xf32>
    %83 = arith.truncf %82 : vector<2x8x32xf32> to vector<2x8x32xbf16>
    %84 = vector.extract_strided_slice %83 {offsets = [0, 0, 0], sizes = [1, 8, 32], strides = [1, 1, 1]} : vector<2x8x32xbf16> to vector<1x8x32xbf16>
    %85 = vector.shape_cast %84 : vector<1x8x32xbf16> to vector<8x32xbf16>
    %c0_35 = arith.constant 0 : index
    %c0_36 = arith.constant 0 : index
    %86 = vector.load %arg13[%c0_35, %c0_36] : memref<8x64xbf16, #tpu.memory_space<vmem>>, vector<8x32xbf16>
    tpu.vector_store %arg13[%c0_35, %c0_36], %85 {strides = array<i32>} : memref<8x64xbf16, #tpu.memory_space<vmem>>, vector<8x32xbf16>,
    %87 = vector.extract_strided_slice %83 {offsets = [1, 0, 0], sizes = [1, 8, 32], strides = [1, 1, 1]} : vector<2x8x32xbf16> to vector<1x8x32xbf16>
    %88 = vector.shape_cast %87 : vector<1x8x32xbf16> to vector<8x32xbf16>
    %c0_37 = arith.constant 0 : index
    %c32 = arith.constant 32 : index
    %89 = vector.load %arg13[%c0_37, %c32] : memref<8x64xbf16, #tpu.memory_space<vmem>>, vector<8x32xbf16>
    tpu.vector_store %arg13[%c0_37, %c32], %88 {strides = array<i32>} : memref<8x64xbf16, #tpu.memory_space<vmem>>, vector<8x32xbf16>,
    %c0_38 = arith.constant 0 : index
    %c0_39 = arith.constant 0 : index
    %90 = vector.load %arg13[%c0_38, %c0_39] : memref<8x64xbf16, #tpu.memory_space<vmem>>, vector<8x64xbf16>
    %c0_40 = arith.constant 0 : index
    %c0_41 = arith.constant 0 : index
    %91 = vector.load %arg8[%c0_40, %c0_41] : memref<64x64xbf16, #tpu.memory_space<vmem>>, vector<64x64xbf16>
    %cst_42 = arith.constant dense<0.000000e+00> : vector<8x64xf32>
    %92 = tpu.matmul %90, %91, %cst_42 {dimension_numbers = #tpu.dot_dimension_numbers<[1], [0], [0], [1], [0, 0, 1, 1], [], []>} : vector<8x64xbf16>, vector<64x64xbf16>, vector<8x64xf32> -> vector<8x64xf32>
    %c0_43 = arith.constant 0 : index
    %c0_44 = arith.constant 0 : index
    %93 = vector.load %arg9[%c0_43, %c0_44] : memref<1x64xf32, #tpu.memory_space<vmem>>, vector<1x64xf32>
    %94 = vector.broadcast %93 : vector<1x64xf32> to vector<8x64xf32>
    %95 = arith.addf %92, %94 : vector<8x64xf32>
    %96 = vector.shape_cast %95 : vector<8x64xf32> to vector<1x8x64xf32>
    %97 = arith.addf %0, %96 : vector<1x8x64xf32>
    %c0_45 = arith.constant 0 : index
    %c0_46 = arith.constant 0 : index
    %c0_47 = arith.constant 0 : index
    %98 = vector.load %arg10[%c0_45, %c0_46, %c0_47] : memref<1x8x64xf32, #tpu.memory_space<vmem>>, vector<1x8x64xf32>
    tpu.vector_store %arg10[%c0_45, %c0_46, %c0_47], %97 {strides = array<i32>} : memref<1x8x64xf32, #tpu.memory_space<vmem>>, vector<1x8x64xf32>,
    return
  }
  func.func @transform_0(%arg0: i32) -> (i32, i32, i32) {
    %c0_i32 = arith.constant 0 : i32
    %c0_i32_0 = arith.constant 0 : i32
    %c0_i32_1 = arith.constant 0 : i32
    return %arg0, %c0_i32, %c0_i32_0 : i32, i32, i32
  }
  func.func @transform_1(%arg0: i32) -> (i32, i32) {
    %c0_i32 = arith.constant 0 : i32
    %c0_i32_0 = arith.constant 0 : i32
    %c0_i32_1 = arith.constant 0 : i32
    return %c0_i32, %c0_i32_0 : i32, i32
  }
  func.func @transform_2(%arg0: i32) -> (i32, i32) {
    %c0_i32 = arith.constant 0 : i32
    %c0_i32_0 = arith.constant 0 : i32
    %c0_i32_1 = arith.constant 0 : i32
    return %c0_i32, %c0_i32_0 : i32, i32
  }
  func.func @transform_3(%arg0: i32) -> (i32, i32) {
    %c0_i32 = arith.constant 0 : i32
    %c0_i32_0 = arith.constant 0 : i32
    %c0_i32_1 = arith.constant 0 : i32
    return %c0_i32, %c0_i32_0 : i32, i32
  }
  func.func @transform_4(%arg0: i32) -> (i32, i32) {
    %c0_i32 = arith.constant 0 : i32
    %c0_i32_0 = arith.constant 0 : i32
    %c0_i32_1 = arith.constant 0 : i32
    return %c0_i32, %c0_i32_0 : i32, i32
  }
  func.func @transform_5(%arg0: i32) -> (i32, i32, i32) {
    %c0_i32 = arith.constant 0 : i32
    %c0_i32_0 = arith.constant 0 : i32
    %c0_i32_1 = arith.constant 0 : i32
    %c0_i32_2 = arith.constant 0 : i32
    return %c0_i32, %c0_i32_0, %c0_i32_1 : i32, i32, i32
  }
  func.func @transform_6(%arg0: i32) -> (i32, i32, i32) {
    %c0_i32 = arith.constant 0 : i32
    %c0_i32_0 = arith.constant 0 : i32
    %c0_i32_1 = arith.constant 0 : i32
    %c0_i32_2 = arith.constant 0 : i32
    return %c0_i32, %c0_i32_0, %c0_i32_1 : i32, i32, i32
  }
  func.func @transform_7(%arg0: i32) -> (i32, i32) {
    %c0_i32 = arith.constant 0 : i32
    %c0_i32_0 = arith.constant 0 : i32
    %c0_i32_1 = arith.constant 0 : i32
    return %c0_i32, %c0_i32_0 : i32, i32
  }
  func.func @transform_8(%arg0: i32) -> (i32, i32) {
    %c0_i32 = arith.constant 0 : i32
    %c0_i32_0 = arith.constant 0 : i32
    %c0_i32_1 = arith.constant 0 : i32
    return %c0_i32, %c0_i32_0 : i32, i32
  }
  func.func @transform_9(%arg0: i32) -> (i32, i32, i32) {
    %c0_i32 = arith.constant 0 : i32
    %c0_i32_0 = arith.constant 0 : i32
    %c0_i32_1 = arith.constant 0 : i32
    return %arg0, %c0_i32, %c0_i32_0 : i32, i32, i32
  }
}

module attributes {stable_mosaic.version = 11 : i64} {
  func.func @_mlp_block_kernel(%arg0: i32, %arg1: memref<16x64xf32, #tpu.memory_space<vmem>>, %arg2: memref<1x64xf32, #tpu.memory_space<vmem>>, %arg3: memref<1x64xf32, #tpu.memory_space<vmem>>, %arg4: memref<64x256xbf16, #tpu.memory_space<vmem>>, %arg5: memref<1x256xf32, #tpu.memory_space<vmem>>, %arg6: memref<256x64xbf16, #tpu.memory_space<vmem>>, %arg7: memref<1x64xf32, #tpu.memory_space<vmem>>, %arg8: memref<16x64xf32, #tpu.memory_space<vmem>>) attributes {dimension_semantics = [#tpu.dimension_semantics<parallel>], iteration_bounds = array<i64: 1>, scalar_prefetch = 0 : i64, scratch_operands = 0 : i64, tpu.core_type = #tpu.core_type<tc>, window_params = [{transform_indices = @transform_0, window_bounds = array<i64: 16, 64>}, {pipeline_mode = #tpu.pipeline_mode<synchronous>, transform_indices = @transform_1, window_bounds = array<i64: 1, 64>}, {pipeline_mode = #tpu.pipeline_mode<synchronous>, transform_indices = @transform_2, window_bounds = array<i64: 1, 64>}, {pipeline_mode = #tpu.pipeline_mode<synchronous>, transform_indices = @transform_3, window_bounds = array<i64: 64, 256>}, {pipeline_mode = #tpu.pipeline_mode<synchronous>, transform_indices = @transform_4, window_bounds = array<i64: 1, 256>}, {pipeline_mode = #tpu.pipeline_mode<synchronous>, transform_indices = @transform_5, window_bounds = array<i64: 256, 64>}, {pipeline_mode = #tpu.pipeline_mode<synchronous>, transform_indices = @transform_6, window_bounds = array<i64: 1, 64>}, {transform_indices = @transform_7, window_bounds = array<i64: 16, 64>}]} {
    %c0 = arith.constant 0 : index
    %c0_0 = arith.constant 0 : index
    %0 = vector.load %arg1[%c0, %c0_0] : memref<16x64xf32, #tpu.memory_space<vmem>>, vector<16x64xf32>
    %cst = arith.constant dense<0.000000e+00> : vector<16xf32>
    %1 = vector.multi_reduction <add>, %0, %cst [1] : vector<16x64xf32> to vector<16xf32>
    %2 = vector.shape_cast %1 : vector<16xf32> to vector<16x1xf32>
    %cst_1 = arith.constant 6.400000e+01 : f32
    %3 = vector.broadcast %cst_1 : f32 to vector<16x1xf32>
    %4 = arith.divf %2, %3 : vector<16x1xf32>
    %5 = vector.broadcast %4 : vector<16x1xf32> to vector<16x64xf32>
    %6 = arith.subf %0, %5 : vector<16x64xf32>
    %7 = arith.mulf %6, %6 : vector<16x64xf32>
    %cst_2 = arith.constant dense<0.000000e+00> : vector<16xf32>
    %8 = vector.multi_reduction <add>, %7, %cst_2 [1] : vector<16x64xf32> to vector<16xf32>
    %9 = vector.shape_cast %8 : vector<16xf32> to vector<16x1xf32>
    %cst_3 = arith.constant 6.400000e+01 : f32
    %10 = vector.broadcast %cst_3 : f32 to vector<16x1xf32>
    %11 = arith.divf %9, %10 : vector<16x1xf32>
    %12 = vector.broadcast %4 : vector<16x1xf32> to vector<16x64xf32>
    %13 = arith.subf %0, %12 : vector<16x64xf32>
    %cst_4 = arith.constant 9.99999974E-6 : f32
    %14 = vector.broadcast %cst_4 : f32 to vector<16x1xf32>
    %15 = arith.addf %11, %14 : vector<16x1xf32>
    %16 = math.rsqrt %15 : vector<16x1xf32>
    %17 = vector.broadcast %16 : vector<16x1xf32> to vector<16x64xf32>
    %18 = arith.mulf %13, %17 : vector<16x64xf32>
    %c0_5 = arith.constant 0 : index
    %c0_6 = arith.constant 0 : index
    %19 = vector.load %arg2[%c0_5, %c0_6] : memref<1x64xf32, #tpu.memory_space<vmem>>, vector<1x64xf32>
    %20 = vector.broadcast %19 : vector<1x64xf32> to vector<16x64xf32>
    %21 = arith.mulf %18, %20 : vector<16x64xf32>
    %c0_7 = arith.constant 0 : index
    %c0_8 = arith.constant 0 : index
    %22 = vector.load %arg3[%c0_7, %c0_8] : memref<1x64xf32, #tpu.memory_space<vmem>>, vector<1x64xf32>
    %23 = vector.broadcast %22 : vector<1x64xf32> to vector<16x64xf32>
    %24 = arith.addf %21, %23 : vector<16x64xf32>
    %25 = arith.truncf %24 : vector<16x64xf32> to vector<16x64xbf16>
    %c0_9 = arith.constant 0 : index
    %c0_10 = arith.constant 0 : index
    %26 = vector.load %arg4[%c0_9, %c0_10] : memref<64x256xbf16, #tpu.memory_space<vmem>>, vector<64x256xbf16>
    %cst_11 = arith.constant dense<0.000000e+00> : vector<16x256xf32>
    %27 = tpu.matmul %25, %26, %cst_11 {dimension_numbers = #tpu.dot_dimension_numbers<[1], [0], [0], [1], [0, 0, 1, 1], [], []>} : vector<16x64xbf16>, vector<64x256xbf16>, vector<16x256xf32> -> vector<16x256xf32>
    %c0_12 = arith.constant 0 : index
    %c0_13 = arith.constant 0 : index
    %28 = vector.load %arg5[%c0_12, %c0_13] : memref<1x256xf32, #tpu.memory_space<vmem>>, vector<1x256xf32>
    %29 = vector.broadcast %28 : vector<1x256xf32> to vector<16x256xf32>
    %30 = arith.addf %27, %29 : vector<16x256xf32>
    %cst_14 = arith.constant 1.702000e+00 : f32
    %31 = vector.broadcast %cst_14 : f32 to vector<16x256xf32>
    %32 = arith.mulf %31, %30 : vector<16x256xf32>
    %33 = arith.negf %32 : vector<16x256xf32>
    %34 = math.exp %33 : vector<16x256xf32>
    %cst_15 = arith.constant 1.000000e+00 : f32
    %35 = vector.broadcast %cst_15 : f32 to vector<16x256xf32>
    %36 = arith.addf %35, %34 : vector<16x256xf32>
    %37 = arith.divf %35, %36 : vector<16x256xf32>
    %38 = arith.mulf %30, %37 : vector<16x256xf32>
    %39 = arith.truncf %38 : vector<16x256xf32> to vector<16x256xbf16>
    %c0_16 = arith.constant 0 : index
    %c0_17 = arith.constant 0 : index
    %40 = vector.load %arg6[%c0_16, %c0_17] : memref<256x64xbf16, #tpu.memory_space<vmem>>, vector<256x64xbf16>
    %cst_18 = arith.constant dense<0.000000e+00> : vector<16x64xf32>
    %41 = tpu.matmul %39, %40, %cst_18 {dimension_numbers = #tpu.dot_dimension_numbers<[1], [0], [0], [1], [0, 0, 1, 1], [], []>} : vector<16x256xbf16>, vector<256x64xbf16>, vector<16x64xf32> -> vector<16x64xf32>
    %c0_19 = arith.constant 0 : index
    %c0_20 = arith.constant 0 : index
    %42 = vector.load %arg7[%c0_19, %c0_20] : memref<1x64xf32, #tpu.memory_space<vmem>>, vector<1x64xf32>
    %43 = vector.broadcast %42 : vector<1x64xf32> to vector<16x64xf32>
    %44 = arith.addf %41, %43 : vector<16x64xf32>
    %45 = arith.addf %0, %44 : vector<16x64xf32>
    %c0_21 = arith.constant 0 : index
    %c0_22 = arith.constant 0 : index
    %46 = vector.load %arg8[%c0_21, %c0_22] : memref<16x64xf32, #tpu.memory_space<vmem>>, vector<16x64xf32>
    tpu.vector_store %arg8[%c0_21, %c0_22], %45 {strides = array<i32>} : memref<16x64xf32, #tpu.memory_space<vmem>>, vector<16x64xf32>,
    return
  }
  func.func @transform_0(%arg0: i32) -> (i32, i32) {
    %c0_i32 = arith.constant 0 : i32
    %c0_i32_0 = arith.constant 0 : i32
    return %arg0, %c0_i32 : i32, i32
  }
  func.func @transform_1(%arg0: i32) -> (i32, i32) {
    %c0_i32 = arith.constant 0 : i32
    %c0_i32_0 = arith.constant 0 : i32
    %c0_i32_1 = arith.constant 0 : i32
    return %c0_i32, %c0_i32_0 : i32, i32
  }
  func.func @transform_2(%arg0: i32) -> (i32, i32) {
    %c0_i32 = arith.constant 0 : i32
    %c0_i32_0 = arith.constant 0 : i32
    %c0_i32_1 = arith.constant 0 : i32
    return %c0_i32, %c0_i32_0 : i32, i32
  }
  func.func @transform_3(%arg0: i32) -> (i32, i32) {
    %c0_i32 = arith.constant 0 : i32
    %c0_i32_0 = arith.constant 0 : i32
    %c0_i32_1 = arith.constant 0 : i32
    return %c0_i32, %c0_i32_0 : i32, i32
  }
  func.func @transform_4(%arg0: i32) -> (i32, i32) {
    %c0_i32 = arith.constant 0 : i32
    %c0_i32_0 = arith.constant 0 : i32
    %c0_i32_1 = arith.constant 0 : i32
    return %c0_i32, %c0_i32_0 : i32, i32
  }
  func.func @transform_5(%arg0: i32) -> (i32, i32) {
    %c0_i32 = arith.constant 0 : i32
    %c0_i32_0 = arith.constant 0 : i32
    %c0_i32_1 = arith.constant 0 : i32
    return %c0_i32, %c0_i32_0 : i32, i32
  }
  func.func @transform_6(%arg0: i32) -> (i32, i32) {
    %c0_i32 = arith.constant 0 : i32
    %c0_i32_0 = arith.constant 0 : i32
    %c0_i32_1 = arith.constant 0 : i32
    return %c0_i32, %c0_i32_0 : i32, i32
  }
  func.func @transform_7(%arg0: i32) -> (i32, i32) {
    %c0_i32 = arith.constant 0 : i32
    %c0_i32_0 = arith.constant 0 : i32
    return %arg0, %c0_i32 : i32, i32
  }
}

module attributes {stable_mosaic.version = 11 : i64} {
  func.func @_ln_proj_kernel(%arg0: memref<2x64xf32, #tpu.memory_space<vmem>>, %arg1: memref<1x64xf32, #tpu.memory_space<vmem>>, %arg2: memref<1x64xf32, #tpu.memory_space<vmem>>, %arg3: memref<64x32xf32, #tpu.memory_space<vmem>>, %arg4: memref<2x32xf32, #tpu.memory_space<vmem>>) attributes {dimension_semantics = [], scalar_prefetch = 0 : i64, scratch_operands = 0 : i64, tpu.core_type = #tpu.core_type<tc>} {
    %c0 = arith.constant 0 : index
    %c0_0 = arith.constant 0 : index
    %0 = vector.load %arg0[%c0, %c0_0] : memref<2x64xf32, #tpu.memory_space<vmem>>, vector<2x64xf32>
    %cst = arith.constant dense<0.000000e+00> : vector<2xf32>
    %1 = vector.multi_reduction <add>, %0, %cst [1] : vector<2x64xf32> to vector<2xf32>
    %2 = vector.shape_cast %1 : vector<2xf32> to vector<2x1xf32>
    %cst_1 = arith.constant 6.400000e+01 : f32
    %3 = vector.broadcast %cst_1 : f32 to vector<2x1xf32>
    %4 = arith.divf %2, %3 : vector<2x1xf32>
    %5 = vector.broadcast %4 : vector<2x1xf32> to vector<2x64xf32>
    %6 = arith.subf %0, %5 : vector<2x64xf32>
    %7 = arith.mulf %6, %6 : vector<2x64xf32>
    %cst_2 = arith.constant dense<0.000000e+00> : vector<2xf32>
    %8 = vector.multi_reduction <add>, %7, %cst_2 [1] : vector<2x64xf32> to vector<2xf32>
    %9 = vector.shape_cast %8 : vector<2xf32> to vector<2x1xf32>
    %cst_3 = arith.constant 6.400000e+01 : f32
    %10 = vector.broadcast %cst_3 : f32 to vector<2x1xf32>
    %11 = arith.divf %9, %10 : vector<2x1xf32>
    %12 = vector.broadcast %4 : vector<2x1xf32> to vector<2x64xf32>
    %13 = arith.subf %0, %12 : vector<2x64xf32>
    %cst_4 = arith.constant 9.99999974E-6 : f32
    %14 = vector.broadcast %cst_4 : f32 to vector<2x1xf32>
    %15 = arith.addf %11, %14 : vector<2x1xf32>
    %16 = math.rsqrt %15 : vector<2x1xf32>
    %17 = vector.broadcast %16 : vector<2x1xf32> to vector<2x64xf32>
    %18 = arith.mulf %13, %17 : vector<2x64xf32>
    %c0_5 = arith.constant 0 : index
    %c0_6 = arith.constant 0 : index
    %19 = vector.load %arg1[%c0_5, %c0_6] : memref<1x64xf32, #tpu.memory_space<vmem>>, vector<1x64xf32>
    %20 = vector.broadcast %19 : vector<1x64xf32> to vector<2x64xf32>
    %21 = arith.mulf %18, %20 : vector<2x64xf32>
    %c0_7 = arith.constant 0 : index
    %c0_8 = arith.constant 0 : index
    %22 = vector.load %arg2[%c0_7, %c0_8] : memref<1x64xf32, #tpu.memory_space<vmem>>, vector<1x64xf32>
    %23 = vector.broadcast %22 : vector<1x64xf32> to vector<2x64xf32>
    %24 = arith.addf %21, %23 : vector<2x64xf32>
    %c0_9 = arith.constant 0 : index
    %c0_10 = arith.constant 0 : index
    %25 = vector.load %arg3[%c0_9, %c0_10] : memref<64x32xf32, #tpu.memory_space<vmem>>, vector<64x32xf32>
    %cst_11 = arith.constant dense<0.000000e+00> : vector<2x32xf32>
    %26 = tpu.matmul %24, %25, %cst_11 {dimension_numbers = #tpu.dot_dimension_numbers<[1], [0], [0], [1], [0, 0, 1, 1], [], []>} : vector<2x64xf32>, vector<64x32xf32>, vector<2x32xf32> -> vector<2x32xf32>
    %c0_12 = arith.constant 0 : index
    %c0_13 = arith.constant 0 : index
    %27 = vector.load %arg4[%c0_12, %c0_13] : memref<2x32xf32, #tpu.memory_space<vmem>>, vector<2x32xf32>
    tpu.vector_store %arg4[%c0_12, %c0_13], %26 {strides = array<i32>} : memref<2x32xf32, #tpu.memory_space<vmem>>, vector<2x32xf32>,
    return
  }
}

module attributes {stable_mosaic.version = 11 : i64} {
  func.func @_attn_block_kernel(%arg0: i32, %arg1: memref<1x8x64xf32, #tpu.memory_space<vmem>>, %arg2: memref<1x64xf32, #tpu.memory_space<vmem>>, %arg3: memref<1x64xf32, #tpu.memory_space<vmem>>, %arg4: memref<1x64xf32, #tpu.memory_space<vmem>>, %arg5: memref<1x64xf32, #tpu.memory_space<vmem>>, %arg6: memref<1x64x192xbf16, #tpu.memory_space<vmem>>, %arg7: memref<1x1x192xf32, #tpu.memory_space<vmem>>, %arg8: memref<64x64xbf16, #tpu.memory_space<vmem>>, %arg9: memref<1x64xf32, #tpu.memory_space<vmem>>, %arg10: memref<1x8x64xf32, #tpu.memory_space<vmem>>, %arg11: memref<1x8x64xbf16, #tpu.memory_space<vmem>>, %arg12: memref<1x8x64xbf16, #tpu.memory_space<vmem>>, %arg13: memref<8x64xbf16, #tpu.memory_space<vmem>>) attributes {dimension_semantics = [#tpu.dimension_semantics<parallel>], iteration_bounds = array<i64: 2>, scalar_prefetch = 0 : i64, scratch_operands = 3 : i64, tpu.core_type = #tpu.core_type<tc>, window_params = [{transform_indices = @transform_0, window_bounds = array<i64: 1, 8, 64>}, {pipeline_mode = #tpu.pipeline_mode<synchronous>, transform_indices = @transform_1, window_bounds = array<i64: 1, 64>}, {pipeline_mode = #tpu.pipeline_mode<synchronous>, transform_indices = @transform_2, window_bounds = array<i64: 1, 64>}, {pipeline_mode = #tpu.pipeline_mode<synchronous>, transform_indices = @transform_3, window_bounds = array<i64: 1, 64>}, {pipeline_mode = #tpu.pipeline_mode<synchronous>, transform_indices = @transform_4, window_bounds = array<i64: 1, 64>}, {pipeline_mode = #tpu.pipeline_mode<synchronous>, transform_indices = @transform_5, window_bounds = array<i64: 1, 64, 192>}, {pipeline_mode = #tpu.pipeline_mode<synchronous>, transform_indices = @transform_6, window_bounds = array<i64: 1, 1, 192>}, {pipeline_mode = #tpu.pipeline_mode<synchronous>, transform_indices = @transform_7, window_bounds = array<i64: 64, 64>}, {pipeline_mode = #tpu.pipeline_mode<synchronous>, transform_indices = @transform_8, window_bounds = array<i64: 1, 64>}, {transform_indices = @transform_9, window_bounds = array<i64: 1, 8, 64>}]} {
    %c0 = arith.constant 0 : index
    %c0_0 = arith.constant 0 : index
    %c0_1 = arith.constant 0 : index
    %0 = vector.load %arg1[%c0, %c0_0, %c0_1] : memref<1x8x64xf32, #tpu.memory_space<vmem>>, vector<1x8x64xf32>
    %cst = arith.constant dense<0.000000e+00> : vector<1x8xf32>
    %1 = vector.multi_reduction <add>, %0, %cst [2] : vector<1x8x64xf32> to vector<1x8xf32>
    %2 = vector.shape_cast %1 : vector<1x8xf32> to vector<1x8x1xf32>
    %cst_2 = arith.constant 6.400000e+01 : f32
    %3 = vector.broadcast %cst_2 : f32 to vector<1x8x1xf32>
    %4 = arith.divf %2, %3 : vector<1x8x1xf32>
    %5 = vector.broadcast %4 : vector<1x8x1xf32> to vector<1x8x64xf32>
    %6 = arith.subf %0, %5 : vector<1x8x64xf32>
    %7 = arith.mulf %6, %6 : vector<1x8x64xf32>
    %cst_3 = arith.constant dense<0.000000e+00> : vector<1x8xf32>
    %8 = vector.multi_reduction <add>, %7, %cst_3 [2] : vector<1x8x64xf32> to vector<1x8xf32>
    %9 = vector.shape_cast %8 : vector<1x8xf32> to vector<1x8x1xf32>
    %cst_4 = arith.constant 6.400000e+01 : f32
    %10 = vector.broadcast %cst_4 : f32 to vector<1x8x1xf32>
    %11 = arith.divf %9, %10 : vector<1x8x1xf32>
    %12 = vector.broadcast %4 : vector<1x8x1xf32> to vector<1x8x64xf32>
    %13 = arith.subf %0, %12 : vector<1x8x64xf32>
    %cst_5 = arith.constant 9.99999974E-6 : f32
    %14 = vector.broadcast %cst_5 : f32 to vector<1x8x1xf32>
    %15 = arith.addf %11, %14 : vector<1x8x1xf32>
    %16 = math.rsqrt %15 : vector<1x8x1xf32>
    %17 = vector.broadcast %16 : vector<1x8x1xf32> to vector<1x8x64xf32>
    %18 = arith.mulf %13, %17 : vector<1x8x64xf32>
    %c0_6 = arith.constant 0 : index
    %c0_7 = arith.constant 0 : index
    %19 = vector.load %arg2[%c0_6, %c0_7] : memref<1x64xf32, #tpu.memory_space<vmem>>, vector<1x64xf32>
    %20 = vector.shape_cast %19 : vector<1x64xf32> to vector<1x1x64xf32>
    %21 = vector.broadcast %20 : vector<1x1x64xf32> to vector<1x8x64xf32>
    %22 = arith.mulf %18, %21 : vector<1x8x64xf32>
    %c0_8 = arith.constant 0 : index
    %c0_9 = arith.constant 0 : index
    %23 = vector.load %arg3[%c0_8, %c0_9] : memref<1x64xf32, #tpu.memory_space<vmem>>, vector<1x64xf32>
    %24 = vector.shape_cast %23 : vector<1x64xf32> to vector<1x1x64xf32>
    %25 = vector.broadcast %24 : vector<1x1x64xf32> to vector<1x8x64xf32>
    %26 = arith.addf %22, %25 : vector<1x8x64xf32>
    %cst_10 = arith.constant dense<0.000000e+00> : vector<1x8xf32>
    %27 = vector.multi_reduction <add>, %26, %cst_10 [2] : vector<1x8x64xf32> to vector<1x8xf32>
    %28 = vector.shape_cast %27 : vector<1x8xf32> to vector<1x8x1xf32>
    %cst_11 = arith.constant 6.400000e+01 : f32
    %29 = vector.broadcast %cst_11 : f32 to vector<1x8x1xf32>
    %30 = arith.divf %28, %29 : vector<1x8x1xf32>
    %31 = vector.broadcast %30 : vector<1x8x1xf32> to vector<1x8x64xf32>
    %32 = arith.subf %26, %31 : vector<1x8x64xf32>
    %33 = arith.mulf %32, %32 : vector<1x8x64xf32>
    %cst_12 = arith.constant dense<0.000000e+00> : vector<1x8xf32>
    %34 = vector.multi_reduction <add>, %33, %cst_12 [2] : vector<1x8x64xf32> to vector<1x8xf32>
    %35 = vector.shape_cast %34 : vector<1x8xf32> to vector<1x8x1xf32>
    %cst_13 = arith.constant 6.400000e+01 : f32
    %36 = vector.broadcast %cst_13 : f32 to vector<1x8x1xf32>
    %37 = arith.divf %35, %36 : vector<1x8x1xf32>
    %38 = vector.broadcast %30 : vector<1x8x1xf32> to vector<1x8x64xf32>
    %39 = arith.subf %26, %38 : vector<1x8x64xf32>
    %cst_14 = arith.constant 9.99999974E-6 : f32
    %40 = vector.broadcast %cst_14 : f32 to vector<1x8x1xf32>
    %41 = arith.addf %37, %40 : vector<1x8x1xf32>
    %42 = math.rsqrt %41 : vector<1x8x1xf32>
    %43 = vector.broadcast %42 : vector<1x8x1xf32> to vector<1x8x64xf32>
    %44 = arith.mulf %39, %43 : vector<1x8x64xf32>
    %c0_15 = arith.constant 0 : index
    %c0_16 = arith.constant 0 : index
    %45 = vector.load %arg4[%c0_15, %c0_16] : memref<1x64xf32, #tpu.memory_space<vmem>>, vector<1x64xf32>
    %46 = vector.shape_cast %45 : vector<1x64xf32> to vector<1x1x64xf32>
    %47 = vector.broadcast %46 : vector<1x1x64xf32> to vector<1x8x64xf32>
    %48 = arith.mulf %44, %47 : vector<1x8x64xf32>
    %c0_17 = arith.constant 0 : index
    %c0_18 = arith.constant 0 : index
    %49 = vector.load %arg5[%c0_17, %c0_18] : memref<1x64xf32, #tpu.memory_space<vmem>>, vector<1x64xf32>
    %50 = vector.shape_cast %49 : vector<1x64xf32> to vector<1x1x64xf32>
    %51 = vector.broadcast %50 : vector<1x1x64xf32> to vector<1x8x64xf32>
    %52 = arith.addf %48, %51 : vector<1x8x64xf32>
    %53 = arith.truncf %52 : vector<1x8x64xf32> to vector<1x8x64xbf16>
    %c0_19 = arith.constant 0 : index
    %c0_20 = arith.constant 0 : index
    %c0_21 = arith.constant 0 : index
    %54 = vector.load %arg6[%c0_19, %c0_20, %c0_21] : memref<1x64x192xbf16, #tpu.memory_space<vmem>>, vector<1x64x192xbf16>
    "tpu.trace_start"() <{level = 10 : i32, message = "hld,hde->hle"}> : () -> ()
    %cst_22 = arith.constant dense<0.000000e+00> : vector<1x8x192xf32>
    %55 = tpu.matmul %53, %54, %cst_22 {dimension_numbers = #tpu.dot_dimension_numbers<[2], [1], [1], [2], [0, 0, 0, 1, 1, 2], [0], [0]>} : vector<1x8x64xbf16>, vector<1x64x192xbf16>, vector<1x8x192xf32> -> vector<1x8x192xf32>
    "tpu.trace_stop"() : () -> ()
    %c0_23 = arith.constant 0 : index
    %c0_24 = arith.constant 0 : index
    %c0_25 = arith.constant 0 : index
    %56 = vector.load %arg7[%c0_23, %c0_24, %c0_25] : memref<1x1x192xf32, #tpu.memory_space<vmem>>, vector<1x1x192xf32>
    %57 = vector.broadcast %56 : vector<1x1x192xf32> to vector<1x8x192xf32>
    %58 = arith.addf %55, %57 : vector<1x8x192xf32>
    %59 = vector.extract_strided_slice %58 {offsets = [0, 0, 0], sizes = [1, 8, 64], strides = [1, 1, 1]} : vector<1x8x192xf32> to vector<1x8x64xf32>
    %60 = arith.truncf %59 : vector<1x8x64xf32> to vector<1x8x64xbf16>
    %61 = vector.extract_strided_slice %58 {offsets = [0, 0, 64], sizes = [1, 8, 64], strides = [1, 1, 1]} : vector<1x8x192xf32> to vector<1x8x64xf32>
    %62 = arith.truncf %61 : vector<1x8x64xf32> to vector<1x8x64xbf16>
    %63 = vector.extract_strided_slice %58 {offsets = [0, 0, 128], sizes = [1, 8, 64], strides = [1, 1, 1]} : vector<1x8x192xf32> to vector<1x8x64xf32>
    %64 = arith.truncf %63 : vector<1x8x64xf32> to vector<1x8x64xbf16>
    %c0_26 = arith.constant 0 : index
    %c0_27 = arith.constant 0 : index
    %c0_28 = arith.constant 0 : index
    %65 = vector.load %arg11[%c0_26, %c0_27, %c0_28] : memref<1x8x64xbf16, #tpu.memory_space<vmem>>, vector<1x8x64xbf16>
    tpu.vector_store %arg11[%c0_26, %c0_27, %c0_28], %62 {strides = array<i32>} : memref<1x8x64xbf16, #tpu.memory_space<vmem>>, vector<1x8x64xbf16>,
    %c0_29 = arith.constant 0 : index
    %c0_30 = arith.constant 0 : index
    %c0_31 = arith.constant 0 : index
    %66 = vector.load %arg12[%c0_29, %c0_30, %c0_31] : memref<1x8x64xbf16, #tpu.memory_space<vmem>>, vector<1x8x64xbf16>
    tpu.vector_store %arg12[%c0_29, %c0_30, %c0_31], %64 {strides = array<i32>} : memref<1x8x64xbf16, #tpu.memory_space<vmem>>, vector<1x8x64xbf16>,
    %cst_32 = arith.constant 0xFF800000 : f32
    %67 = vector.broadcast %cst_32 : f32 to vector<1x8x1xf32>
    %cst_33 = arith.constant 0.000000e+00 : f32
    %68 = vector.broadcast %cst_33 : f32 to vector<1x8x1xf32>
    %cst_34 = arith.constant 0.000000e+00 : f32
    %69 = vector.broadcast %cst_34 : f32 to vector<1x8x64xf32>
    %c0_i32 = arith.constant 0 : i32
    %c8_i32 = arith.constant 8 : i32
    %70 = arith.muli %c0_i32, %c8_i32 : i32
    %71 = tpu.assume_multiple %70, 8 : i32
    %c0_35 = arith.constant 0 : index
    %72 = arith.index_cast %71 : i32 to index
    %c0_36 = arith.constant 0 : index
    %73 = vector.load %arg11[%c0_35, %72, %c0_36] : memref<1x8x64xbf16, #tpu.memory_space<vmem>>, vector<1x8x64xbf16>
    %c0_37 = arith.constant 0 : index
    %74 = arith.index_cast %71 : i32 to index
    %c0_38 = arith.constant 0 : index
    %75 = vector.load %arg12[%c0_37, %74, %c0_38] : memref<1x8x64xbf16, #tpu.memory_space<vmem>>, vector<1x8x64xbf16>
    "tpu.trace_start"() <{level = 10 : i32, message = "hld,hmd->hlm"}> : () -> ()
    %cst_39 = arith.constant dense<0.000000e+00> : vector<1x8x8xf32>
    %76 = tpu.matmul %60, %73, %cst_39 {dimension_numbers = #tpu.dot_dimension_numbers<[2], [2], [1], [1], [0, 0, 0, 1, 1, 1], [0], [0]>} : vector<1x8x64xbf16>, vector<1x8x64xbf16>, vector<1x8x8xf32> -> vector<1x8x8xf32>
    "tpu.trace_stop"() : () -> ()
    %cst_40 = arith.constant dense<0xFF800000> : vector<1x8xf32>
    %77 = vector.multi_reduction <maximumf>, %76, %cst_40 [2] : vector<1x8x8xf32> to vector<1x8xf32>
    %78 = vector.shape_cast %77 : vector<1x8xf32> to vector<1x8x1xf32>
    %79 = arith.maximumf %67, %78 : vector<1x8x1xf32>
    %80 = arith.subf %67, %79 : vector<1x8x1xf32>
    %81 = math.exp %80 : vector<1x8x1xf32>
    %82 = vector.broadcast %79 : vector<1x8x1xf32> to vector<1x8x8xf32>
    %83 = arith.subf %76, %82 : vector<1x8x8xf32>
    %84 = math.exp %83 : vector<1x8x8xf32>
    %85 = arith.mulf %81, %68 : vector<1x8x1xf32>
    %cst_41 = arith.constant dense<0.000000e+00> : vector<1x8xf32>
    %86 = vector.multi_reduction <add>, %84, %cst_41 [2] : vector<1x8x8xf32> to vector<1x8xf32>
    %87 = vector.shape_cast %86 : vector<1x8xf32> to vector<1x8x1xf32>
    %88 = arith.addf %85, %87 : vector<1x8x1xf32>
    %89 = vector.broadcast %81 : vector<1x8x1xf32> to vector<1x8x64xf32>
    %90 = arith.mulf %89, %69 : vector<1x8x64xf32>
    %91 = arith.truncf %84 : vector<1x8x8xf32> to vector<1x8x8xbf16>
    "tpu.trace_start"() <{level = 10 : i32, message = "hlm,hmd->hld"}> : () -> ()
    %cst_42 = arith.constant dense<0.000000e+00> : vector<1x8x64xf32>
    %92 = tpu.matmul %91, %75, %cst_42 {dimension_numbers = #tpu.dot_dimension_numbers<[2], [1], [1], [2], [0, 0, 0, 1, 1, 2], [0], [0]>} : vector<1x8x8xbf16>, vector<1x8x64xbf16>, vector<1x8x64xf32> -> vector<1x8x64xf32>
    "tpu.trace_stop"() : () -> ()
    %93 = arith.addf %90, %92 : vector<1x8x64xf32>
    %c1_i32 = arith.constant 1 : i32
    %94 = tpu.reciprocal %88 {approx = true} : vector<1x8x1xf32> -> vector<1x8x1xf32>
    %95 = vector.broadcast %94 : vector<1x8x1xf32> to vector<1x8x64xf32>
    %96 = arith.mulf %93, %95 : vector<1x8x64xf32>
    %97 = arith.truncf %96 : vector<1x8x64xf32> to vector<1x8x64xbf16>
    %98 = vector.shape_cast %97 : vector<1x8x64xbf16> to vector<8x64xbf16>
    %c0_43 = arith.constant 0 : index
    %c0_44 = arith.constant 0 : index
    %99 = vector.load %arg13[%c0_43, %c0_44] : memref<8x64xbf16, #tpu.memory_space<vmem>>, vector<8x64xbf16>
    tpu.vector_store %arg13[%c0_43, %c0_44], %98 {strides = array<i32>} : memref<8x64xbf16, #tpu.memory_space<vmem>>, vector<8x64xbf16>,
    %c0_45 = arith.constant 0 : index
    %c0_46 = arith.constant 0 : index
    %100 = vector.load %arg13[%c0_45, %c0_46] : memref<8x64xbf16, #tpu.memory_space<vmem>>, vector<8x64xbf16>
    %c0_47 = arith.constant 0 : index
    %c0_48 = arith.constant 0 : index
    %101 = vector.load %arg8[%c0_47, %c0_48] : memref<64x64xbf16, #tpu.memory_space<vmem>>, vector<64x64xbf16>
    %cst_49 = arith.constant dense<0.000000e+00> : vector<8x64xf32>
    %102 = tpu.matmul %100, %101, %cst_49 {dimension_numbers = #tpu.dot_dimension_numbers<[1], [0], [0], [1], [0, 0, 1, 1], [], []>} : vector<8x64xbf16>, vector<64x64xbf16>, vector<8x64xf32> -> vector<8x64xf32>
    %c0_50 = arith.constant 0 : index
    %c0_51 = arith.constant 0 : index
    %103 = vector.load %arg9[%c0_50, %c0_51] : memref<1x64xf32, #tpu.memory_space<vmem>>, vector<1x64xf32>
    %104 = vector.broadcast %103 : vector<1x64xf32> to vector<8x64xf32>
    %105 = arith.addf %102, %104 : vector<8x64xf32>
    %106 = vector.shape_cast %105 : vector<8x64xf32> to vector<1x8x64xf32>
    %107 = arith.addf %26, %106 : vector<1x8x64xf32>
    %c0_52 = arith.constant 0 : index
    %c0_53 = arith.constant 0 : index
    %c0_54 = arith.constant 0 : index
    %108 = vector.load %arg10[%c0_52, %c0_53, %c0_54] : memref<1x8x64xf32, #tpu.memory_space<vmem>>, vector<1x8x64xf32>
    tpu.vector_store %arg10[%c0_52, %c0_53, %c0_54], %107 {strides = array<i32>} : memref<1x8x64xf32, #tpu.memory_space<vmem>>, vector<1x8x64xf32>,
    return
  }
  func.func @transform_0(%arg0: i32) -> (i32, i32, i32) {
    %c0_i32 = arith.constant 0 : i32
    %c0_i32_0 = arith.constant 0 : i32
    %c0_i32_1 = arith.constant 0 : i32
    return %arg0, %c0_i32, %c0_i32_0 : i32, i32, i32
  }
  func.func @transform_1(%arg0: i32) -> (i32, i32) {
    %c0_i32 = arith.constant 0 : i32
    %c0_i32_0 = arith.constant 0 : i32
    %c0_i32_1 = arith.constant 0 : i32
    return %c0_i32, %c0_i32_0 : i32, i32
  }
  func.func @transform_2(%arg0: i32) -> (i32, i32) {
    %c0_i32 = arith.constant 0 : i32
    %c0_i32_0 = arith.constant 0 : i32
    %c0_i32_1 = arith.constant 0 : i32
    return %c0_i32, %c0_i32_0 : i32, i32
  }
  func.func @transform_3(%arg0: i32) -> (i32, i32) {
    %c0_i32 = arith.constant 0 : i32
    %c0_i32_0 = arith.constant 0 : i32
    %c0_i32_1 = arith.constant 0 : i32
    return %c0_i32, %c0_i32_0 : i32, i32
  }
  func.func @transform_4(%arg0: i32) -> (i32, i32) {
    %c0_i32 = arith.constant 0 : i32
    %c0_i32_0 = arith.constant 0 : i32
    %c0_i32_1 = arith.constant 0 : i32
    return %c0_i32, %c0_i32_0 : i32, i32
  }
  func.func @transform_5(%arg0: i32) -> (i32, i32, i32) {
    %c0_i32 = arith.constant 0 : i32
    %c0_i32_0 = arith.constant 0 : i32
    %c0_i32_1 = arith.constant 0 : i32
    %c0_i32_2 = arith.constant 0 : i32
    return %c0_i32, %c0_i32_0, %c0_i32_1 : i32, i32, i32
  }
  func.func @transform_6(%arg0: i32) -> (i32, i32, i32) {
    %c0_i32 = arith.constant 0 : i32
    %c0_i32_0 = arith.constant 0 : i32
    %c0_i32_1 = arith.constant 0 : i32
    %c0_i32_2 = arith.constant 0 : i32
    return %c0_i32, %c0_i32_0, %c0_i32_1 : i32, i32, i32
  }
  func.func @transform_7(%arg0: i32) -> (i32, i32) {
    %c0_i32 = arith.constant 0 : i32
    %c0_i32_0 = arith.constant 0 : i32
    %c0_i32_1 = arith.constant 0 : i32
    return %c0_i32, %c0_i32_0 : i32, i32
  }
  func.func @transform_8(%arg0: i32) -> (i32, i32) {
    %c0_i32 = arith.constant 0 : i32
    %c0_i32_0 = arith.constant 0 : i32
    %c0_i32_1 = arith.constant 0 : i32
    return %c0_i32, %c0_i32_0 : i32, i32
  }
  func.func @transform_9(%arg0: i32) -> (i32, i32, i32) {
    %c0_i32 = arith.constant 0 : i32
    %c0_i32_0 = arith.constant 0 : i32
    %c0_i32_1 = arith.constant 0 : i32
    return %arg0, %c0_i32, %c0_i32_0 : i32, i32, i32
  }
}

module attributes {stable_mosaic.version = 11 : i64} {
  func.func @_attn_block_kernel(%arg0: i32, %arg1: memref<1x8x64xf32, #tpu.memory_space<vmem>>, %arg2: memref<1x64xf32, #tpu.memory_space<vmem>>, %arg3: memref<1x64xf32, #tpu.memory_space<vmem>>, %arg4: memref<1x64xf32, #tpu.memory_space<vmem>>, %arg5: memref<1x64xf32, #tpu.memory_space<vmem>>, %arg6: memref<1x64x192xbf16, #tpu.memory_space<vmem>>, %arg7: memref<1x1x192xf32, #tpu.memory_space<vmem>>, %arg8: memref<64x64xbf16, #tpu.memory_space<vmem>>, %arg9: memref<1x64xf32, #tpu.memory_space<vmem>>, %arg10: memref<1x8x64xf32, #tpu.memory_space<vmem>>, %arg11: memref<1x8x64xbf16, #tpu.memory_space<vmem>>, %arg12: memref<1x8x64xbf16, #tpu.memory_space<vmem>>, %arg13: memref<8x64xbf16, #tpu.memory_space<vmem>>) attributes {dimension_semantics = [#tpu.dimension_semantics<parallel>], iteration_bounds = array<i64: 2>, scalar_prefetch = 0 : i64, scratch_operands = 3 : i64, tpu.core_type = #tpu.core_type<tc>, window_params = [{transform_indices = @transform_0, window_bounds = array<i64: 1, 8, 64>}, {pipeline_mode = #tpu.pipeline_mode<synchronous>, transform_indices = @transform_1, window_bounds = array<i64: 1, 64>}, {pipeline_mode = #tpu.pipeline_mode<synchronous>, transform_indices = @transform_2, window_bounds = array<i64: 1, 64>}, {pipeline_mode = #tpu.pipeline_mode<synchronous>, transform_indices = @transform_3, window_bounds = array<i64: 1, 64>}, {pipeline_mode = #tpu.pipeline_mode<synchronous>, transform_indices = @transform_4, window_bounds = array<i64: 1, 64>}, {pipeline_mode = #tpu.pipeline_mode<synchronous>, transform_indices = @transform_5, window_bounds = array<i64: 1, 64, 192>}, {pipeline_mode = #tpu.pipeline_mode<synchronous>, transform_indices = @transform_6, window_bounds = array<i64: 1, 1, 192>}, {pipeline_mode = #tpu.pipeline_mode<synchronous>, transform_indices = @transform_7, window_bounds = array<i64: 64, 64>}, {pipeline_mode = #tpu.pipeline_mode<synchronous>, transform_indices = @transform_8, window_bounds = array<i64: 1, 64>}, {transform_indices = @transform_9, window_bounds = array<i64: 1, 8, 64>}]} {
    %c0 = arith.constant 0 : index
    %c0_0 = arith.constant 0 : index
    %c0_1 = arith.constant 0 : index
    %0 = vector.load %arg1[%c0, %c0_0, %c0_1] : memref<1x8x64xf32, #tpu.memory_space<vmem>>, vector<1x8x64xf32>
    %cst = arith.constant dense<0.000000e+00> : vector<1x8xf32>
    %1 = vector.multi_reduction <add>, %0, %cst [2] : vector<1x8x64xf32> to vector<1x8xf32>
    %2 = vector.shape_cast %1 : vector<1x8xf32> to vector<1x8x1xf32>
    %cst_2 = arith.constant 6.400000e+01 : f32
    %3 = vector.broadcast %cst_2 : f32 to vector<1x8x1xf32>
    %4 = arith.divf %2, %3 : vector<1x8x1xf32>
    %5 = vector.broadcast %4 : vector<1x8x1xf32> to vector<1x8x64xf32>
    %6 = arith.subf %0, %5 : vector<1x8x64xf32>
    %7 = arith.mulf %6, %6 : vector<1x8x64xf32>
    %cst_3 = arith.constant dense<0.000000e+00> : vector<1x8xf32>
    %8 = vector.multi_reduction <add>, %7, %cst_3 [2] : vector<1x8x64xf32> to vector<1x8xf32>
    %9 = vector.shape_cast %8 : vector<1x8xf32> to vector<1x8x1xf32>
    %cst_4 = arith.constant 6.400000e+01 : f32
    %10 = vector.broadcast %cst_4 : f32 to vector<1x8x1xf32>
    %11 = arith.divf %9, %10 : vector<1x8x1xf32>
    %12 = vector.broadcast %4 : vector<1x8x1xf32> to vector<1x8x64xf32>
    %13 = arith.subf %0, %12 : vector<1x8x64xf32>
    %cst_5 = arith.constant 9.99999974E-6 : f32
    %14 = vector.broadcast %cst_5 : f32 to vector<1x8x1xf32>
    %15 = arith.addf %11, %14 : vector<1x8x1xf32>
    %16 = math.rsqrt %15 : vector<1x8x1xf32>
    %17 = vector.broadcast %16 : vector<1x8x1xf32> to vector<1x8x64xf32>
    %18 = arith.mulf %13, %17 : vector<1x8x64xf32>
    %c0_6 = arith.constant 0 : index
    %c0_7 = arith.constant 0 : index
    %19 = vector.load %arg4[%c0_6, %c0_7] : memref<1x64xf32, #tpu.memory_space<vmem>>, vector<1x64xf32>
    %20 = vector.shape_cast %19 : vector<1x64xf32> to vector<1x1x64xf32>
    %21 = vector.broadcast %20 : vector<1x1x64xf32> to vector<1x8x64xf32>
    %22 = arith.mulf %18, %21 : vector<1x8x64xf32>
    %c0_8 = arith.constant 0 : index
    %c0_9 = arith.constant 0 : index
    %23 = vector.load %arg5[%c0_8, %c0_9] : memref<1x64xf32, #tpu.memory_space<vmem>>, vector<1x64xf32>
    %24 = vector.shape_cast %23 : vector<1x64xf32> to vector<1x1x64xf32>
    %25 = vector.broadcast %24 : vector<1x1x64xf32> to vector<1x8x64xf32>
    %26 = arith.addf %22, %25 : vector<1x8x64xf32>
    %27 = arith.truncf %26 : vector<1x8x64xf32> to vector<1x8x64xbf16>
    %c0_10 = arith.constant 0 : index
    %c0_11 = arith.constant 0 : index
    %c0_12 = arith.constant 0 : index
    %28 = vector.load %arg6[%c0_10, %c0_11, %c0_12] : memref<1x64x192xbf16, #tpu.memory_space<vmem>>, vector<1x64x192xbf16>
    "tpu.trace_start"() <{level = 10 : i32, message = "hld,hde->hle"}> : () -> ()
    %cst_13 = arith.constant dense<0.000000e+00> : vector<1x8x192xf32>
    %29 = tpu.matmul %27, %28, %cst_13 {dimension_numbers = #tpu.dot_dimension_numbers<[2], [1], [1], [2], [0, 0, 0, 1, 1, 2], [0], [0]>} : vector<1x8x64xbf16>, vector<1x64x192xbf16>, vector<1x8x192xf32> -> vector<1x8x192xf32>
    "tpu.trace_stop"() : () -> ()
    %c0_14 = arith.constant 0 : index
    %c0_15 = arith.constant 0 : index
    %c0_16 = arith.constant 0 : index
    %30 = vector.load %arg7[%c0_14, %c0_15, %c0_16] : memref<1x1x192xf32, #tpu.memory_space<vmem>>, vector<1x1x192xf32>
    %31 = vector.broadcast %30 : vector<1x1x192xf32> to vector<1x8x192xf32>
    %32 = arith.addf %29, %31 : vector<1x8x192xf32>
    %33 = vector.extract_strided_slice %32 {offsets = [0, 0, 0], sizes = [1, 8, 64], strides = [1, 1, 1]} : vector<1x8x192xf32> to vector<1x8x64xf32>
    %34 = arith.truncf %33 : vector<1x8x64xf32> to vector<1x8x64xbf16>
    %35 = vector.extract_strided_slice %32 {offsets = [0, 0, 64], sizes = [1, 8, 64], strides = [1, 1, 1]} : vector<1x8x192xf32> to vector<1x8x64xf32>
    %36 = arith.truncf %35 : vector<1x8x64xf32> to vector<1x8x64xbf16>
    %37 = vector.extract_strided_slice %32 {offsets = [0, 0, 128], sizes = [1, 8, 64], strides = [1, 1, 1]} : vector<1x8x192xf32> to vector<1x8x64xf32>
    %38 = arith.truncf %37 : vector<1x8x64xf32> to vector<1x8x64xbf16>
    %c0_17 = arith.constant 0 : index
    %c0_18 = arith.constant 0 : index
    %c0_19 = arith.constant 0 : index
    %39 = vector.load %arg11[%c0_17, %c0_18, %c0_19] : memref<1x8x64xbf16, #tpu.memory_space<vmem>>, vector<1x8x64xbf16>
    tpu.vector_store %arg11[%c0_17, %c0_18, %c0_19], %36 {strides = array<i32>} : memref<1x8x64xbf16, #tpu.memory_space<vmem>>, vector<1x8x64xbf16>,
    %c0_20 = arith.constant 0 : index
    %c0_21 = arith.constant 0 : index
    %c0_22 = arith.constant 0 : index
    %40 = vector.load %arg12[%c0_20, %c0_21, %c0_22] : memref<1x8x64xbf16, #tpu.memory_space<vmem>>, vector<1x8x64xbf16>
    tpu.vector_store %arg12[%c0_20, %c0_21, %c0_22], %38 {strides = array<i32>} : memref<1x8x64xbf16, #tpu.memory_space<vmem>>, vector<1x8x64xbf16>,
    %cst_23 = arith.constant 0xFF800000 : f32
    %41 = vector.broadcast %cst_23 : f32 to vector<1x8x1xf32>
    %cst_24 = arith.constant 0.000000e+00 : f32
    %42 = vector.broadcast %cst_24 : f32 to vector<1x8x1xf32>
    %cst_25 = arith.constant 0.000000e+00 : f32
    %43 = vector.broadcast %cst_25 : f32 to vector<1x8x64xf32>
    %c0_i32 = arith.constant 0 : i32
    %c8_i32 = arith.constant 8 : i32
    %44 = arith.muli %c0_i32, %c8_i32 : i32
    %45 = tpu.assume_multiple %44, 8 : i32
    %c0_26 = arith.constant 0 : index
    %46 = arith.index_cast %45 : i32 to index
    %c0_27 = arith.constant 0 : index
    %47 = vector.load %arg11[%c0_26, %46, %c0_27] : memref<1x8x64xbf16, #tpu.memory_space<vmem>>, vector<1x8x64xbf16>
    %c0_28 = arith.constant 0 : index
    %48 = arith.index_cast %45 : i32 to index
    %c0_29 = arith.constant 0 : index
    %49 = vector.load %arg12[%c0_28, %48, %c0_29] : memref<1x8x64xbf16, #tpu.memory_space<vmem>>, vector<1x8x64xbf16>
    "tpu.trace_start"() <{level = 10 : i32, message = "hld,hmd->hlm"}> : () -> ()
    %cst_30 = arith.constant dense<0.000000e+00> : vector<1x8x8xf32>
    %50 = tpu.matmul %34, %47, %cst_30 {dimension_numbers = #tpu.dot_dimension_numbers<[2], [2], [1], [1], [0, 0, 0, 1, 1, 1], [0], [0]>} : vector<1x8x64xbf16>, vector<1x8x64xbf16>, vector<1x8x8xf32> -> vector<1x8x8xf32>
    "tpu.trace_stop"() : () -> ()
    %cst_31 = arith.constant dense<0xFF800000> : vector<1x8xf32>
    %51 = vector.multi_reduction <maximumf>, %50, %cst_31 [2] : vector<1x8x8xf32> to vector<1x8xf32>
    %52 = vector.shape_cast %51 : vector<1x8xf32> to vector<1x8x1xf32>
    %53 = arith.maximumf %41, %52 : vector<1x8x1xf32>
    %54 = arith.subf %41, %53 : vector<1x8x1xf32>
    %55 = math.exp %54 : vector<1x8x1xf32>
    %56 = vector.broadcast %53 : vector<1x8x1xf32> to vector<1x8x8xf32>
    %57 = arith.subf %50, %56 : vector<1x8x8xf32>
    %58 = math.exp %57 : vector<1x8x8xf32>
    %59 = arith.mulf %55, %42 : vector<1x8x1xf32>
    %cst_32 = arith.constant dense<0.000000e+00> : vector<1x8xf32>
    %60 = vector.multi_reduction <add>, %58, %cst_32 [2] : vector<1x8x8xf32> to vector<1x8xf32>
    %61 = vector.shape_cast %60 : vector<1x8xf32> to vector<1x8x1xf32>
    %62 = arith.addf %59, %61 : vector<1x8x1xf32>
    %63 = vector.broadcast %55 : vector<1x8x1xf32> to vector<1x8x64xf32>
    %64 = arith.mulf %63, %43 : vector<1x8x64xf32>
    %65 = arith.truncf %58 : vector<1x8x8xf32> to vector<1x8x8xbf16>
    "tpu.trace_start"() <{level = 10 : i32, message = "hlm,hmd->hld"}> : () -> ()
    %cst_33 = arith.constant dense<0.000000e+00> : vector<1x8x64xf32>
    %66 = tpu.matmul %65, %49, %cst_33 {dimension_numbers = #tpu.dot_dimension_numbers<[2], [1], [1], [2], [0, 0, 0, 1, 1, 2], [0], [0]>} : vector<1x8x8xbf16>, vector<1x8x64xbf16>, vector<1x8x64xf32> -> vector<1x8x64xf32>
    "tpu.trace_stop"() : () -> ()
    %67 = arith.addf %64, %66 : vector<1x8x64xf32>
    %c1_i32 = arith.constant 1 : i32
    %68 = tpu.reciprocal %62 {approx = true} : vector<1x8x1xf32> -> vector<1x8x1xf32>
    %69 = vector.broadcast %68 : vector<1x8x1xf32> to vector<1x8x64xf32>
    %70 = arith.mulf %67, %69 : vector<1x8x64xf32>
    %71 = arith.truncf %70 : vector<1x8x64xf32> to vector<1x8x64xbf16>
    %72 = vector.shape_cast %71 : vector<1x8x64xbf16> to vector<8x64xbf16>
    %c0_34 = arith.constant 0 : index
    %c0_35 = arith.constant 0 : index
    %73 = vector.load %arg13[%c0_34, %c0_35] : memref<8x64xbf16, #tpu.memory_space<vmem>>, vector<8x64xbf16>
    tpu.vector_store %arg13[%c0_34, %c0_35], %72 {strides = array<i32>} : memref<8x64xbf16, #tpu.memory_space<vmem>>, vector<8x64xbf16>,
    %c0_36 = arith.constant 0 : index
    %c0_37 = arith.constant 0 : index
    %74 = vector.load %arg13[%c0_36, %c0_37] : memref<8x64xbf16, #tpu.memory_space<vmem>>, vector<8x64xbf16>
    %c0_38 = arith.constant 0 : index
    %c0_39 = arith.constant 0 : index
    %75 = vector.load %arg8[%c0_38, %c0_39] : memref<64x64xbf16, #tpu.memory_space<vmem>>, vector<64x64xbf16>
    %cst_40 = arith.constant dense<0.000000e+00> : vector<8x64xf32>
    %76 = tpu.matmul %74, %75, %cst_40 {dimension_numbers = #tpu.dot_dimension_numbers<[1], [0], [0], [1], [0, 0, 1, 1], [], []>} : vector<8x64xbf16>, vector<64x64xbf16>, vector<8x64xf32> -> vector<8x64xf32>
    %c0_41 = arith.constant 0 : index
    %c0_42 = arith.constant 0 : index
    %77 = vector.load %arg9[%c0_41, %c0_42] : memref<1x64xf32, #tpu.memory_space<vmem>>, vector<1x64xf32>
    %78 = vector.broadcast %77 : vector<1x64xf32> to vector<8x64xf32>
    %79 = arith.addf %76, %78 : vector<8x64xf32>
    %80 = vector.shape_cast %79 : vector<8x64xf32> to vector<1x8x64xf32>
    %81 = arith.addf %0, %80 : vector<1x8x64xf32>
    %c0_43 = arith.constant 0 : index
    %c0_44 = arith.constant 0 : index
    %c0_45 = arith.constant 0 : index
    %82 = vector.load %arg10[%c0_43, %c0_44, %c0_45] : memref<1x8x64xf32, #tpu.memory_space<vmem>>, vector<1x8x64xf32>
    tpu.vector_store %arg10[%c0_43, %c0_44, %c0_45], %81 {strides = array<i32>} : memref<1x8x64xf32, #tpu.memory_space<vmem>>, vector<1x8x64xf32>,
    return
  }
  func.func @transform_0(%arg0: i32) -> (i32, i32, i32) {
    %c0_i32 = arith.constant 0 : i32
    %c0_i32_0 = arith.constant 0 : i32
    %c0_i32_1 = arith.constant 0 : i32
    return %arg0, %c0_i32, %c0_i32_0 : i32, i32, i32
  }
  func.func @transform_1(%arg0: i32) -> (i32, i32) {
    %c0_i32 = arith.constant 0 : i32
    %c0_i32_0 = arith.constant 0 : i32
    %c0_i32_1 = arith.constant 0 : i32
    return %c0_i32, %c0_i32_0 : i32, i32
  }
  func.func @transform_2(%arg0: i32) -> (i32, i32) {
    %c0_i32 = arith.constant 0 : i32
    %c0_i32_0 = arith.constant 0 : i32
    %c0_i32_1 = arith.constant 0 : i32
    return %c0_i32, %c0_i32_0 : i32, i32
  }
  func.func @transform_3(%arg0: i32) -> (i32, i32) {
    %c0_i32 = arith.constant 0 : i32
    %c0_i32_0 = arith.constant 0 : i32
    %c0_i32_1 = arith.constant 0 : i32
    return %c0_i32, %c0_i32_0 : i32, i32
  }
  func.func @transform_4(%arg0: i32) -> (i32, i32) {
    %c0_i32 = arith.constant 0 : i32
    %c0_i32_0 = arith.constant 0 : i32
    %c0_i32_1 = arith.constant 0 : i32
    return %c0_i32, %c0_i32_0 : i32, i32
  }
  func.func @transform_5(%arg0: i32) -> (i32, i32, i32) {
    %c0_i32 = arith.constant 0 : i32
    %c0_i32_0 = arith.constant 0 : i32
    %c0_i32_1 = arith.constant 0 : i32
    %c0_i32_2 = arith.constant 0 : i32
    return %c0_i32, %c0_i32_0, %c0_i32_1 : i32, i32, i32
  }
  func.func @transform_6(%arg0: i32) -> (i32, i32, i32) {
    %c0_i32 = arith.constant 0 : i32
    %c0_i32_0 = arith.constant 0 : i32
    %c0_i32_1 = arith.constant 0 : i32
    %c0_i32_2 = arith.constant 0 : i32
    return %c0_i32, %c0_i32_0, %c0_i32_1 : i32, i32, i32
  }
  func.func @transform_7(%arg0: i32) -> (i32, i32) {
    %c0_i32 = arith.constant 0 : i32
    %c0_i32_0 = arith.constant 0 : i32
    %c0_i32_1 = arith.constant 0 : i32
    return %c0_i32, %c0_i32_0 : i32, i32
  }
  func.func @transform_8(%arg0: i32) -> (i32, i32) {
    %c0_i32 = arith.constant 0 : i32
    %c0_i32_0 = arith.constant 0 : i32
    %c0_i32_1 = arith.constant 0 : i32
    return %c0_i32, %c0_i32_0 : i32, i32
  }
  func.func @transform_9(%arg0: i32) -> (i32, i32, i32) {
    %c0_i32 = arith.constant 0 : i32
    %c0_i32_0 = arith.constant 0 : i32
    %c0_i32_1 = arith.constant 0 : i32
    return %arg0, %c0_i32, %c0_i32_0 : i32, i32, i32
  }
}

module attributes {stable_mosaic.version = 11 : i64} {
  func.func @_logits_kernel(%arg0: memref<2x32xf32, #tpu.memory_space<vmem>>, %arg1: memref<2x32xf32, #tpu.memory_space<vmem>>, %arg2: memref<1x1xf32, #tpu.memory_space<vmem>>, %arg3: memref<2x2xf32, #tpu.memory_space<vmem>>) attributes {dimension_semantics = [], scalar_prefetch = 0 : i64, scratch_operands = 0 : i64, tpu.core_type = #tpu.core_type<tc>} {
    %c0 = arith.constant 0 : index
    %c0_0 = arith.constant 0 : index
    %0 = vector.load %arg0[%c0, %c0_0] : memref<2x32xf32, #tpu.memory_space<vmem>>, vector<2x32xf32>
    %c0_1 = arith.constant 0 : index
    %c0_2 = arith.constant 0 : index
    %1 = vector.load %arg1[%c0_1, %c0_2] : memref<2x32xf32, #tpu.memory_space<vmem>>, vector<2x32xf32>
    %2 = arith.mulf %0, %0 : vector<2x32xf32>
    %cst = arith.constant dense<0.000000e+00> : vector<2xf32>
    %3 = vector.multi_reduction <add>, %2, %cst [1] : vector<2x32xf32> to vector<2xf32>
    %4 = vector.shape_cast %3 : vector<2xf32> to vector<2x1xf32>
    %5 = math.rsqrt %4 : vector<2x1xf32>
    %6 = vector.broadcast %5 : vector<2x1xf32> to vector<2x32xf32>
    %7 = arith.mulf %0, %6 : vector<2x32xf32>
    %8 = arith.mulf %1, %1 : vector<2x32xf32>
    %cst_3 = arith.constant dense<0.000000e+00> : vector<2xf32>
    %9 = vector.multi_reduction <add>, %8, %cst_3 [1] : vector<2x32xf32> to vector<2xf32>
    %10 = vector.shape_cast %9 : vector<2xf32> to vector<2x1xf32>
    %11 = math.rsqrt %10 : vector<2x1xf32>
    %12 = vector.broadcast %11 : vector<2x1xf32> to vector<2x32xf32>
    %13 = arith.mulf %1, %12 : vector<2x32xf32>
    %c0_4 = arith.constant 0 : index
    %c0_5 = arith.constant 0 : index
    %14 = vector.load %arg2[%c0_4, %c0_5] : memref<1x1xf32, #tpu.memory_space<vmem>>, vector<1x1xf32>
    %15 = math.exp %14 : vector<1x1xf32>
    %cst_6 = arith.constant dense<0.000000e+00> : vector<2x2xf32>
    %16 = tpu.matmul %7, %13, %cst_6 {dimension_numbers = #tpu.dot_dimension_numbers<[1], [1], [0], [0], [0, 0, 1, 0], [], []>} : vector<2x32xf32>, vector<2x32xf32>, vector<2x2xf32> -> vector<2x2xf32>
    %17 = vector.broadcast %15 : vector<1x1xf32> to vector<2x2xf32>
    %18 = arith.mulf %17, %16 : vector<2x2xf32>
    %c0_7 = arith.constant 0 : index
    %c0_8 = arith.constant 0 : index
    %19 = vector.load %arg3[%c0_7, %c0_8] : memref<2x2xf32, #tpu.memory_space<vmem>>, vector<2x2xf32>
    tpu.vector_store %arg3[%c0_7, %c0_8], %18 {strides = array<i32>} : memref<2x2xf32, #tpu.memory_space<vmem>>, vector<2x2xf32>,
    return
  }
}

</mosaic_0001>

<llo_original>
// kernel: clip_forward.20
$region0: #{clip_forward.20}
  #allocation0 [shape = 'u32[]', space=smem, size = 0x4, offset = 0x4, fixed_abs, tag = 'smem constant byte address 0x4 - core index']
  #allocation1 [shape = 'u32[72,128]{1,0:T(1,128)}', space=vmem, size = 0x9000, scoped, tag = 'internal scratch']
  %s0 = inlined_call_operand.vmem [shape: f32[2,64], index: 0, kind: input, shape index: {}]
  %s1 = inlined_call_operand.vmem [shape: f32[1,64], index: 1, kind: input, shape index: {}]
  %s2 = inlined_call_operand.vmem [shape: f32[1,64], index: 2, kind: input, shape index: {}]
  %s3 = inlined_call_operand.vmem [shape: f32[64,32], index: 3, kind: input, shape index: {}]
  %s4 = inlined_call_operand.vmem [shape: f32[2,32], index: 4, kind: output, shape index: {}]
  %s5 = sld [smem:[#allocation0]]
  $region26: #{clip_forward.20} parent=0
    _
  %s7 = ssub.s32 1, %s5
  %s8 = scalar_select 0, %s7, %s5
  // Predicated region
  $region2: #{clip_forward.20} parent=0 // pred_check
    _
  $region3: #{clip_forward.20} parent=0 // pred_check_branch
    %10 = sbr.rel (0) target = $region5
  $region4: #{clip_forward.20} parent=0 // pred_region
    _
  $region5: #{clip_forward.20} parent=0 // pred_fallthru
    _
  // Predicated region
  $region6: #{clip_forward.20} parent=0 // pred_check
    _
  $region7: #{clip_forward.20} parent=0 // pred_check_branch
    %12 = sbr.rel (0) target = $region9
  $region8: #{clip_forward.20} parent=0 // pred_region
    _
  $region9: #{clip_forward.20} parent=0 // pred_fallthru
    _
  // Predicated region
  $region10: #{clip_forward.20} parent=0 // pred_check
    _
  $region11: #{clip_forward.20} parent=0 // pred_check_branch
    %14 = sbr.rel (0) target = $region13
  $region12: #{clip_forward.20} parent=0 // pred_region
    _
  $region13: #{clip_forward.20} parent=0 // pred_fallthru
    _
  // Predicated region
  $region14: #{clip_forward.20} parent=0 // pred_check
    _
  $region15: #{clip_forward.20} parent=0 // pred_check_branch
    %16 = sbr.rel (0) target = $region17
  $region16: #{clip_forward.20} parent=0 // pred_region
    _
  $region17: #{clip_forward.20} parent=0 // pred_fallthru
    _
  %v17 = vld [vmem:[%s0] sm:$0x3]
  %vm18 = vcmask 517120
  %v19 = vsel %vm18, %v17, 0.0
  %20 = vadd.xlane.f32.xlu0 %v19
  %v21 = vpop.xlane.xlu0 %20
  %v22 = vrcp.pop 64.0
  %v23 = vmul.f32 64.0, %v22
  %v24 = vsub.f32 1.0, %v23
  %v25 = vmul.f32 %v22, %v24
  %v26 = vadd.f32 %v22, %v25
  %vm27 = vweird.f32 %v22
  %v28 = vsel %vm27, %v22, %v26
  %v29 = vmul.f32 %v21, %v28
  %v30 = vsub.f32 %v17, %v29
  %v31 = vmul.f32 %v30, %v30
  %v32 = vsel %vm18, %v31, 0.0
  %33 = vadd.xlane.f32.xlu0 %v32
  %v34 = vpop.xlane.xlu0 %33
  %v35 = vmul.f32 %v34, %v28
  %v36 = vadd.f32 %v35, 1e-05
  %v37 = vrsqrt.pop %v36
  %v38 = vmul.f32 %v37, %v36
  %v39 = vmul.f32 %v38, %v37
  %v40 = vmul.f32 0.5, %v39
  %v41 = vsub.f32 1.5, %v40
  %v42 = vmul.f32 %v37, %v41
  %vm43 = vweird.f32 %v36
  %vm44 = vweird.f32 %v37
  %vm45 = vmor %vm43, %vm44
  %v46 = vsel %vm45, %v37, %v42
  %v47 = vmul.f32 %v30, %v46
  %v48 = vld [vmem:[%s1] sm:$0x1]
  %v50 = vperm.slane %v48, 0
  %v52 = vmul.f32 %v47, %v50
  %v53 = vld [vmem:[%s2] sm:$0x1]
  %v55 = vperm.slane %v53, 0
  %v57 = vadd.f32 %v52, %v55
  %v58 = vld [vmem:[%s3] sm:$0xff]
  %v59 = vld [vmem:[%s3 + $0x8] sm:$0xff]
  %v60 = vld [vmem:[%s3 + $0x10] sm:$0xff]
  %v61 = vld [vmem:[%s3 + $0x18] sm:$0xff]
  %v62 = vld [vmem:[%s3 + $0x20] sm:$0xff]
  %v63 = vld [vmem:[%s3 + $0x28] sm:$0xff]
  %v64 = vld [vmem:[%s3 + $0x30] sm:$0xff]
  %v65 = vld [vmem:[%s3 + $0x38] sm:$0xff]
  %vm66 = vcmask 523264
  %v68 = vsel %vm66, %v57, 0
  %70 = vmatpush.msra.mxu0 0.0
  %71 = vmatpush.msra.mxu0 0.0
  %72 = vmatpush.msra.mxu0 0.0
  %73 = vmatpush.msra.mxu0 0.0
  %74 = vmatpush.msra.mxu0 0.0
  %75 = vmatpush.msra.mxu0 0.0
  %76 = vmatpush.msra.mxu0 0.0
  %77 = vmatpush.msra.mxu0 0.0
  %78 = vmatpush.msra.mxu0 %v65
  %79 = vmatpush.msra.mxu0 %v64
  %80 = vmatpush.msra.mxu0 %v63
  %81 = vmatpush.msra.mxu0 %v62
  %82 = vmatpush.msra.mxu0 %v61
  %83 = vmatpush.msra.mxu0 %v60
  %84 = vmatpush.msra.mxu0 %v59
  %85 = vmatpush.msra.mxu0 %v58
  %86 = vmatmul.f32.gmra.mxu0 %v68
  %v87 = vpop.f32.mrf.mxu0
  %v88 = vadd.f32 0.0, %v87
  %89 = vdwg.mxu0
  %vm90 = vcmask 254976
  %91 = vst.msk [vmem:[%s4] sm:$0x3] %vm90, %v88
  // Predicated region
  $region18: #{clip_forward.20} parent=0 // pred_check
    _
  $region19: #{clip_forward.20} parent=0 // pred_check_branch
    %93 = sbr.rel (0) target = $region21
  $region20: #{clip_forward.20} parent=0 // pred_region
    _
  $region21: #{clip_forward.20} parent=0 // pred_fallthru
    _
  // Predicated region
  $region22: #{clip_forward.20} parent=0 // pred_check
    _
  $region23: #{clip_forward.20} parent=0 // pred_check_branch
    %95 = sbr.rel (0) target = $region25
  $region24: #{clip_forward.20} parent=0 // pred_region
    _
  $region25: #{clip_forward.20} parent=0 // pred_fallthru
    _

// kernel: clip_forward.17
$region0: #{clip_forward.17}
  #allocation0 [shape = 'u32[]', space=smem, size = 0x4, offset = 0x4, fixed_abs, tag = 'smem constant byte address 0x4 - core index']
  #allocation1 [shape = 'u32[72,128]{1,0:T(1,128)}', space=vmem, size = 0x9000, scoped, tag = 'internal scratch']
  %s0 = inlined_call_operand.vmem [shape: f32[16,64], index: 0, kind: input, shape index: {}]
  %s1 = inlined_call_operand.vmem [shape: f32[1,64], index: 1, kind: input, shape index: {}]
  %s2 = inlined_call_operand.vmem [shape: f32[1,64], index: 2, kind: input, shape index: {}]
  %s3 = inlined_call_operand.vmem [shape: bf16[64,256], index: 3, kind: input, shape index: {}]
  %s4 = inlined_call_operand.vmem [shape: f32[1,256], index: 4, kind: input, shape index: {}]
  %s5 = inlined_call_operand.vmem [shape: bf16[256,64], index: 5, kind: input, shape index: {}]
  %s6 = inlined_call_operand.vmem [shape: f32[1,64], index: 6, kind: input, shape index: {}]
  %s7 = inlined_call_operand.vmem [shape: f32[16,64], index: 7, kind: output, shape index: {}]
  %s8 = sld [smem:[#allocation0]]
  $region38: #{clip_forward.17} parent=0
    _
  %s10 = ssub.s32 1, %s8
  %s11 = scalar_select 0, %s10, %s8
  // Predicated region
  $region2: #{clip_forward.17} parent=0 // pred_check
    _
  $region3: #{clip_forward.17} parent=0 // pred_check_branch
    %13 = sbr.rel (0) target = $region5
  $region4: #{clip_forward.17} parent=0 // pred_region
    _
  $region5: #{clip_forward.17} parent=0 // pred_fallthru
    _
  // Predicated region
  $region6: #{clip_forward.17} parent=0 // pred_check
    _
  $region7: #{clip_forward.17} parent=0 // pred_check_branch
    %15 = sbr.rel (0) target = $region9
  $region8: #{clip_forward.17} parent=0 // pred_region
    _
  $region9: #{clip_forward.17} parent=0 // pred_fallthru
    _
  // Predicated region
  $region10: #{clip_forward.17} parent=0 // pred_check
    _
  $region11: #{clip_forward.17} parent=0 // pred_check_branch
    %17 = sbr.rel (0) target = $region13
  $region12: #{clip_forward.17} parent=0 // pred_region
    _
  $region13: #{clip_forward.17} parent=0 // pred_fallthru
    _
  // Predicated region
  $region14: #{clip_forward.17} parent=0 // pred_check
    _
  $region15: #{clip_forward.17} parent=0 // pred_check_branch
    %19 = sbr.rel (0) target = $region17
  $region16: #{clip_forward.17} parent=0 // pred_region
    _
  $region17: #{clip_forward.17} parent=0 // pred_fallthru
    _
  // Predicated region
  $region18: #{clip_forward.17} parent=0 // pred_check
    _
  $region19: #{clip_forward.17} parent=0 // pred_check_branch
    %21 = sbr.rel (0) target = $region21
  $region20: #{clip_forward.17} parent=0 // pred_region
    _
  $region21: #{clip_forward.17} parent=0 // pred_fallthru
    _
  // Predicated region
  $region22: #{clip_forward.17} parent=0 // pred_check
    _
  $region23: #{clip_forward.17} parent=0 // pred_check_branch
    %23 = sbr.rel (0) target = $region25
  $region24: #{clip_forward.17} parent=0 // pred_region
    _
  $region25: #{clip_forward.17} parent=0 // pred_fallthru
    _
  // Predicated region
  $region26: #{clip_forward.17} parent=0 // pred_check
    _
  $region27: #{clip_forward.17} parent=0 // pred_check_branch
    %25 = sbr.rel (0) target = $region29
  $region28: #{clip_forward.17} parent=0 // pred_region
    _
  $region29: #{clip_forward.17} parent=0 // pred_fallthru
    _
  %v27 = vld [vmem:[%s0] sm:$0xff]
  %v28 = vld [vmem:[%s0 + $0x8] sm:$0xff]
  %vm29 = vcmask 523264
  %v30 = vsel %vm29, %v27, 0.0
  %31 = vadd.xlane.f32.xlu0 %v30
  %v32 = vpop.xlane.xlu0 %31
  %v33 = vsel %vm29, %v28, 0.0
  %34 = vadd.xlane.f32.xlu0 %v33
  %v35 = vpop.xlane.xlu0 %34
  %v36 = vrcp.pop 64.0
  %v37 = vmul.f32 64.0, %v36
  %v38 = vsub.f32 1.0, %v37
  %v39 = vmul.f32 %v36, %v38
  %v40 = vadd.f32 %v36, %v39
  %vm41 = vweird.f32 %v36
  %v42 = vsel %vm41, %v36, %v40
  %v43 = vmul.f32 %v32, %v42
  %v44 = vmul.f32 %v35, %v42
  %v45 = vsub.f32 %v27, %v43
  %v46 = vsub.f32 %v28, %v44
  %v47 = vmul.f32 %v45, %v45
  %v48 = vmul.f32 %v46, %v46
  %v49 = vsel %vm29, %v47, 0.0
  %50 = vadd.xlane.f32.xlu0 %v49
  %v51 = vpop.xlane.xlu0 %50
  %v52 = vsel %vm29, %v48, 0.0
  %53 = vadd.xlane.f32.xlu0 %v52
  %v54 = vpop.xlane.xlu0 %53
  %v55 = vmul.f32 %v51, %v42
  %v56 = vmul.f32 %v54, %v42
  %v57 = vadd.f32 %v55, 1e-05
  %v58 = vadd.f32 %v56, 1e-05
  %v59 = vrsqrt.pop %v57
  %v60 = vmul.f32 %v59, %v57
  %v61 = vmul.f32 %v60, %v59
  %v62 = vmul.f32 0.5, %v61
  %v63 = vsub.f32 1.5, %v62
  %v64 = vmul.f32 %v59, %v63
  %vm65 = vweird.f32 %v57
  %vm66 = vweird.f32 %v59
  %vm67 = vmor %vm65, %vm66
  %v68 = vsel %vm67, %v59, %v64
  %v69 = vrsqrt.pop %v58
  %v70 = vmul.f32 %v69, %v58
  %v71 = vmul.f32 %v70, %v69
  %v72 = vmul.f32 0.5, %v71
  %v73 = vsub.f32 1.5, %v72
  %v74 = vmul.f32 %v69, %v73
  %vm75 = vweird.f32 %v58
  %vm76 = vweird.f32 %v69
  %vm77 = vmor %vm75, %vm76
  %v78 = vsel %vm77, %v69, %v74
  %v79 = vmul.f32 %v45, %v68
  %v80 = vmul.f32 %v46, %v78
  %v81 = vld [vmem:[%s1] sm:$0x1]
  %v83 = vperm.slane %v81, 0
  %v85 = vmul.f32 %v79, %v83
  %v86 = vmul.f32 %v80, %v83
  %v87 = vld [vmem:[%s2] sm:$0x1]
  %v89 = vperm.slane %v87, 0
  %v91 = vadd.f32 %v85, %v89
  %v92 = vadd.f32 %v86, %v89
  %v93 = vpack.c.bf16 %v92, %v91
  %v94 = vld [vmem:[%s3] sm:$0xff]
  %v95 = vld [vmem:[%s3 + $0x8] sm:$0xff]
  %v96 = vld [vmem:[%s3 + $0x10] sm:$0xff]
  %v97 = vld [vmem:[%s3 + $0x18] sm:$0xff]
  %v98 = vld [vmem:[%s3 + $0x20] sm:$0xff]
  %v99 = vld [vmem:[%s3 + $0x28] sm:$0xff]
  %v100 = vld [vmem:[%s3 + $0x30] sm:$0xff]
  %v101 = vld [vmem:[%s3 + $0x38] sm:$0xff]
  %v102 = vld [vmem:[%s4] sm:$0x3]
  %v104 = vperm.slane %v102, 0
  %v105 = vperm.slane %v102, 1
  %v116 = vunpack.c.l.b16 %v94
  %v117 = vunpack.c.h.b16 %v94
  %v118 = vunpack.c.l.b16 %v95
  %v119 = vunpack.c.h.b16 %v95
  %v120 = vunpack.c.l.b16 %v96
  %v121 = vunpack.c.h.b16 %v96
  %v122 = vunpack.c.l.b16 %v97
  %v123 = vunpack.c.h.b16 %v97
  %v124 = vunpack.c.l.b16 %v98
  %v125 = vunpack.c.h.b16 %v98
  %v126 = vunpack.c.l.b16 %v99
  %v127 = vunpack.c.h.b16 %v99
  %v128 = vunpack.c.l.b16 %v100
  %v129 = vunpack.c.h.b16 %v100
  %v130 = vunpack.c.l.b16 %v101
  %v131 = vunpack.c.h.b16 %v101
  %v132 = vpack.c.b16 %v118, %v116
  %v133 = vpack.c.b16 %v119, %v117
  %v134 = vpack.c.b16 %v122, %v120
  %v135 = vpack.c.b16 %v123, %v121
  %v136 = vpack.c.b16 %v126, %v124
  %v137 = vpack.c.b16 %v127, %v125
  %v138 = vpack.c.b16 %v130, %v128
  %v139 = vpack.c.b16 %v131, %v129
  %v149 = vsel %vm29, %v93, 0
  %151 = vmatpush.bf16.msra.mxu0 0
  %152 = vmatpush.bf16.msra.mxu0 0
  %153 = vmatpush.bf16.msra.mxu0 0
  %154 = vmatpush.bf16.msra.mxu0 0
  %155 = vmatpush.bf16.msra.mxu0 %v138
  %156 = vmatpush.bf16.msra.mxu0 %v136
  %157 = vmatpush.bf16.msra.mxu0 %v134
  %158 = vmatpush.bf16.msra.mxu0 %v132
  %159 = vmatmul.bf16.gmra.mxu0 %v149
  %v160 = vpop.f32.mrf.mxu0
  %v161 = vadd.f32 %v104, %v160
  %v162 = vpop.f32.mrf.mxu0
  %v163 = vadd.f32 %v104, %v162
  %164 = vdwg.mxu0
  %165 = vmatpush.bf16.msra.mxu0 0
  %166 = vmatpush.bf16.msra.mxu0 0
  %167 = vmatpush.bf16.msra.mxu0 0
  %168 = vmatpush.bf16.msra.mxu0 0
  %169 = vmatpush.bf16.msra.mxu0 %v139
  %170 = vmatpush.bf16.msra.mxu0 %v137
  %171 = vmatpush.bf16.msra.mxu0 %v135
  %172 = vmatpush.bf16.msra.mxu0 %v133
  %173 = vmatmul.bf16.gmra.mxu0 %v149
  %v174 = vpop.f32.mrf.mxu0
  %v175 = vadd.f32 %v105, %v174
  %v176 = vpop.f32.mrf.mxu0
  %v177 = vadd.f32 %v105, %v176
  %178 = vdwg.mxu0
  %v179 = vmul.f32 %v161, 1.702
  %v180 = vmul.f32 %v175, 1.702
  %v181 = vmul.f32 %v163, 1.702
  %v182 = vmul.f32 %v177, 1.702
  %v183 = vxor.u32 %v179, 2147483648
  %v184 = vxor.u32 %v180, 2147483648
  %v185 = vxor.u32 %v181, 2147483648
  %v186 = vxor.u32 %v182, 2147483648
  %v187 = vmul.f32 %v183, 1.442695
  %v188 = vpow.pop %v187
  %v189 = vmul.f32 %v184, 1.442695
  %v190 = vpow.pop %v189
  %v191 = vmul.f32 %v185, 1.442695
  %v192 = vpow.pop %v191
  %v193 = vmul.f32 %v186, 1.442695
  %v194 = vpow.pop %v193
  %v195 = vadd.f32 %v188, 1.0
  %v196 = vadd.f32 %v190, 1.0
  %v197 = vadd.f32 %v192, 1.0
  %v198 = vadd.f32 %v194, 1.0
  %v199 = vrcp.pop %v195
  %v200 = vmul.f32 %v195, %v199
  %v201 = vsub.f32 1.0, %v200
  %v202 = vmul.f32 %v199, %v201
  %v203 = vadd.f32 %v199, %v202
  %vm204 = vweird.f32 %v195
  %vm205 = vweird.f32 %v199
  %vm206 = vmor %vm204, %vm205
  %v207 = vsel %vm206, %v199, %v203
  %v208 = vand.u32 2147483647, %v195
  %vm209 = vcmp.eq.f32.partialorder %v208, 8.507059e+37
  %v210 = vand.u32 %v195, 2147483648
  %v211 = vor.u32 1.1754944e-38, %v210
  %v212 = vsel %vm209, %v211, %v207
  %v213 = vmul.f32 1.0, %v212
  %v214 = vrcp.pop %v196
  %v215 = vmul.f32 %v196, %v214
  %v216 = vsub.f32 1.0, %v215
  %v217 = vmul.f32 %v214, %v216
  %v218 = vadd.f32 %v214, %v217
  %vm219 = vweird.f32 %v196
  %vm220 = vweird.f32 %v214
  %vm221 = vmor %vm219, %vm220
  %v222 = vsel %vm221, %v214, %v218
  %v223 = vand.u32 2147483647, %v196
  %vm224 = vcmp.eq.f32.partialorder %v223, 8.507059e+37
  %v225 = vand.u32 %v196, 2147483648
  %v226 = vor.u32 1.1754944e-38, %v225
  %v227 = vsel %vm224, %v226, %v222
  %v228 = vmul.f32 1.0, %v227
  %v229 = vrcp.pop %v197
  %v230 = vmul.f32 %v197, %v229
  %v231 = vsub.f32 1.0, %v230
  %v232 = vmul.f32 %v229, %v231
  %v233 = vadd.f32 %v229, %v232
  %vm234 = vweird.f32 %v197
  %vm235 = vweird.f32 %v229
  %vm236 = vmor %vm234, %vm235
  %v237 = vsel %vm236, %v229, %v233
  %v238 = vand.u32 2147483647, %v197
  %vm239 = vcmp.eq.f32.partialorder %v238, 8.507059e+37
  %v240 = vand.u32 %v197, 2147483648
  %v241 = vor.u32 1.1754944e-38, %v240
  %v242 = vsel %vm239, %v241, %v237
  %v243 = vmul.f32 1.0, %v242
  %v244 = vrcp.pop %v198
  %v245 = vmul.f32 %v198, %v244
  %v246 = vsub.f32 1.0, %v245
  %v247 = vmul.f32 %v244, %v246
  %v248 = vadd.f32 %v244, %v247
  %vm249 = vweird.f32 %v198
  %vm250 = vweird.f32 %v244
  %vm251 = vmor %vm249, %vm250
  %v252 = vsel %vm251, %v244, %v248
  %v253 = vand.u32 2147483647, %v198
  %vm254 = vcmp.eq.f32.partialorder %v253, 8.507059e+37
  %v255 = vand.u32 %v198, 2147483648
  %v256 = vor.u32 1.1754944e-38, %v255
  %v257 = vsel %vm254, %v256, %v252
  %v258 = vmul.f32 1.0, %v257
  %v259 = vmul.f32 %v161, %v213
  %v260 = vmul.f32 %v175, %v228
  %v261 = vmul.f32 %v163, %v243
  %v262 = vmul.f32 %v177, %v258
  %v263 = vpack.c.bf16 %v261, %v259
  %v264 = vpack.c.bf16 %v262, %v260
  %v265 = vld [vmem:[%s5] sm:$0xf]
  %v266 = vld [vmem:[%s5 + $0x4] sm:$0xf]
  %v267 = vld [vmem:[%s5 + $0x8] sm:$0xf]
  %v268 = vld [vmem:[%s5 + $0xc] sm:$0xf]
  %v269 = vld [vmem:[%s5 + $0x10] sm:$0xf]
  %v270 = vld [vmem:[%s5 + $0x14] sm:$0xf]
  %v271 = vld [vmem:[%s5 + $0x18] sm:$0xf]
  %v272 = vld [vmem:[%s5 + $0x1c] sm:$0xf]
  %v273 = vld [vmem:[%s5 + $0x20] sm:$0xf]
  %v274 = vld [vmem:[%s5 + $0x24] sm:$0xf]
  %v275 = vld [vmem:[%s5 + $0x28] sm:$0xf]
  %v276 = vld [vmem:[%s5 + $0x2c] sm:$0xf]
  %v277 = vld [vmem:[%s5 + $0x30] sm:$0xf]
  %v278 = vld [vmem:[%s5 + $0x34] sm:$0xf]
  %v279 = vld [vmem:[%s5 + $0x38] sm:$0xf]
  %v280 = vld [vmem:[%s5 + $0x3c] sm:$0xf]
  %v281 = vld [vmem:[%s5 + $0x40] sm:$0xf]
  %v282 = vld [vmem:[%s5 + $0x44] sm:$0xf]
  %v283 = vld [vmem:[%s5 + $0x48] sm:$0xf]
  %v284 = vld [vmem:[%s5 + $0x4c] sm:$0xf]
  %v285 = vld [vmem:[%s5 + $0x50] sm:$0xf]
  %v286 = vld [vmem:[%s5 + $0x54] sm:$0xf]
  %v287 = vld [vmem:[%s5 + $0x58] sm:$0xf]
  %v288 = vld [vmem:[%s5 + $0x5c] sm:$0xf]
  %v289 = vld [vmem:[%s5 + $0x60] sm:$0xf]
  %v290 = vld [vmem:[%s5 + $0x64] sm:$0xf]
  %v291 = vld [vmem:[%s5 + $0x68] sm:$0xf]
  %v292 = vld [vmem:[%s5 + $0x6c] sm:$0xf]
  %v293 = vld [vmem:[%s5 + $0x70] sm:$0xf]
  %v294 = vld [vmem:[%s5 + $0x74] sm:$0xf]
  %v295 = vld [vmem:[%s5 + $0x78] sm:$0xf]
  %v296 = vld [vmem:[%s5 + $0x7c] sm:$0xf]
  %v297 = vld [vmem:[%s6] sm:$0x1]
  %v299 = vperm.slane %v297, 0
  %v333 = vunpack.c.l.b16 %v265
  %v334 = vunpack.c.l.b16 %v266
  %v335 = vunpack.c.l.b16 %v267
  %v336 = vunpack.c.l.b16 %v268
  %v337 = vunpack.c.l.b16 %v269
  %v338 = vunpack.c.l.b16 %v270
  %v339 = vunpack.c.l.b16 %v271
  %v340 = vunpack.c.l.b16 %v272
  %v341 = vunpack.c.l.b16 %v273
  %v342 = vunpack.c.l.b16 %v274
  %v343 = vunpack.c.l.b16 %v275
  %v344 = vunpack.c.l.b16 %v276
  %v345 = vunpack.c.l.b16 %v277
  %v346 = vunpack.c.l.b16 %v278
  %v347 = vunpack.c.l.b16 %v279
  %v348 = vunpack.c.l.b16 %v280
  %v349 = vunpack.c.l.b16 %v281
  %v350 = vunpack.c.l.b16 %v282
  %v351 = vunpack.c.l.b16 %v283
  %v352 = vunpack.c.l.b16 %v284
  %v353 = vunpack.c.l.b16 %v285
  %v354 = vunpack.c.l.b16 %v286
  %v355 = vunpack.c.l.b16 %v287
  %v356 = vunpack.c.l.b16 %v288
  %v357 = vunpack.c.l.b16 %v289
  %v358 = vunpack.c.l.b16 %v290
  %v359 = vunpack.c.l.b16 %v291
  %v360 = vunpack.c.l.b16 %v292
  %v361 = vunpack.c.l.b16 %v293
  %v362 = vunpack.c.l.b16 %v294
  %v363 = vunpack.c.l.b16 %v295
  %v364 = vunpack.c.l.b16 %v296
  %v365 = vpack.c.b16 %v334, %v333
  %v366 = vpack.c.b16 %v336, %v335
  %v367 = vpack.c.b16 %v338, %v337
  %v368 = vpack.c.b16 %v340, %v339
  %v369 = vpack.c.b16 %v342, %v341
  %v370 = vpack.c.b16 %v344, %v343
  %v371 = vpack.c.b16 %v346, %v345
  %v372 = vpack.c.b16 %v348, %v347
  %v373 = vpack.c.b16 %v350, %v349
  %v374 = vpack.c.b16 %v352, %v351
  %v375 = vpack.c.b16 %v354, %v353
  %v376 = vpack.c.b16 %v356, %v355
  %v377 = vpack.c.b16 %v358, %v357
  %v378 = vpack.c.b16 %v360, %v359
  %v379 = vpack.c.b16 %v362, %v361
  %v380 = vpack.c.b16 %v364, %v363
  %397 = vmatpush.bf16.msra.mxu0 %v372
  %398 = vmatpush.bf16.msra.mxu0 %v371
  %399 = vmatpush.bf16.msra.mxu0 %v370
  %400 = vmatpush.bf16.msra.mxu0 %v369
  %401 = vmatpush.bf16.msra.mxu0 %v368
  %402 = vmatpush.bf16.msra.mxu0 %v367
  %403 = vmatpush.bf16.msra.mxu0 %v366
  %404 = vmatpush.bf16.msra.mxu0 %v365
  %405 = vmatmul.bf16.gmra.mxu0 %v263
  %v406 = vpop.f32.mrf.mxu0
  %v407 = vadd.f32 %v299, %v406
  %v408 = vpop.f32.mrf.mxu0
  %v409 = vadd.f32 %v299, %v408
  %410 = vdwg.mxu0
  %411 = vmatpush.bf16.msra.mxu0 %v380
  %412 = vmatpush.bf16.msra.mxu0 %v379
  %413 = vmatpush.bf16.msra.mxu0 %v378
  %414 = vmatpush.bf16.msra.mxu0 %v377
  %415 = vmatpush.bf16.msra.mxu0 %v376
  %416 = vmatpush.bf16.msra.mxu0 %v375
  %417 = vmatpush.bf16.msra.mxu0 %v374
  %418 = vmatpush.bf16.msra.mxu0 %v373
  %419 = vmatmul.bf16.gmra.mxu0 %v264
  %v420 = vpop.f32.mrf.mxu0
  %v421 = vadd.f32 %v407, %v420
  %v422 = vpop.f32.mrf.mxu0
  %v423 = vadd.f32 %v409, %v422
  %424 = vdwg.mxu0
  %v425 = vadd.f32 %v27, %v421
  %v426 = vadd.f32 %v28, %v423
  %427 = vst.msk [vmem:[%s7] sm:$0xff] %vm29, %v425
  %428 = vst.msk [vmem:[%s7 + $0x8] sm:$0xff] %vm29, %v426
  // Predicated region
  $region30: #{clip_forward.17} parent=0 // pred_check
    _
  $region31: #{clip_forward.17} parent=0 // pred_check_branch
    %430 = sbr.rel (0) target = $region33
  $region32: #{clip_forward.17} parent=0 // pred_region
    _
  $region33: #{clip_forward.17} parent=0 // pred_fallthru
    _
  // Predicated region
  $region34: #{clip_forward.17} parent=0 // pred_check
    _
  $region35: #{clip_forward.17} parent=0 // pred_check_branch
    %432 = sbr.rel (0) target = $region37
  $region36: #{clip_forward.17} parent=0 // pred_region
    _
  $region37: #{clip_forward.17} parent=0 // pred_fallthru
    _

// kernel: clip_forward.16
$region0: #{clip_forward.16}
  #allocation0 [shape = 'u32[]', space=smem, size = 0x4, offset = 0x4, fixed_abs, tag = 'smem constant byte address 0x4 - core index']
  #allocation1 [shape = 'u32[72,128]{1,0:T(1,128)}', space=vmem, size = 0x9000, scoped, tag = 'internal scratch']
  #allocation2 [shape = 'bf16[2,8,32]{2,1,0:T(8,128)(2,1)}', space=vmem, size = 0x1000, scoped, tag = 'scratch operand']
  #allocation3 [shape = 'bf16[2,8,32]{2,1,0:T(8,128)(2,1)}', space=vmem, size = 0x1000, scoped, tag = 'scratch operand']
  #allocation4 [shape = 'bf16[8,64]{1,0:T(8,128)(2,1)}', space=vmem, size = 0x800, scoped, tag = 'scratch operand']
  %s0 = inlined_call_operand.vmem [shape: f32[2,8,64], index: 0, kind: input, shape index: {}]
  %s1 = inlined_call_operand.vmem [shape: f32[1,64], index: 1, kind: input, shape index: {}, may-alias: {1,3}]
  %s2 = inlined_call_operand.vmem [shape: f32[1,64], index: 2, kind: input, shape index: {}, may-alias: {2,4}]
  %s3 = inlined_call_operand.vmem [shape: f32[1,64], index: 3, kind: input, shape index: {}, may-alias: {1,3}]
  %s4 = inlined_call_operand.vmem [shape: f32[1,64], index: 4, kind: input, shape index: {}, may-alias: {2,4}]
  %s5 = inlined_call_operand.vmem [shape: bf16[2,64,96], index: 5, kind: input, shape index: {}]
  %s6 = inlined_call_operand.vmem [shape: f32[2,1,96], index: 6, kind: input, shape index: {}]
  %s7 = inlined_call_operand.vmem [shape: bf16[64,64], index: 7, kind: input, shape index: {}]
  %s8 = inlined_call_operand.vmem [shape: f32[1,64], index: 8, kind: input, shape index: {}]
  %s9 = inlined_call_operand.vmem [shape: f32[2,8,64], index: 9, kind: output, shape index: {}]
  %s10 = sld [smem:[#allocation0]]
  $region69: #{clip_forward.16} parent=0
    _
  %s12 = ssub.s32 1, %s10
  %s13 = scalar_select 0, %s12, %s10
  loop: start=0, step=1, limit=4
  $region2: #{clip_forward.16} parent=0 // loop_pre_header
    _
  $region3: #{clip_forward.16} parent=0 // loop_header
    %s15 = sphi 0, %s19
    %p16 = scmp.ge.s32.totalorder %s15, 4
    %s25 = sphi 0, %s27
    %s28 = sphi 0, %s25
    %s29 = sphi 0, %s28
    %s45 = sphi 0, %s29
    %s49 = sphi 0, %s49
    %s51 = sphi 0, %s49
    %s52 = sphi 0, %s51
    %s66 = sphi 0, %s52
    %s70 = sphi 0, %s70
    %s72 = sphi 0, %s70
    %s73 = sphi 0, %s72
    %s87 = sphi 0, %s73
    %s91 = sphi 0, %s91
    %s93 = sphi 0, %s91
    %s94 = sphi 0, %s93
    %s108 = sphi 0, %s94
    %s112 = sphi 0, %s112
    %s114 = sphi 0, %s112
    %s115 = sphi 0, %s114
    %s129 = sphi 0, %s115
    %s133 = sphi 0, %s133
    %s135 = sphi 0, %s133
    %s136 = sphi 0, %s135
    %s150 = sphi 0, %s136
    %s154 = sphi 0, %s154
    %s156 = sphi 0, %s154
    %s157 = sphi 0, %s156
    %s171 = sphi 0, %s157
    %s175 = sphi 0, %s175
    %s177 = sphi 0, %s175
    %s178 = sphi 0, %s177
    %s192 = sphi 0, %s178
    %s196 = sphi 0, %s196
    %s198 = sphi 0, %s196
    %s199 = sphi 0, %s198
    %s213 = sphi 0, %s199
    %s219 = sphi 0, %s221
    %s222 = sphi 0, %s219
    %s223 = sphi 0, %s222
    %s239 = sphi 0, %s223
  $region4: #{clip_forward.16} parent=0 // loop_header_branch
    %18 = sbr.rel (%p16) target = $region8
  $region5: #{clip_forward.16} parent=0 // loop_body
    %s20 = ssub.s32 %s15, 1
    %s21 = ssub.s32 %s15, 2
    %s22 = sadd.s32 %s15, 1
    %s23 = ssub.s32 %s15, %s22
    %p24 = scmp.eq.s32.totalorder %s23, 0
    %s26 = sadd.s32 %s25, 1
    %s27 = scalar_select %p24, %s25, %s26
    %p30 = pneg %p24
    %p31 = scmp.eq.s32.totalorder %s15, 1
    %p32 = por %p30, %p31
    %p33 = scmp.ne.s32.totalorder %s25, %s28
    %p34 = scmp.eq.s32.totalorder %s15, 0
    %p35 = por %p33, %p34
    %p36 = scmp.ne.s32.totalorder %s25, %s28
    %p37 = scmp.eq.s32.totalorder %s20, 1
    %p38 = por %p36, %p37
    %p39 = scmp.ne.s32.totalorder %s28, %s29
    %p40 = scmp.eq.s32.totalorder %s20, 0
    %p41 = por %p39, %p40
    %p42 = scmp.ne.s32.totalorder %s28, %s29
    %p43 = scmp.eq.s32.totalorder %s21, 1
    %p44 = por %p42, %p43
    %p46 = scmp.ne.s32.totalorder %s29, %s45
    %p47 = scmp.eq.s32.totalorder %s21, 0
    %p48 = por %p46, %p47
    %s50 = sadd.s32 %s49, 1
    %p53 = scmp.eq.s32.totalorder %s15, 1
    %p54 = scmp.ne.s32.totalorder %s49, %s51
    %p55 = scmp.eq.s32.totalorder %s15, 0
    %p56 = por %p54, %p55
    %p57 = scmp.ne.s32.totalorder %s49, %s51
    %p58 = scmp.eq.s32.totalorder %s20, 1
    %p59 = por %p57, %p58
    %p60 = scmp.ne.s32.totalorder %s51, %s52
    %p61 = scmp.eq.s32.totalorder %s20, 0
    %p62 = por %p60, %p61
    %p63 = scmp.ne.s32.totalorder %s51, %s52
    %p64 = scmp.eq.s32.totalorder %s21, 1
    %p65 = por %p63, %p64
    %p67 = scmp.ne.s32.totalorder %s52, %s66
    %p68 = scmp.eq.s32.totalorder %s21, 0
    %p69 = por %p67, %p68
    %s71 = sadd.s32 %s70, 1
    %p74 = scmp.eq.s32.totalorder %s15, 1
    %p75 = scmp.ne.s32.totalorder %s70, %s72
    %p76 = scmp.eq.s32.totalorder %s15, 0
    %p77 = por %p75, %p76
    %p78 = scmp.ne.s32.totalorder %s70, %s72
    %p79 = scmp.eq.s32.totalorder %s20, 1
    %p80 = por %p78, %p79
    %p81 = scmp.ne.s32.totalorder %s72, %s73
    %p82 = scmp.eq.s32.totalorder %s20, 0
    %p83 = por %p81, %p82
    %p84 = scmp.ne.s32.totalorder %s72, %s73
    %p85 = scmp.eq.s32.totalorder %s21, 1
    %p86 = por %p84, %p85
    %p88 = scmp.ne.s32.totalorder %s73, %s87
    %p89 = scmp.eq.s32.totalorder %s21, 0
    %p90 = por %p88, %p89
    %s92 = sadd.s32 %s91, 1
    %p95 = scmp.eq.s32.totalorder %s15, 1
    %p96 = scmp.ne.s32.totalorder %s91, %s93
    %p97 = scmp.eq.s32.totalorder %s15, 0
    %p98 = por %p96, %p97
    %p99 = scmp.ne.s32.totalorder %s91, %s93
    %p100 = scmp.eq.s32.totalorder %s20, 1
    %p101 = por %p99, %p100
    %p102 = scmp.ne.s32.totalorder %s93, %s94
    %p103 = scmp.eq.s32.totalorder %s20, 0
    %p104 = por %p102, %p103
    %p105 = scmp.ne.s32.totalorder %s93, %s94
    %p106 = scmp.eq.s32.totalorder %s21, 1
    %p107 = por %p105, %p106
    %p109 = scmp.ne.s32.totalorder %s94, %s108
    %p110 = scmp.eq.s32.totalorder %s21, 0
    %p111 = por %p109, %p110
    %s113 = sadd.s32 %s112, 1
    %p116 = scmp.eq.s32.totalorder %s15, 1
    %p117 = scmp.ne.s32.totalorder %s112, %s114
    %p118 = scmp.eq.s32.totalorder %s15, 0
    %p119 = por %p117, %p118
    %p120 = scmp.ne.s32.totalorder %s112, %s114
    %p121 = scmp.eq.s32.totalorder %s20, 1
    %p122 = por %p120, %p121
    %p123 = scmp.ne.s32.totalorder %s114, %s115
    %p124 = scmp.eq.s32.totalorder %s20, 0
    %p125 = por %p123, %p124
    %p126 = scmp.ne.s32.totalorder %s114, %s115
    %p127 = scmp.eq.s32.totalorder %s21, 1
    %p128 = por %p126, %p127
    %p130 = scmp.ne.s32.totalorder %s115, %s129
    %p131 = scmp.eq.s32.totalorder %s21, 0
    %p132 = por %p130, %p131
    %s134 = sadd.s32 %s133, 1
    %p137 = scmp.eq.s32.totalorder %s15, 1
    %p138 = scmp.ne.s32.totalorder %s133, %s135
    %p139 = scmp.eq.s32.totalorder %s15, 0
    %p140 = por %p138, %p139
    %p141 = scmp.ne.s32.totalorder %s133, %s135
    %p142 = scmp.eq.s32.totalorder %s20, 1
    %p143 = por %p141, %p142
    %p144 = scmp.ne.s32.totalorder %s135, %s136
    %p145 = scmp.eq.s32.totalorder %s20, 0
    %p146 = por %p144, %p145
    %p147 = scmp.ne.s32.totalorder %s135, %s136
    %p148 = scmp.eq.s32.totalorder %s21, 1
    %p149 = por %p147, %p148
    %p151 = scmp.ne.s32.totalorder %s136, %s150
    %p152 = scmp.eq.s32.totalorder %s21, 0
    %p153 = por %p151, %p152
    %s155 = sadd.s32 %s154, 1
    %p158 = scmp.eq.s32.totalorder %s15, 1
    %p159 = scmp.ne.s32.totalorder %s154, %s156
    %p160 = scmp.eq.s32.totalorder %s15, 0
    %p161 = por %p159, %p160
    %p162 = scmp.ne.s32.totalorder %s154, %s156
    %p163 = scmp.eq.s32.totalorder %s20, 1
    %p164 = por %p162, %p163
    %p165 = scmp.ne.s32.totalorder %s156, %s157
    %p166 = scmp.eq.s32.totalorder %s20, 0
    %p167 = por %p165, %p166
    %p168 = scmp.ne.s32.totalorder %s156, %s157
    %p169 = scmp.eq.s32.totalorder %s21, 1
    %p170 = por %p168, %p169
    %p172 = scmp.ne.s32.totalorder %s157, %s171
    %p173 = scmp.eq.s32.totalorder %s21, 0
    %p174 = por %p172, %p173
    %s176 = sadd.s32 %s175, 1
    %p179 = scmp.eq.s32.totalorder %s15, 1
    %p180 = scmp.ne.s32.totalorder %s175, %s177
    %p181 = scmp.eq.s32.totalorder %s15, 0
    %p182 = por %p180, %p181
    %p183 = scmp.ne.s32.totalorder %s175, %s177
    %p184 = scmp.eq.s32.totalorder %s20, 1
    %p185 = por %p183, %p184
    %p186 = scmp.ne.s32.totalorder %s177, %s178
    %p187 = scmp.eq.s32.totalorder %s20, 0
    %p188 = por %p186, %p187
    %p189 = scmp.ne.s32.totalorder %s177, %s178
    %p190 = scmp.eq.s32.totalorder %s21, 1
    %p191 = por %p189, %p190
    %p193 = scmp.ne.s32.totalorder %s178, %s192
    %p194 = scmp.eq.s32.totalorder %s21, 0
    %p195 = por %p193, %p194
    %s197 = sadd.s32 %s196, 1
    %p200 = scmp.eq.s32.totalorder %s15, 1
    %p201 = scmp.ne.s32.totalorder %s196, %s198
    %p202 = scmp.eq.s32.totalorder %s15, 0
    %p203 = por %p201, %p202
    %p204 = scmp.ne.s32.totalorder %s196, %s198
    %p205 = scmp.eq.s32.totalorder %s20, 1
    %p206 = por %p204, %p205
    %p207 = scmp.ne.s32.totalorder %s198, %s199
    %p208 = scmp.eq.s32.totalorder %s20, 0
    %p209 = por %p207, %p208
    %p210 = scmp.ne.s32.totalorder %s198, %s199
    %p211 = scmp.eq.s32.totalorder %s21, 1
    %p212 = por %p210, %p211
    %p214 = scmp.ne.s32.totalorder %s199, %s213
    %p215 = scmp.eq.s32.totalorder %s21, 0
    %p216 = por %p214, %p215
    %s217 = ssub.s32 %s15, %s22
    %p218 = scmp.eq.s32.totalorder %s217, 0
    %s220 = sadd.s32 %s219, 1
    %s221 = scalar_select %p218, %s219, %s220
    %p224 = pneg %p218
    %p225 = scmp.eq.s32.totalorder %s15, 1
    %p226 = por %p224, %p225
    %p227 = scmp.ne.s32.totalorder %s219, %s222
    %p228 = scmp.eq.s32.totalorder %s15, 0
    %p229 = por %p227, %p228
    %p230 = scmp.ne.s32.totalorder %s219, %s222
    %p231 = scmp.eq.s32.totalorder %s20, 1
    %p232 = por %p230, %p231
    %p233 = scmp.ne.s32.totalorder %s222, %s223
    %p234 = scmp.eq.s32.totalorder %s20, 0
    %p235 = por %p233, %p234
    %p236 = scmp.ne.s32.totalorder %s222, %s223
    %p237 = scmp.eq.s32.totalorder %s21, 1
    %p238 = por %p236, %p237
    %p240 = scmp.ne.s32.totalorder %s223, %s239
    %p241 = scmp.eq.s32.totalorder %s21, 0
    %p242 = por %p240, %p241
    %p243 = scmp.le.s32.totalorder 1, %s15
    %p244 = scmp.lt.s32.totalorder %s15, 3
    %p245 = pnand %p243, %p244
    %p246 = pneg %p245
    // Predicated region
    $region9: #{clip_forward.16} parent=5 // pred_check
      _
    $region10: #{clip_forward.16} parent=5 // pred_check_branch
      %248 = sbr.rel (%p245) target = $region12
    $region11: #{clip_forward.16} parent=5 // pred_region
      %s249 = ssub.s32 %s15, 1
      // Predicated region
      $region13: #{clip_forward.16} parent=11 // pred_check
        %p250 = pneg %p62
      $region14: #{clip_forward.16} parent=11 // pred_check_branch
        %252 = sbr.rel (%p250) target = $region16
      $region15: #{clip_forward.16} parent=11 // pred_region
        _
      $region16: #{clip_forward.16} parent=11 // pred_fallthru
        _
      // Predicated region
      $region17: #{clip_forward.16} parent=11 // pred_check
        %p253 = pneg %p83
      $region18: #{clip_forward.16} parent=11 // pred_check_branch
        %255 = sbr.rel (%p253) target = $region20
      $region19: #{clip_forward.16} parent=11 // pred_region
        _
      $region20: #{clip_forward.16} parent=11 // pred_fallthru
        _
      // Predicated region
      $region21: #{clip_forward.16} parent=11 // pred_check
        %p256 = pneg %p104
      $region22: #{clip_forward.16} parent=11 // pred_check_branch
        %258 = sbr.rel (%p256) target = $region24
      $region23: #{clip_forward.16} parent=11 // pred_region
        _
      $region24: #{clip_forward.16} parent=11 // pred_fallthru
        _
      // Predicated region
      $region25: #{clip_forward.16} parent=11 // pred_check
        %p259 = pneg %p125
      $region26: #{clip_forward.16} parent=11 // pred_check_branch
        %261 = sbr.rel (%p259) target = $region28
      $region27: #{clip_forward.16} parent=11 // pred_region
        _
      $region28: #{clip_forward.16} parent=11 // pred_fallthru
        _
      // Predicated region
      $region29: #{clip_forward.16} parent=11 // pred_check
        %p262 = pneg %p146
      $region30: #{clip_forward.16} parent=11 // pred_check_branch
        %264 = sbr.rel (%p262) target = $region32
      $region31: #{clip_forward.16} parent=11 // pred_region
        _
      $region32: #{clip_forward.16} parent=11 // pred_fallthru
        _
      // Predicated region
      $region33: #{clip_forward.16} parent=11 // pred_check
        %p265 = pneg %p167
      $region34: #{clip_forward.16} parent=11 // pred_check_branch
        %267 = sbr.rel (%p265) target = $region36
      $region35: #{clip_forward.16} parent=11 // pred_region
        _
      $region36: #{clip_forward.16} parent=11 // pred_fallthru
        _
      // Predicated region
      $region37: #{clip_forward.16} parent=11 // pred_check
        %p268 = pneg %p188
      $region38: #{clip_forward.16} parent=11 // pred_check_branch
        %270 = sbr.rel (%p268) target = $region40
      $region39: #{clip_forward.16} parent=11 // pred_region
        _
      $region40: #{clip_forward.16} parent=11 // pred_fallthru
        _
      // Predicated region
      $region41: #{clip_forward.16} parent=11 // pred_check
        %p271 = pneg %p209
      $region42: #{clip_forward.16} parent=11 // pred_check_branch
        %273 = sbr.rel (%p271) target = $region44
      $region43: #{clip_forward.16} parent=11 // pred_region
        _
      $region44: #{clip_forward.16} parent=11 // pred_fallthru
        _
    $region12: #{clip_forward.16} parent=5 // pred_fallthru
      _
    %p274 = scmp.lt.s32.totalorder %s15, 2
    // Predicated region
    $region45: #{clip_forward.16} parent=5 // pred_check
      %p275 = pneg %p274
    $region46: #{clip_forward.16} parent=5 // pred_check_branch
      %277 = sbr.rel (%p275) target = $region48
    $region47: #{clip_forward.16} parent=5 // pred_region
      // Predicated region
      $region49: #{clip_forward.16} parent=47 // pred_check
        %p278 = pneg %p35
      $region50: #{clip_forward.16} parent=47 // pred_check_branch
        %280 = sbr.rel (%p278) target = $region52
      $region51: #{clip_forward.16} parent=47 // pred_region
        %p281 = scmp.lt.s32.totalorder %s15, 1
        %s282 = scalar_select %p281, %s15, 1
        %s283 = smul.addr %s282, 8
        %s284 = scalar_lea.vmem %s0, %s283
      $region52: #{clip_forward.16} parent=47 // pred_fallthru
        _
    $region48: #{clip_forward.16} parent=5 // pred_fallthru
      _
    %p285 = scmp.le.s32.totalorder 1, %s15
    %p286 = scmp.lt.s32.totalorder %s15, 3
    %p287 = pnand %p285, %p286
    %p288 = pneg %p287
    // Predicated region
    $region53: #{clip_forward.16} parent=5 // pred_check
      _
    $region54: #{clip_forward.16} parent=5 // pred_check_branch
      %290 = sbr.rel (%p287) target = $region56
    $region55: #{clip_forward.16} parent=5 // pred_region
      %s291 = ssub.s32 %s15, 1
      %p292 = scmp.lt.s32.totalorder %s20, 1
      %s293 = scalar_select %p292, %s20, 1
      %s294 = smul.addr %s293, 8
      %s295 = scalar_lea.vmem %s0, %s294
      %p296 = pneg %p41
      %p297 = pneg %p38
      %p298 = pneg %p62
      %p299 = pneg %p59
      %p300 = pneg %p83
      %p301 = pneg %p80
      %p302 = pneg %p104
      %p303 = pneg %p101
      %p304 = pneg %p125
      %p305 = pneg %p122
      %p306 = pneg %p146
      %p307 = pneg %p143
      %p308 = pneg %p167
      %p309 = pneg %p164
      %p310 = pneg %p188
      %p311 = pneg %p185
      %p312 = pneg %p209
      %p313 = pneg %p206
      %p314 = pneg %p235
      %p315 = pneg %p232
      %p316 = scmp.lt.s32.totalorder %s20, 1
      %s317 = scalar_select %p316, %s20, 1
      %s318 = smul.addr %s317, 8
      %s319 = scalar_lea.vmem %s9, %s318
      %p320 = scmp.lt.s32.totalorder %s20, 1
      %s321 = scalar_select %p320, %s20, 1
      %s322 = smul.addr %s321, 8
      %s323 = scalar_lea.vmem %s0, %s322
      %p324 = scmp.lt.s32.totalorder %s20, 1
      %s325 = scalar_select %p324, %s20, 1
      %s326 = smul.addr %s325, 8
      %s327 = scalar_lea.vmem %s9, %s326
      %v329 = vld [vmem:[%s323] sm:$0xff]
      %vm330 = vcmask 523264
      %v331 = vsel %vm330, %v329, 0.0
      %332 = vadd.xlane.f32.xlu0 %v331
      %v333 = vpop.xlane.xlu0 %332
      %v334 = vrcp.pop 64.0
      %v335 = vmul.f32 64.0, %v334
      %v336 = vsub.f32 1.0, %v335
      %v337 = vmul.f32 %v334, %v336
      %v338 = vadd.f32 %v334, %v337
      %vm339 = vweird.f32 %v334
      %v340 = vsel %vm339, %v334, %v338
      %v341 = vmul.f32 %v333, %v340
      %v342 = vsub.f32 %v329, %v341
      %v343 = vmul.f32 %v342, %v342
      %v344 = vsel %vm330, %v343, 0.0
      %345 = vadd.xlane.f32.xlu0 %v344
      %v346 = vpop.xlane.xlu0 %345
      %v347 = vmul.f32 %v346, %v340
      %v348 = vadd.f32 %v347, 1e-05
      %v349 = vrsqrt.pop %v348
      %v350 = vmul.f32 %v349, %v348
      %v351 = vmul.f32 %v350, %v349
      %v352 = vmul.f32 0.5, %v351
      %v353 = vsub.f32 1.5, %v352
      %v354 = vmul.f32 %v349, %v353
      %vm355 = vweird.f32 %v348
      %vm356 = vweird.f32 %v349
      %vm357 = vmor %vm355, %vm356
      %v358 = vsel %vm357, %v349, %v354
      %v359 = vmul.f32 %v342, %v358
      %v360 = vld [vmem:[%s3] sm:$0x1]
      %v362 = vperm.slane %v360, 0
      %v364 = vmul.f32 %v359, %v362
      %v365 = vld [vmem:[%s4] sm:$0x1]
      %v367 = vperm.slane %v365, 0
      %v369 = vadd.f32 %v364, %v367
      %v370 = vpack.c.bf16 %v369, %v369
      %v371 = vld [vmem:[%s5] sm:$0xf]
      %v372 = vld [vmem:[%s5 + $0x4] sm:$0xf]
      %v373 = vld [vmem:[%s5 + $0x8] sm:$0xf]
      %v374 = vld [vmem:[%s5 + $0xc] sm:$0xf]
      %v375 = vld [vmem:[%s5 + $0x10] sm:$0xf]
      %v376 = vld [vmem:[%s5 + $0x14] sm:$0xf]
      %v377 = vld [vmem:[%s5 + $0x18] sm:$0xf]
      %v378 = vld [vmem:[%s5 + $0x1c] sm:$0xf]
      %v379 = vld [vmem:[%s5 + $0x20] sm:$0xf]
      %v380 = vld [vmem:[%s5 + $0x24] sm:$0xf]
      %v381 = vld [vmem:[%s5 + $0x28] sm:$0xf]
      %v382 = vld [vmem:[%s5 + $0x2c] sm:$0xf]
      %v383 = vld [vmem:[%s5 + $0x30] sm:$0xf]
      %v384 = vld [vmem:[%s5 + $0x34] sm:$0xf]
      %v385 = vld [vmem:[%s5 + $0x38] sm:$0xf]
      %v386 = vld [vmem:[%s5 + $0x3c] sm:$0xf]
      %v387 = vld [vmem:[%s6] sm:$0x1]
      %v388 = vld [vmem:[%s6 + $0x1] sm:$0x1]
      %v391 = vperm.slane %v387, 0
      %v392 = vperm.slane %v388, 0
      %v403 = vunpack.c.l.b16 %v371
      %v404 = vunpack.c.l.b16 %v372
      %v405 = vunpack.c.l.b16 %v373
      %v406 = vunpack.c.l.b16 %v374
      %v407 = vunpack.c.l.b16 %v375
      %v408 = vunpack.c.l.b16 %v376
      %v409 = vunpack.c.l.b16 %v377
      %v410 = vunpack.c.l.b16 %v378
      %v411 = vpack.c.b16 %v404, %v403
      %v412 = vpack.c.b16 %v406, %v405
      %v413 = vpack.c.b16 %v408, %v407
      %v414 = vpack.c.b16 %v410, %v409
      %v420 = vsel %vm330, %v370, 0
      %422 = vmatpush.bf16.msra.mxu0 0
      %423 = vmatpush.bf16.msra.mxu0 0
      %424 = vmatpush.bf16.msra.mxu0 0
      %425 = vmatpush.bf16.msra.mxu0 0
      %426 = vmatpush.bf16.msra.mxu0 %v414
      %427 = vmatpush.bf16.msra.mxu0 %v413
      %428 = vmatpush.bf16.msra.mxu0 %v412
      %429 = vmatpush.bf16.msra.mxu0 %v411
      %430 = vmatmul.bf16.gmra.mxu0 %v420
      %v431 = vpop.f32.mrf.mxu0
      %v432 = vadd.f32 %v391, %v431
      %v433 = vpop.f32.mrf.mxu0
      %434 = vdwg.mxu0
      %v443 = vunpack.c.l.b16 %v379
      %v444 = vunpack.c.l.b16 %v380
      %v445 = vunpack.c.l.b16 %v381
      %v446 = vunpack.c.l.b16 %v382
      %v447 = vunpack.c.l.b16 %v383
      %v448 = vunpack.c.l.b16 %v384
      %v449 = vunpack.c.l.b16 %v385
      %v450 = vunpack.c.l.b16 %v386
      %v451 = vpack.c.b16 %v444, %v443
      %v452 = vpack.c.b16 %v446, %v445
      %v453 = vpack.c.b16 %v448, %v447
      %v454 = vpack.c.b16 %v450, %v449
      %459 = vmatpush.bf16.msra.mxu0 0
      %460 = vmatpush.bf16.msra.mxu0 0
      %461 = vmatpush.bf16.msra.mxu0 0
      %462 = vmatpush.bf16.msra.mxu0 0
      %463 = vmatpush.bf16.msra.mxu0 %v454
      %464 = vmatpush.bf16.msra.mxu0 %v453
      %465 = vmatpush.bf16.msra.mxu0 %v452
      %466 = vmatpush.bf16.msra.mxu0 %v451
      %467 = vmatmul.bf16.gmra.mxu0 %v420
      %v468 = vpop.f32.mrf.mxu0
      %v469 = vadd.f32 %v392, %v468
      %v470 = vpop.f32.mrf.mxu0
      %471 = vdwg.mxu0
      %v472 = vpack.c.bf16 %v432, %v432
      %v473 = vpack.c.bf16 %v469, %v469
      %476 = vrot.lane.b32.xlu0 %v472, 96
      %v477 = vpop.permute.xlu0 %476
      %478 = vrot.lane.b32.xlu0 %v473, 96
      %v479 = vpop.permute.xlu0 %478
      %vm482 = vcmask 257024
      %483 = vst.msk [vmem:[#allocation2] sm:$0xf] %vm482, %v477
      %484 = vst.msk [vmem:[#allocation2 + $0x4] sm:$0xf] %vm482, %v479
      %485 = vrot.lane.b32.xlu0 %v472, 64
      %v486 = vpop.permute.xlu0 %485
      %487 = vrot.lane.b32.xlu0 %v473, 64
      %v488 = vpop.permute.xlu0 %487
      %491 = vst.msk [vmem:[#allocation3] sm:$0xf] %vm482, %v486
      %492 = vst.msk [vmem:[#allocation3 + $0x4] sm:$0xf] %vm482, %v488
      %v493 = vlaneseq
      %v494 = vshrl.u32 %v493, 7
      %v495 = vlaneseq
      %v496 = vand.u32 %v495, 127
      %v497 = vld [vmem:[#allocation2] sm:$0xf]
      %v498 = vld [vmem:[#allocation2 + $0x4] sm:$0xf]
      %v499 = vld [vmem:[#allocation3] sm:$0xf]
      %v500 = vld [vmem:[#allocation3 + $0x4] sm:$0xf]
      %vm501 = vcmask 261120
      %v503 = vsel %vm501, %v472, 0
      %v506 = vsel %vm501, %v497, 0
      %508 = vmatpush.bf16.xpose.msra.mxu0 0
      %509 = vmatpush.bf16.xpose.msra.mxu0 0
      %510 = vmatpush.bf16.xpose.msra.mxu0 0
      %511 = vmatpush.bf16.xpose.msra.mxu0 0
      %512 = vmatpush.bf16.xpose.msra.mxu0 0
      %513 = vmatpush.bf16.xpose.msra.mxu0 0
      %514 = vmatpush.bf16.xpose.msra.mxu0 0
      %515 = vmatpush.bf16.xpose.msra.mxu0 %v506
      %516 = vmatmul.bf16.gmra.mxu0 %v503
      %v517 = vpop.f32.mrf.mxu0
      %v518 = vadd.f32 0.0, %v517
      %v519 = vpop.f32.mrf.mxu0
      %520 = vdwg.mxu0
      %v522 = vsel %vm501, %v473, 0
      %v525 = vsel %vm501, %v498, 0
      %527 = vmatpush.bf16.xpose.msra.mxu0 0
      %528 = vmatpush.bf16.xpose.msra.mxu0 0
      %529 = vmatpush.bf16.xpose.msra.mxu0 0
      %530 = vmatpush.bf16.xpose.msra.mxu0 0
      %531 = vmatpush.bf16.xpose.msra.mxu0 0
      %532 = vmatpush.bf16.xpose.msra.mxu0 0
      %533 = vmatpush.bf16.xpose.msra.mxu0 0
      %534 = vmatpush.bf16.xpose.msra.mxu0 %v525
      %535 = vmatmul.bf16.gmra.mxu0 %v522
      %v536 = vpop.f32.mrf.mxu0
      %v537 = vadd.f32 0.0, %v536
      %v538 = vpop.f32.mrf.mxu0
      %539 = vdwg.mxu0
      %v540 = vstv 0
      %v541 = vadd.s32 %v496, %v540
      %vm542 = vcmp.gt.s32.totalorder %v541, %v494
      %v543 = vsel %vm542, 1, 0
      %vm544 = vcmp.eq.s32.totalorder %v543, 1
      %v545 = vsel %vm544, -1e+30, %v518
      %v546 = vsel %vm544, -1e+30, %v537
      %vm547 = vcmask 64512
      %v548 = vsel %vm547, %v545, -inf
      %549 = vmax.xlane.f32.xlu0 %v548
      %v550 = vpop.xlane.xlu0 %549
      %v551 = vsel %vm547, %v546, -inf
      %552 = vmax.xlane.f32.xlu0 %v551
      %v553 = vpop.xlane.xlu0 %552
      %v554 = vsub.f32 -inf, %v550
      %v555 = vsub.f32 -inf, %v553
      %v556 = vmul.f32 %v554, 1.442695
      %v557 = vpow.pop %v556
      %v558 = vmul.f32 %v555, 1.442695
      %v559 = vpow.pop %v558
      %v560 = vsub.f32 %v545, %v550
      %v561 = vsub.f32 %v546, %v553
      %v562 = vmul.f32 %v560, 1.442695
      %v563 = vpow.pop %v562
      %v564 = vmul.f32 %v561, 1.442695
      %v565 = vpow.pop %v564
      %v566 = vmul.f32 %v557, 0.0
      %v567 = vmul.f32 %v559, 0.0
      %v568 = vsel %vm547, %v563, 0.0
      %569 = vadd.xlane.f32.xlu0 %v568
      %v570 = vpop.xlane.xlu0 %569
      %v571 = vsel %vm547, %v565, 0.0
      %572 = vadd.xlane.f32.xlu0 %v571
      %v573 = vpop.xlane.xlu0 %572
      %v574 = vadd.f32 %v566, %v570
      %v575 = vadd.f32 %v567, %v573
      %v576 = vpack.c.bf16 %v563, %v563
      %v577 = vpack.c.bf16 %v565, %v565
      %v579 = vsel %vm547, %v576, 0
      %vm581 = vcmask 1043456
      %v583 = vsel %vm581, %v499, 0
      %585 = vmatpush.bf16.msra.mxu0 0
      %586 = vmatpush.bf16.msra.mxu0 0
      %587 = vmatpush.bf16.msra.mxu0 0
      %588 = vmatpush.bf16.msra.mxu0 0
      %589 = vmatpush.bf16.msra.mxu0 0
      %590 = vmatpush.bf16.msra.mxu0 0
      %591 = vmatpush.bf16.msra.mxu0 0
      %592 = vmatpush.bf16.msra.mxu0 %v583
      %593 = vmatmul.bf16.gmra.mxu0 %v579
      %v594 = vpop.f32.mrf.mxu0
      %v595 = vadd.f32 0.0, %v594
      %v596 = vpop.f32.mrf.mxu0
      %597 = vdwg.mxu0
      %v599 = vsel %vm547, %v577, 0
      %v602 = vsel %vm581, %v500, 0
      %604 = vmatpush.bf16.msra.mxu0 0
      %605 = vmatpush.bf16.msra.mxu0 0
      %606 = vmatpush.bf16.msra.mxu0 0
      %607 = vmatpush.bf16.msra.mxu0 0
      %608 = vmatpush.bf16.msra.mxu0 0
      %609 = vmatpush.bf16.msra.mxu0 0
      %610 = vmatpush.bf16.msra.mxu0 0
      %611 = vmatpush.bf16.msra.mxu0 %v602
      %612 = vmatmul.bf16.gmra.mxu0 %v599
      %v613 = vpop.f32.mrf.mxu0
      %v614 = vadd.f32 0.0, %v613
      %v615 = vpop.f32.mrf.mxu0
      %616 = vdwg.mxu0
      %v617 = vadd.f32 %v566, %v595
      %v618 = vadd.f32 %v567, %v614
      %v619 = vrcp.pop %v574
      %v620 = vrcp.pop %v575
      %v621 = vmul.f32 %v617, %v619
      %v622 = vmul.f32 %v618, %v620
      %v623 = vpack.c.bf16 %v621, %v621
      %v624 = vpack.c.bf16 %v622, %v622
      %625 = vst.msk [vmem:[#allocation4] sm:$0xf] %vm482, %v623
      %627 = vrot.lane.b32.xlu0 %v624, 32
      %v628 = vpop.permute.xlu0 %627
      %vm630 = vcmask 519424
      %631 = vst.msk [vmem:[#allocation4] sm:$0xf] %vm630, %v628
      %v632 = vld [vmem:[#allocation4] sm:$0xf]
      %v633 = vld [vmem:[%s7] sm:$0xf]
      %v634 = vld [vmem:[%s7 + $0x4] sm:$0xf]
      %v635 = vld [vmem:[%s7 + $0x8] sm:$0xf]
      %v636 = vld [vmem:[%s7 + $0xc] sm:$0xf]
      %v637 = vld [vmem:[%s7 + $0x10] sm:$0xf]
      %v638 = vld [vmem:[%s7 + $0x14] sm:$0xf]
      %v639 = vld [vmem:[%s7 + $0x18] sm:$0xf]
      %v640 = vld [vmem:[%s7 + $0x1c] sm:$0xf]
      %v641 = vld [vmem:[%s8] sm:$0x1]
      %v643 = vperm.slane %v641, 0
      %v653 = vunpack.c.l.b16 %v633
      %v654 = vunpack.c.l.b16 %v634
      %v655 = vunpack.c.l.b16 %v635
      %v656 = vunpack.c.l.b16 %v636
      %v657 = vunpack.c.l.b16 %v637
      %v658 = vunpack.c.l.b16 %v638
      %v659 = vunpack.c.l.b16 %v639
      %v660 = vunpack.c.l.b16 %v640
      %v661 = vpack.c.b16 %v654, %v653
      %v662 = vpack.c.b16 %v656, %v655
      %v663 = vpack.c.b16 %v658, %v657
      %v664 = vpack.c.b16 %v660, %v659
      %v670 = vsel %vm330, %v632, 0
      %672 = vmatpush.bf16.msra.mxu0 0
      %673 = vmatpush.bf16.msra.mxu0 0
      %674 = vmatpush.bf16.msra.mxu0 0
      %675 = vmatpush.bf16.msra.mxu0 0
      %676 = vmatpush.bf16.msra.mxu0 %v664
      %677 = vmatpush.bf16.msra.mxu0 %v663
      %678 = vmatpush.bf16.msra.mxu0 %v662
      %679 = vmatpush.bf16.msra.mxu0 %v661
      %680 = vmatmul.bf16.gmra.mxu0 %v670
      %v681 = vpop.f32.mrf.mxu0
      %v682 = vadd.f32 %v643, %v681
      %v683 = vpop.f32.mrf.mxu0
      %684 = vdwg.mxu0
      %v685 = vadd.f32 %v329, %v682
      %686 = vst.msk [vmem:[%s327] sm:$0xff] %vm330, %v685
      %p687 = scmp.lt.s32.totalorder %s20, 1
      %s688 = scalar_select %p687, %s20, 1
      %s689 = smul.addr %s688, 8
      %s690 = scalar_lea.vmem %s9, %s689
      // Predicated region
      $region57: #{clip_forward.16} parent=55 // pred_check
        %p691 = pneg %p232
      $region58: #{clip_forward.16} parent=55 // pred_check_branch
        %693 = sbr.rel (%p691) target = $region60
      $region59: #{clip_forward.16} parent=55 // pred_region
        _
      $region60: #{clip_forward.16} parent=55 // pred_fallthru
        _
    $region56: #{clip_forward.16} parent=5 // pred_fallthru
      _
    %p694 = scmp.le.s32.totalorder 2, %s15
    // Predicated region
    $region61: #{clip_forward.16} parent=5 // pred_check
      %p695 = pneg %p694
    $region62: #{clip_forward.16} parent=5 // pred_check_branch
      %697 = sbr.rel (%p695) target = $region64
    $region63: #{clip_forward.16} parent=5 // pred_region
      %s698 = ssub.s32 %s15, 2
      // Predicated region
      $region65: #{clip_forward.16} parent=63 // pred_check
        %p699 = pneg %p238
      $region66: #{clip_forward.16} parent=63 // pred_check_branch
        %701 = sbr.rel (%p699) target = $region68
      $region67: #{clip_forward.16} parent=63 // pred_region
        %p702 = scmp.lt.s32.totalorder %s21, 1
        %s703 = scalar_select %p702, %s21, 1
        %s704 = smul.addr %s703, 8
        %s705 = scalar_lea.vmem %s9, %s704
      $region68: #{clip_forward.16} parent=63 // pred_fallthru
        _
    $region64: #{clip_forward.16} parent=5 // pred_fallthru
      _
  $region6: #{clip_forward.16} parent=0 // loop_footer
    %s19 = sadd.s32 1, %s15
  $region7: #{clip_forward.16} parent=0 // loop_footer_branch
    %14 = sbr.rel target = $region3
  $region8: #{clip_forward.16} parent=0 // loop_exit
    _

// kernel: clip_forward.11
$region0: #{clip_forward.11}
  #allocation0 [shape = 'u32[]', space=smem, size = 0x4, offset = 0x4, fixed_abs, tag = 'smem constant byte address 0x4 - core index']
  #allocation1 [shape = 'u32[72,128]{1,0:T(1,128)}', space=vmem, size = 0x9000, scoped, tag = 'internal scratch']
  #allocation2 [shape = 'bf16[1,8,64]{2,1,0:T(8,128)(2,1)}', space=vmem, size = 0x800, scoped, tag = 'scratch operand']
  #allocation3 [shape = 'bf16[1,8,64]{2,1,0:T(8,128)(2,1)}', space=vmem, size = 0x800, scoped, tag = 'scratch operand']
  #allocation4 [shape = 'bf16[8,64]{1,0:T(8,128)(2,1)}', space=vmem, size = 0x800, scoped, tag = 'scratch operand']
  %s0 = inlined_call_operand.vmem [shape: f32[2,8,64], index: 0, kind: input, shape index: {}]
  %s1 = inlined_call_operand.vmem [shape: f32[1,64], index: 1, kind: input, shape index: {}]
  %s2 = inlined_call_operand.vmem [shape: f32[1,64], index: 2, kind: input, shape index: {}]
  %s3 = inlined_call_operand.vmem [shape: f32[1,64], index: 3, kind: input, shape index: {}]
  %s4 = inlined_call_operand.vmem [shape: f32[1,64], index: 4, kind: input, shape index: {}]
  %s5 = inlined_call_operand.vmem [shape: bf16[1,64,192], index: 5, kind: input, shape index: {}]
  %s6 = inlined_call_operand.vmem [shape: f32[1,1,192], index: 6, kind: input, shape index: {}]
  %s7 = inlined_call_operand.vmem [shape: bf16[64,64], index: 7, kind: input, shape index: {}]
  %s8 = inlined_call_operand.vmem [shape: f32[1,64], index: 8, kind: input, shape index: {}]
  %s9 = inlined_call_operand.vmem [shape: f32[2,8,64], index: 9, kind: output, shape index: {}]
  %s10 = sld [smem:[#allocation0]]
  $region69: #{clip_forward.11} parent=0
    _
  %s12 = ssub.s32 1, %s10
  %s13 = scalar_select 0, %s12, %s10
  loop: start=0, step=1, limit=4
  $region2: #{clip_forward.11} parent=0 // loop_pre_header
    _
  $region3: #{clip_forward.11} parent=0 // loop_header
    %s15 = sphi 0, %s19
    %p16 = scmp.ge.s32.totalorder %s15, 4
    %s25 = sphi 0, %s27
    %s28 = sphi 0, %s25
    %s29 = sphi 0, %s28
    %s45 = sphi 0, %s29
    %s49 = sphi 0, %s49
    %s51 = sphi 0, %s49
    %s52 = sphi 0, %s51
    %s66 = sphi 0, %s52
    %s70 = sphi 0, %s70
    %s72 = sphi 0, %s70
    %s73 = sphi 0, %s72
    %s87 = sphi 0, %s73
    %s91 = sphi 0, %s91
    %s93 = sphi 0, %s91
    %s94 = sphi 0, %s93
    %s108 = sphi 0, %s94
    %s112 = sphi 0, %s112
    %s114 = sphi 0, %s112
    %s115 = sphi 0, %s114
    %s129 = sphi 0, %s115
    %s133 = sphi 0, %s133
    %s135 = sphi 0, %s133
    %s136 = sphi 0, %s135
    %s150 = sphi 0, %s136
    %s154 = sphi 0, %s154
    %s156 = sphi 0, %s154
    %s157 = sphi 0, %s156
    %s171 = sphi 0, %s157
    %s175 = sphi 0, %s175
    %s177 = sphi 0, %s175
    %s178 = sphi 0, %s177
    %s192 = sphi 0, %s178
    %s196 = sphi 0, %s196
    %s198 = sphi 0, %s196
    %s199 = sphi 0, %s198
    %s213 = sphi 0, %s199
    %s219 = sphi 0, %s221
    %s222 = sphi 0, %s219
    %s223 = sphi 0, %s222
    %s239 = sphi 0, %s223
  $region4: #{clip_forward.11} parent=0 // loop_header_branch
    %18 = sbr.rel (%p16) target = $region8
  $region5: #{clip_forward.11} parent=0 // loop_body
    %s20 = ssub.s32 %s15, 1
    %s21 = ssub.s32 %s15, 2
    %s22 = sadd.s32 %s15, 1
    %s23 = ssub.s32 %s15, %s22
    %p24 = scmp.eq.s32.totalorder %s23, 0
    %s26 = sadd.s32 %s25, 1
    %s27 = scalar_select %p24, %s25, %s26
    %p30 = pneg %p24
    %p31 = scmp.eq.s32.totalorder %s15, 1
    %p32 = por %p30, %p31
    %p33 = scmp.ne.s32.totalorder %s25, %s28
    %p34 = scmp.eq.s32.totalorder %s15, 0
    %p35 = por %p33, %p34
    %p36 = scmp.ne.s32.totalorder %s25, %s28
    %p37 = scmp.eq.s32.totalorder %s20, 1
    %p38 = por %p36, %p37
    %p39 = scmp.ne.s32.totalorder %s28, %s29
    %p40 = scmp.eq.s32.totalorder %s20, 0
    %p41 = por %p39, %p40
    %p42 = scmp.ne.s32.totalorder %s28, %s29
    %p43 = scmp.eq.s32.totalorder %s21, 1
    %p44 = por %p42, %p43
    %p46 = scmp.ne.s32.totalorder %s29, %s45
    %p47 = scmp.eq.s32.totalorder %s21, 0
    %p48 = por %p46, %p47
    %s50 = sadd.s32 %s49, 1
    %p53 = scmp.eq.s32.totalorder %s15, 1
    %p54 = scmp.ne.s32.totalorder %s49, %s51
    %p55 = scmp.eq.s32.totalorder %s15, 0
    %p56 = por %p54, %p55
    %p57 = scmp.ne.s32.totalorder %s49, %s51
    %p58 = scmp.eq.s32.totalorder %s20, 1
    %p59 = por %p57, %p58
    %p60 = scmp.ne.s32.totalorder %s51, %s52
    %p61 = scmp.eq.s32.totalorder %s20, 0
    %p62 = por %p60, %p61
    %p63 = scmp.ne.s32.totalorder %s51, %s52
    %p64 = scmp.eq.s32.totalorder %s21, 1
    %p65 = por %p63, %p64
    %p67 = scmp.ne.s32.totalorder %s52, %s66
    %p68 = scmp.eq.s32.totalorder %s21, 0
    %p69 = por %p67, %p68
    %s71 = sadd.s32 %s70, 1
    %p74 = scmp.eq.s32.totalorder %s15, 1
    %p75 = scmp.ne.s32.totalorder %s70, %s72
    %p76 = scmp.eq.s32.totalorder %s15, 0
    %p77 = por %p75, %p76
    %p78 = scmp.ne.s32.totalorder %s70, %s72
    %p79 = scmp.eq.s32.totalorder %s20, 1
    %p80 = por %p78, %p79
    %p81 = scmp.ne.s32.totalorder %s72, %s73
    %p82 = scmp.eq.s32.totalorder %s20, 0
    %p83 = por %p81, %p82
    %p84 = scmp.ne.s32.totalorder %s72, %s73
    %p85 = scmp.eq.s32.totalorder %s21, 1
    %p86 = por %p84, %p85
    %p88 = scmp.ne.s32.totalorder %s73, %s87
    %p89 = scmp.eq.s32.totalorder %s21, 0
    %p90 = por %p88, %p89
    %s92 = sadd.s32 %s91, 1
    %p95 = scmp.eq.s32.totalorder %s15, 1
    %p96 = scmp.ne.s32.totalorder %s91, %s93
    %p97 = scmp.eq.s32.totalorder %s15, 0
    %p98 = por %p96, %p97
    %p99 = scmp.ne.s32.totalorder %s91, %s93
    %p100 = scmp.eq.s32.totalorder %s20, 1
    %p101 = por %p99, %p100
    %p102 = scmp.ne.s32.totalorder %s93, %s94
    %p103 = scmp.eq.s32.totalorder %s20, 0
    %p104 = por %p102, %p103
    %p105 = scmp.ne.s32.totalorder %s93, %s94
    %p106 = scmp.eq.s32.totalorder %s21, 1
    %p107 = por %p105, %p106
    %p109 = scmp.ne.s32.totalorder %s94, %s108
    %p110 = scmp.eq.s32.totalorder %s21, 0
    %p111 = por %p109, %p110
    %s113 = sadd.s32 %s112, 1
    %p116 = scmp.eq.s32.totalorder %s15, 1
    %p117 = scmp.ne.s32.totalorder %s112, %s114
    %p118 = scmp.eq.s32.totalorder %s15, 0
    %p119 = por %p117, %p118
    %p120 = scmp.ne.s32.totalorder %s112, %s114
    %p121 = scmp.eq.s32.totalorder %s20, 1
    %p122 = por %p120, %p121
    %p123 = scmp.ne.s32.totalorder %s114, %s115
    %p124 = scmp.eq.s32.totalorder %s20, 0
    %p125 = por %p123, %p124
    %p126 = scmp.ne.s32.totalorder %s114, %s115
    %p127 = scmp.eq.s32.totalorder %s21, 1
    %p128 = por %p126, %p127
    %p130 = scmp.ne.s32.totalorder %s115, %s129
    %p131 = scmp.eq.s32.totalorder %s21, 0
    %p132 = por %p130, %p131
    %s134 = sadd.s32 %s133, 1
    %p137 = scmp.eq.s32.totalorder %s15, 1
    %p138 = scmp.ne.s32.totalorder %s133, %s135
    %p139 = scmp.eq.s32.totalorder %s15, 0
    %p140 = por %p138, %p139
    %p141 = scmp.ne.s32.totalorder %s133, %s135
    %p142 = scmp.eq.s32.totalorder %s20, 1
    %p143 = por %p141, %p142
    %p144 = scmp.ne.s32.totalorder %s135, %s136
    %p145 = scmp.eq.s32.totalorder %s20, 0
    %p146 = por %p144, %p145
    %p147 = scmp.ne.s32.totalorder %s135, %s136
    %p148 = scmp.eq.s32.totalorder %s21, 1
    %p149 = por %p147, %p148
    %p151 = scmp.ne.s32.totalorder %s136, %s150
    %p152 = scmp.eq.s32.totalorder %s21, 0
    %p153 = por %p151, %p152
    %s155 = sadd.s32 %s154, 1
    %p158 = scmp.eq.s32.totalorder %s15, 1
    %p159 = scmp.ne.s32.totalorder %s154, %s156
    %p160 = scmp.eq.s32.totalorder %s15, 0
    %p161 = por %p159, %p160
    %p162 = scmp.ne.s32.totalorder %s154, %s156
    %p163 = scmp.eq.s32.totalorder %s20, 1
    %p164 = por %p162, %p163
    %p165 = scmp.ne.s32.totalorder %s156, %s157
    %p166 = scmp.eq.s32.totalorder %s20, 0
    %p167 = por %p165, %p166
    %p168 = scmp.ne.s32.totalorder %s156, %s157
    %p169 = scmp.eq.s32.totalorder %s21, 1
    %p170 = por %p168, %p169
    %p172 = scmp.ne.s32.totalorder %s157, %s171
    %p173 = scmp.eq.s32.totalorder %s21, 0
    %p174 = por %p172, %p173
    %s176 = sadd.s32 %s175, 1
    %p179 = scmp.eq.s32.totalorder %s15, 1
    %p180 = scmp.ne.s32.totalorder %s175, %s177
    %p181 = scmp.eq.s32.totalorder %s15, 0
    %p182 = por %p180, %p181
    %p183 = scmp.ne.s32.totalorder %s175, %s177
    %p184 = scmp.eq.s32.totalorder %s20, 1
    %p185 = por %p183, %p184
    %p186 = scmp.ne.s32.totalorder %s177, %s178
    %p187 = scmp.eq.s32.totalorder %s20, 0
    %p188 = por %p186, %p187
    %p189 = scmp.ne.s32.totalorder %s177, %s178
    %p190 = scmp.eq.s32.totalorder %s21, 1
    %p191 = por %p189, %p190
    %p193 = scmp.ne.s32.totalorder %s178, %s192
    %p194 = scmp.eq.s32.totalorder %s21, 0
    %p195 = por %p193, %p194
    %s197 = sadd.s32 %s196, 1
    %p200 = scmp.eq.s32.totalorder %s15, 1
    %p201 = scmp.ne.s32.totalorder %s196, %s198
    %p202 = scmp.eq.s32.totalorder %s15, 0
    %p203 = por %p201, %p202
    %p204 = scmp.ne.s32.totalorder %s196, %s198
    %p205 = scmp.eq.s32.totalorder %s20, 1
    %p206 = por %p204, %p205
    %p207 = scmp.ne.s32.totalorder %s198, %s199
    %p208 = scmp.eq.s32.totalorder %s20, 0
    %p209 = por %p207, %p208
    %p210 = scmp.ne.s32.totalorder %s198, %s199
    %p211 = scmp.eq.s32.totalorder %s21, 1
    %p212 = por %p210, %p211
    %p214 = scmp.ne.s32.totalorder %s199, %s213
    %p215 = scmp.eq.s32.totalorder %s21, 0
    %p216 = por %p214, %p215
    %s217 = ssub.s32 %s15, %s22
    %p218 = scmp.eq.s32.totalorder %s217, 0
    %s220 = sadd.s32 %s219, 1
    %s221 = scalar_select %p218, %s219, %s220
    %p224 = pneg %p218
    %p225 = scmp.eq.s32.totalorder %s15, 1
    %p226 = por %p224, %p225
    %p227 = scmp.ne.s32.totalorder %s219, %s222
    %p228 = scmp.eq.s32.totalorder %s15, 0
    %p229 = por %p227, %p228
    %p230 = scmp.ne.s32.totalorder %s219, %s222
    %p231 = scmp.eq.s32.totalorder %s20, 1
    %p232 = por %p230, %p231
    %p233 = scmp.ne.s32.totalorder %s222, %s223
    %p234 = scmp.eq.s32.totalorder %s20, 0
    %p235 = por %p233, %p234
    %p236 = scmp.ne.s32.totalorder %s222, %s223
    %p237 = scmp.eq.s32.totalorder %s21, 1
    %p238 = por %p236, %p237
    %p240 = scmp.ne.s32.totalorder %s223, %s239
    %p241 = scmp.eq.s32.totalorder %s21, 0
    %p242 = por %p240, %p241
    %p243 = scmp.le.s32.totalorder 1, %s15
    %p244 = scmp.lt.s32.totalorder %s15, 3
    %p245 = pnand %p243, %p244
    %p246 = pneg %p245
    // Predicated region
    $region9: #{clip_forward.11} parent=5 // pred_check
      _
    $region10: #{clip_forward.11} parent=5 // pred_check_branch
      %248 = sbr.rel (%p245) target = $region12
    $region11: #{clip_forward.11} parent=5 // pred_region
      %s249 = ssub.s32 %s15, 1
      // Predicated region
      $region13: #{clip_forward.11} parent=11 // pred_check
        %p250 = pneg %p62
      $region14: #{clip_forward.11} parent=11 // pred_check_branch
        %252 = sbr.rel (%p250) target = $region16
      $region15: #{clip_forward.11} parent=11 // pred_region
        _
      $region16: #{clip_forward.11} parent=11 // pred_fallthru
        _
      // Predicated region
      $region17: #{clip_forward.11} parent=11 // pred_check
        %p253 = pneg %p83
      $region18: #{clip_forward.11} parent=11 // pred_check_branch
        %255 = sbr.rel (%p253) target = $region20
      $region19: #{clip_forward.11} parent=11 // pred_region
        _
      $region20: #{clip_forward.11} parent=11 // pred_fallthru
        _
      // Predicated region
      $region21: #{clip_forward.11} parent=11 // pred_check
        %p256 = pneg %p104
      $region22: #{clip_forward.11} parent=11 // pred_check_branch
        %258 = sbr.rel (%p256) target = $region24
      $region23: #{clip_forward.11} parent=11 // pred_region
        _
      $region24: #{clip_forward.11} parent=11 // pred_fallthru
        _
      // Predicated region
      $region25: #{clip_forward.11} parent=11 // pred_check
        %p259 = pneg %p125
      $region26: #{clip_forward.11} parent=11 // pred_check_branch
        %261 = sbr.rel (%p259) target = $region28
      $region27: #{clip_forward.11} parent=11 // pred_region
        _
      $region28: #{clip_forward.11} parent=11 // pred_fallthru
        _
      // Predicated region
      $region29: #{clip_forward.11} parent=11 // pred_check
        %p262 = pneg %p146
      $region30: #{clip_forward.11} parent=11 // pred_check_branch
        %264 = sbr.rel (%p262) target = $region32
      $region31: #{clip_forward.11} parent=11 // pred_region
        _
      $region32: #{clip_forward.11} parent=11 // pred_fallthru
        _
      // Predicated region
      $region33: #{clip_forward.11} parent=11 // pred_check
        %p265 = pneg %p167
      $region34: #{clip_forward.11} parent=11 // pred_check_branch
        %267 = sbr.rel (%p265) target = $region36
      $region35: #{clip_forward.11} parent=11 // pred_region
        _
      $region36: #{clip_forward.11} parent=11 // pred_fallthru
        _
      // Predicated region
      $region37: #{clip_forward.11} parent=11 // pred_check
        %p268 = pneg %p188
      $region38: #{clip_forward.11} parent=11 // pred_check_branch
        %270 = sbr.rel (%p268) target = $region40
      $region39: #{clip_forward.11} parent=11 // pred_region
        _
      $region40: #{clip_forward.11} parent=11 // pred_fallthru
        _
      // Predicated region
      $region41: #{clip_forward.11} parent=11 // pred_check
        %p271 = pneg %p209
      $region42: #{clip_forward.11} parent=11 // pred_check_branch
        %273 = sbr.rel (%p271) target = $region44
      $region43: #{clip_forward.11} parent=11 // pred_region
        _
      $region44: #{clip_forward.11} parent=11 // pred_fallthru
        _
    $region12: #{clip_forward.11} parent=5 // pred_fallthru
      _
    %p274 = scmp.lt.s32.totalorder %s15, 2
    // Predicated region
    $region45: #{clip_forward.11} parent=5 // pred_check
      %p275 = pneg %p274
    $region46: #{clip_forward.11} parent=5 // pred_check_branch
      %277 = sbr.rel (%p275) target = $region48
    $region47: #{clip_forward.11} parent=5 // pred_region
      // Predicated region
      $region49: #{clip_forward.11} parent=47 // pred_check
        %p278 = pneg %p35
      $region50: #{clip_forward.11} parent=47 // pred_check_branch
        %280 = sbr.rel (%p278) target = $region52
      $region51: #{clip_forward.11} parent=47 // pred_region
        %p281 = scmp.lt.s32.totalorder %s15, 1
        %s282 = scalar_select %p281, %s15, 1
        %s283 = smul.addr %s282, 8
        %s284 = scalar_lea.vmem %s0, %s283
      $region52: #{clip_forward.11} parent=47 // pred_fallthru
        _
    $region48: #{clip_forward.11} parent=5 // pred_fallthru
      _
    %p285 = scmp.le.s32.totalorder 1, %s15
    %p286 = scmp.lt.s32.totalorder %s15, 3
    %p287 = pnand %p285, %p286
    %p288 = pneg %p287
    // Predicated region
    $region53: #{clip_forward.11} parent=5 // pred_check
      _
    $region54: #{clip_forward.11} parent=5 // pred_check_branch
      %290 = sbr.rel (%p287) target = $region56
    $region55: #{clip_forward.11} parent=5 // pred_region
      %s291 = ssub.s32 %s15, 1
      %p292 = scmp.lt.s32.totalorder %s20, 1
      %s293 = scalar_select %p292, %s20, 1
      %s294 = smul.addr %s293, 8
      %s295 = scalar_lea.vmem %s0, %s294
      %p296 = pneg %p41
      %p297 = pneg %p38
      %p298 = pneg %p62
      %p299 = pneg %p59
      %p300 = pneg %p83
      %p301 = pneg %p80
      %p302 = pneg %p104
      %p303 = pneg %p101
      %p304 = pneg %p125
      %p305 = pneg %p122
      %p306 = pneg %p146
      %p307 = pneg %p143
      %p308 = pneg %p167
      %p309 = pneg %p164
      %p310 = pneg %p188
      %p311 = pneg %p185
      %p312 = pneg %p209
      %p313 = pneg %p206
      %p314 = pneg %p235
      %p315 = pneg %p232
      %p316 = scmp.lt.s32.totalorder %s20, 1
      %s317 = scalar_select %p316, %s20, 1
      %s318 = smul.addr %s317, 8
      %s319 = scalar_lea.vmem %s9, %s318
      %p320 = scmp.lt.s32.totalorder %s20, 1
      %s321 = scalar_select %p320, %s20, 1
      %s322 = smul.addr %s321, 8
      %s323 = scalar_lea.vmem %s0, %s322
      %p324 = scmp.lt.s32.totalorder %s20, 1
      %s325 = scalar_select %p324, %s20, 1
      %s326 = smul.addr %s325, 8
      %s327 = scalar_lea.vmem %s9, %s326
      %v329 = vld [vmem:[%s323] sm:$0xff]
      %vm330 = vcmask 523264
      %v331 = vsel %vm330, %v329, 0.0
      %332 = vadd.xlane.f32.xlu0 %v331
      %v333 = vpop.xlane.xlu0 %332
      %v334 = vrcp.pop 64.0
      %v335 = vmul.f32 64.0, %v334
      %v336 = vsub.f32 1.0, %v335
      %v337 = vmul.f32 %v334, %v336
      %v338 = vadd.f32 %v334, %v337
      %vm339 = vweird.f32 %v334
      %v340 = vsel %vm339, %v334, %v338
      %v341 = vmul.f32 %v333, %v340
      %v342 = vsub.f32 %v329, %v341
      %v343 = vmul.f32 %v342, %v342
      %v344 = vsel %vm330, %v343, 0.0
      %345 = vadd.xlane.f32.xlu0 %v344
      %v346 = vpop.xlane.xlu0 %345
      %v347 = vmul.f32 %v346, %v340
      %v348 = vadd.f32 %v347, 1e-05
      %v349 = vrsqrt.pop %v348
      %v350 = vmul.f32 %v349, %v348
      %v351 = vmul.f32 %v350, %v349
      %v352 = vmul.f32 0.5, %v351
      %v353 = vsub.f32 1.5, %v352
      %v354 = vmul.f32 %v349, %v353
      %vm355 = vweird.f32 %v348
      %vm356 = vweird.f32 %v349
      %vm357 = vmor %vm355, %vm356
      %v358 = vsel %vm357, %v349, %v354
      %v359 = vmul.f32 %v342, %v358
      %v360 = vld [vmem:[%s1] sm:$0x1]
      %v362 = vperm.slane %v360, 0
      %v364 = vmul.f32 %v359, %v362
      %v365 = vld [vmem:[%s2] sm:$0x1]
      %v367 = vperm.slane %v365, 0
      %v369 = vadd.f32 %v364, %v367
      %v370 = vsel %vm330, %v369, 0.0
      %371 = vadd.xlane.f32.xlu0 %v370
      %v372 = vpop.xlane.xlu0 %371
      %v373 = vmul.f32 %v372, %v340
      %v374 = vsub.f32 %v369, %v373
      %v375 = vmul.f32 %v374, %v374
      %v376 = vsel %vm330, %v375, 0.0
      %377 = vadd.xlane.f32.xlu0 %v376
      %v378 = vpop.xlane.xlu0 %377
      %v379 = vmul.f32 %v378, %v340
      %v380 = vadd.f32 %v379, 1e-05
      %v381 = vrsqrt.pop %v380
      %v382 = vmul.f32 %v381, %v380
      %v383 = vmul.f32 %v382, %v381
      %v384 = vmul.f32 0.5, %v383
      %v385 = vsub.f32 1.5, %v384
      %v386 = vmul.f32 %v381, %v385
      %vm387 = vweird.f32 %v380
      %vm388 = vweird.f32 %v381
      %vm389 = vmor %vm387, %vm388
      %v390 = vsel %vm389, %v381, %v386
      %v391 = vmul.f32 %v374, %v390
      %v392 = vld [vmem:[%s3] sm:$0x1]
      %v394 = vperm.slane %v392, 0
      %v396 = vmul.f32 %v391, %v394
      %v397 = vld [vmem:[%s4] sm:$0x1]
      %v399 = vperm.slane %v397, 0
      %v401 = vadd.f32 %v396, %v399
      %v402 = vpack.c.bf16 %v401, %v401
      %v403 = vld [vmem:[%s5] sm:$0xff]
      %v404 = vld [vmem:[%s5 + $0x8] sm:$0xff]
      %v405 = vld [vmem:[%s5 + $0x10] sm:$0xff]
      %v406 = vld [vmem:[%s5 + $0x18] sm:$0xff]
      %v407 = vld [vmem:[%s5 + $0x20] sm:$0xff]
      %v408 = vld [vmem:[%s5 + $0x28] sm:$0xff]
      %v409 = vld [vmem:[%s5 + $0x30] sm:$0xff]
      %v410 = vld [vmem:[%s5 + $0x38] sm:$0xff]
      %v411 = vld [vmem:[%s6] sm:$0x3]
      %v413 = vperm.slane %v411, 0
      %v414 = vperm.slane %v411, 1
      %v425 = vunpack.c.l.b16 %v403
      %v426 = vunpack.c.h.b16 %v403
      %v427 = vunpack.c.l.b16 %v404
      %v428 = vunpack.c.h.b16 %v404
      %v429 = vunpack.c.l.b16 %v405
      %v430 = vunpack.c.h.b16 %v405
      %v431 = vunpack.c.l.b16 %v406
      %v432 = vunpack.c.h.b16 %v406
      %v433 = vunpack.c.l.b16 %v407
      %v434 = vunpack.c.h.b16 %v407
      %v435 = vunpack.c.l.b16 %v408
      %v436 = vunpack.c.h.b16 %v408
      %v437 = vunpack.c.l.b16 %v409
      %v438 = vunpack.c.h.b16 %v409
      %v439 = vunpack.c.l.b16 %v410
      %v440 = vunpack.c.h.b16 %v410
      %v441 = vpack.c.b16 %v427, %v425
      %v442 = vpack.c.b16 %v428, %v426
      %v443 = vpack.c.b16 %v431, %v429
      %v444 = vpack.c.b16 %v432, %v430
      %v445 = vpack.c.b16 %v435, %v433
      %v446 = vpack.c.b16 %v436, %v434
      %v447 = vpack.c.b16 %v439, %v437
      %v448 = vpack.c.b16 %v440, %v438
      %v458 = vsel %vm330, %v402, 0
      %460 = vmatpush.bf16.msra.mxu0 0
      %461 = vmatpush.bf16.msra.mxu0 0
      %462 = vmatpush.bf16.msra.mxu0 0
      %463 = vmatpush.bf16.msra.mxu0 0
      %464 = vmatpush.bf16.msra.mxu0 %v447
      %465 = vmatpush.bf16.msra.mxu0 %v445
      %466 = vmatpush.bf16.msra.mxu0 %v443
      %467 = vmatpush.bf16.msra.mxu0 %v441
      %468 = vmatmul.bf16.gmra.mxu0 %v458
      %v469 = vpop.f32.mrf.mxu0
      %v470 = vadd.f32 %v413, %v469
      %v471 = vpop.f32.mrf.mxu0
      %472 = vdwg.mxu0
      %473 = vmatpush.bf16.msra.mxu0 0
      %474 = vmatpush.bf16.msra.mxu0 0
      %475 = vmatpush.bf16.msra.mxu0 0
      %476 = vmatpush.bf16.msra.mxu0 0
      %477 = vmatpush.bf16.msra.mxu0 %v448
      %478 = vmatpush.bf16.msra.mxu0 %v446
      %479 = vmatpush.bf16.msra.mxu0 %v444
      %480 = vmatpush.bf16.msra.mxu0 %v442
      %481 = vmatmul.bf16.gmra.mxu0 %v458
      %v482 = vpop.f32.mrf.mxu0
      %v483 = vadd.f32 %v414, %v482
      %v484 = vpop.f32.mrf.mxu0
      %485 = vdwg.mxu0
      %v486 = vpack.c.bf16 %v470, %v470
      %v487 = vpack.c.bf16 %v483, %v483
      %489 = vrot.lane.b32.xlu0 %v486, 64
      %v490 = vpop.permute.xlu0 %489
      %vm492 = vcmask 519168
      %493 = vst.msk [vmem:[#allocation2] sm:$0xf] %vm492, %v490
      %494 = vst.msk [vmem:[#allocation3] sm:$0xf] %vm492, %v487
      %v495 = vld [vmem:[#allocation2] sm:$0xf]
      %v496 = vld [vmem:[#allocation3] sm:$0xf]
      %v498 = vsel %vm330, %v486, 0
      %v501 = vsel %vm330, %v495, 0
      %503 = vmatpush.bf16.xpose.msra.mxu0 0
      %504 = vmatpush.bf16.xpose.msra.mxu0 0
      %505 = vmatpush.bf16.xpose.msra.mxu0 0
      %506 = vmatpush.bf16.xpose.msra.mxu0 0
      %507 = vmatpush.bf16.xpose.msra.mxu0 0
      %508 = vmatpush.bf16.xpose.msra.mxu0 0
      %509 = vmatpush.bf16.xpose.msra.mxu0 0
      %510 = vmatpush.bf16.xpose.msra.mxu0 %v501
      %511 = vmatmul.bf16.gmra.mxu0 %v498
      %v512 = vpop.f32.mrf.mxu0
      %v513 = vadd.f32 0.0, %v512
      %v514 = vpop.f32.mrf.mxu0
      %515 = vdwg.mxu0
      %vm516 = vcmask 64512
      %v517 = vsel %vm516, %v513, -inf
      %518 = vmax.xlane.f32.xlu0 %v517
      %v519 = vpop.xlane.xlu0 %518
      %v520 = vsub.f32 -inf, %v519
      %v521 = vmul.f32 %v520, 1.442695
      %v522 = vpow.pop %v521
      %v523 = vsub.f32 %v513, %v519
      %v524 = vmul.f32 %v523, 1.442695
      %v525 = vpow.pop %v524
      %v526 = vmul.f32 %v522, 0.0
      %v527 = vsel %vm516, %v525, 0.0
      %528 = vadd.xlane.f32.xlu0 %v527
      %v529 = vpop.xlane.xlu0 %528
      %v530 = vadd.f32 %v526, %v529
      %v531 = vpack.c.bf16 %v525, %v525
      %v533 = vsel %vm516, %v531, 0
      %vm535 = vcmask 1043456
      %v537 = vsel %vm535, %v496, 0
      %539 = vmatpush.bf16.msra.mxu0 0
      %540 = vmatpush.bf16.msra.mxu0 0
      %541 = vmatpush.bf16.msra.mxu0 0
      %542 = vmatpush.bf16.msra.mxu0 0
      %543 = vmatpush.bf16.msra.mxu0 0
      %544 = vmatpush.bf16.msra.mxu0 0
      %545 = vmatpush.bf16.msra.mxu0 0
      %546 = vmatpush.bf16.msra.mxu0 %v537
      %547 = vmatmul.bf16.gmra.mxu0 %v533
      %v548 = vpop.f32.mrf.mxu0
      %v549 = vadd.f32 0.0, %v548
      %v550 = vpop.f32.mrf.mxu0
      %551 = vdwg.mxu0
      %v552 = vadd.f32 %v526, %v549
      %v553 = vrcp.pop %v530
      %v554 = vmul.f32 %v552, %v553
      %v555 = vpack.c.bf16 %v554, %v554
      %556 = vst.msk [vmem:[#allocation4] sm:$0xf] %vm492, %v555
      %v557 = vld [vmem:[#allocation4] sm:$0xf]
      %v558 = vld [vmem:[%s7] sm:$0xf]
      %v559 = vld [vmem:[%s7 + $0x4] sm:$0xf]
      %v560 = vld [vmem:[%s7 + $0x8] sm:$0xf]
      %v561 = vld [vmem:[%s7 + $0xc] sm:$0xf]
      %v562 = vld [vmem:[%s7 + $0x10] sm:$0xf]
      %v563 = vld [vmem:[%s7 + $0x14] sm:$0xf]
      %v564 = vld [vmem:[%s7 + $0x18] sm:$0xf]
      %v565 = vld [vmem:[%s7 + $0x1c] sm:$0xf]
      %v566 = vld [vmem:[%s8] sm:$0x1]
      %v568 = vperm.slane %v566, 0
      %v578 = vunpack.c.l.b16 %v558
      %v579 = vunpack.c.l.b16 %v559
      %v580 = vunpack.c.l.b16 %v560
      %v581 = vunpack.c.l.b16 %v561
      %v582 = vunpack.c.l.b16 %v562
      %v583 = vunpack.c.l.b16 %v563
      %v584 = vunpack.c.l.b16 %v564
      %v585 = vunpack.c.l.b16 %v565
      %v586 = vpack.c.b16 %v579, %v578
      %v587 = vpack.c.b16 %v581, %v580
      %v588 = vpack.c.b16 %v583, %v582
      %v589 = vpack.c.b16 %v585, %v584
      %v595 = vsel %vm330, %v557, 0
      %597 = vmatpush.bf16.msra.mxu0 0
      %598 = vmatpush.bf16.msra.mxu0 0
      %599 = vmatpush.bf16.msra.mxu0 0
      %600 = vmatpush.bf16.msra.mxu0 0
      %601 = vmatpush.bf16.msra.mxu0 %v589
      %602 = vmatpush.bf16.msra.mxu0 %v588
      %603 = vmatpush.bf16.msra.mxu0 %v587
      %604 = vmatpush.bf16.msra.mxu0 %v586
      %605 = vmatmul.bf16.gmra.mxu0 %v595
      %v606 = vpop.f32.mrf.mxu0
      %v607 = vadd.f32 %v568, %v606
      %v608 = vpop.f32.mrf.mxu0
      %609 = vdwg.mxu0
      %v610 = vadd.f32 %v369, %v607
      %611 = vst.msk [vmem:[%s327] sm:$0xff] %vm330, %v610
      %p612 = scmp.lt.s32.totalorder %s20, 1
      %s613 = scalar_select %p612, %s20, 1
      %s614 = smul.addr %s613, 8
      %s615 = scalar_lea.vmem %s9, %s614
      // Predicated region
      $region57: #{clip_forward.11} parent=55 // pred_check
        %p616 = pneg %p232
      $region58: #{clip_forward.11} parent=55 // pred_check_branch
        %618 = sbr.rel (%p616) target = $region60
      $region59: #{clip_forward.11} parent=55 // pred_region
        _
      $region60: #{clip_forward.11} parent=55 // pred_fallthru
        _
    $region56: #{clip_forward.11} parent=5 // pred_fallthru
      _
    %p619 = scmp.le.s32.totalorder 2, %s15
    // Predicated region
    $region61: #{clip_forward.11} parent=5 // pred_check
      %p620 = pneg %p619
    $region62: #{clip_forward.11} parent=5 // pred_check_branch
      %622 = sbr.rel (%p620) target = $region64
    $region63: #{clip_forward.11} parent=5 // pred_region
      %s623 = ssub.s32 %s15, 2
      // Predicated region
      $region65: #{clip_forward.11} parent=63 // pred_check
        %p624 = pneg %p238
      $region66: #{clip_forward.11} parent=63 // pred_check_branch
        %626 = sbr.rel (%p624) target = $region68
      $region67: #{clip_forward.11} parent=63 // pred_region
        %p627 = scmp.lt.s32.totalorder %s21, 1
        %s628 = scalar_select %p627, %s21, 1
        %s629 = smul.addr %s628, 8
        %s630 = scalar_lea.vmem %s9, %s629
      $region68: #{clip_forward.11} parent=63 // pred_fallthru
        _
    $region64: #{clip_forward.11} parent=5 // pred_fallthru
      _
  $region6: #{clip_forward.11} parent=0 // loop_footer
    %s19 = sadd.s32 1, %s15
  $region7: #{clip_forward.11} parent=0 // loop_footer_branch
    %14 = sbr.rel target = $region3
  $region8: #{clip_forward.11} parent=0 // loop_exit
    _

// kernel: clip_forward.21
$region0: #{clip_forward.21}
  #allocation0 [shape = 'u32[]', space=smem, size = 0x4, offset = 0x4, fixed_abs, tag = 'smem constant byte address 0x4 - core index']
  #allocation1 [shape = 'u32[72,128]{1,0:T(1,128)}', space=vmem, size = 0x9000, scoped, tag = 'internal scratch']
  #allocation2 [shape = 'f32[1,1]{1,0:T(1,128)S(1)}', space=vmem, size = 0x200, scoped, tag = 'scoped memory for clip_forward.21']
  %s0 = inlined_call_operand.vmem [shape: f32[2,32], index: 0, kind: input, shape index: {}]
  %s1 = inlined_call_operand.vmem [shape: f32[2,32], index: 1, kind: input, shape index: {}]
  %s2 = inlined_call_operand.<no memory space> [shape: f32[1,1], index: 2, kind: input, shape index: {}]
  %s3 = inlined_call_operand.vmem [shape: f32[2,2], index: 3, kind: output, shape index: {}]
  %s4 = sld [smem:[#allocation0]]
  $region22: #{clip_forward.21} parent=0
    _
  %s6 = ssub.s32 1, %s4
  %s7 = scalar_select 0, %s6, %s4
  %v8 = vstv %s2
  %9 = vst [vmem:[#allocation2] sm:$0x1] %v8
  // Predicated region
  $region2: #{clip_forward.21} parent=0 // pred_check
    _
  $region3: #{clip_forward.21} parent=0 // pred_check_branch
    %11 = sbr.rel (0) target = $region5
  $region4: #{clip_forward.21} parent=0 // pred_region
    _
  $region5: #{clip_forward.21} parent=0 // pred_fallthru
    _
  // Predicated region
  $region6: #{clip_forward.21} parent=0 // pred_check
    _
  $region7: #{clip_forward.21} parent=0 // pred_check_branch
    %13 = sbr.rel (0) target = $region9
  $region8: #{clip_forward.21} parent=0 // pred_region
    _
  $region9: #{clip_forward.21} parent=0 // pred_fallthru
    _
  // Predicated region
  $region10: #{clip_forward.21} parent=0 // pred_check
    _
  $region11: #{clip_forward.21} parent=0 // pred_check_branch
    %15 = sbr.rel (0) target = $region13
  $region12: #{clip_forward.21} parent=0 // pred_region
    _
  $region13: #{clip_forward.21} parent=0 // pred_fallthru
    _
  %v16 = vld [vmem:[%s0] sm:$0x3]
  %v17 = vld [vmem:[%s1] sm:$0x3]
  %v18 = vmul.f32 %v16, %v16
  %vm19 = vcmask 254976
  %v20 = vsel %vm19, %v18, 0.0
  %21 = vadd.xlane.f32.xlu0 %v20
  %v22 = vpop.xlane.xlu0 %21
  %v23 = vrsqrt.pop %v22
  %v24 = vmul.f32 %v23, %v22
  %v25 = vmul.f32 %v24, %v23
  %v26 = vmul.f32 0.5, %v25
  %v27 = vsub.f32 1.5, %v26
  %v28 = vmul.f32 %v23, %v27
  %vm29 = vweird.f32 %v22
  %vm30 = vweird.f32 %v23
  %vm31 = vmor %vm29, %vm30
  %v32 = vsel %vm31, %v23, %v28
  %v33 = vmul.f32 %v16, %v32
  %v34 = vmul.f32 %v17, %v17
  %v35 = vsel %vm19, %v34, 0.0
  %36 = vadd.xlane.f32.xlu0 %v35
  %v37 = vpop.xlane.xlu0 %36
  %v38 = vrsqrt.pop %v37
  %v39 = vmul.f32 %v38, %v37
  %v40 = vmul.f32 %v39, %v38
  %v41 = vmul.f32 0.5, %v40
  %v42 = vsub.f32 1.5, %v41
  %v43 = vmul.f32 %v38, %v42
  %vm44 = vweird.f32 %v37
  %vm45 = vweird.f32 %v38
  %vm46 = vmor %vm44, %vm45
  %v47 = vsel %vm46, %v38, %v43
  %v48 = vmul.f32 %v17, %v47
  %v49 = vld [vmem:[#allocation2] sm:$0x1]
  %v50 = vmul.f32 %v49, 1.442695
  %v51 = vpow.pop %v50
  %vm52 = vcmask 261120
  %v54 = vsel %vm52, %v33, 0
  %v57 = vsel %vm52, %v48, 0
  %59 = vmatpush.xpose.msra.mxu0 0.0
  %60 = vmatpush.xpose.msra.mxu0 0.0
  %61 = vmatpush.xpose.msra.mxu0 0.0
  %62 = vmatpush.xpose.msra.mxu0 0.0
  %63 = vmatpush.xpose.msra.mxu0 0.0
  %64 = vmatpush.xpose.msra.mxu0 0.0
  %65 = vmatpush.xpose.msra.mxu0 0.0
  %66 = vmatpush.xpose.msra.mxu0 0.0
  %67 = vmatpush.xpose.msra.mxu0 0.0
  %68 = vmatpush.xpose.msra.mxu0 0.0
  %69 = vmatpush.xpose.msra.mxu0 0.0
  %70 = vmatpush.xpose.msra.mxu0 0.0
  %71 = vmatpush.xpose.msra.mxu0 0.0
  %72 = vmatpush.xpose.msra.mxu0 0.0
  %73 = vmatpush.xpose.msra.mxu0 0.0
  %74 = vmatpush.xpose.msra.mxu0 %v57
  %75 = vmatmul.f32.gmra.mxu0 %v54
  %v76 = vpop.f32.mrf.mxu0
  %v77 = vadd.f32 0.0, %v76
  %78 = vdwg.mxu0
  %v80 = vperm.slane %v51, 0
  %81 = vset.pattern.permute.xlu0 0
  %82 = vperm.xlu0 %81, %v80
  %v83 = vpop.permute.xlu0 %82
  %v85 = vmul.f32 %v83, %v77
  %vm86 = vcmask 9216
  %87 = vst.msk [vmem:[%s3] sm:$0x3] %vm86, %v85
  // Predicated region
  $region14: #{clip_forward.21} parent=0 // pred_check
    _
  $region15: #{clip_forward.21} parent=0 // pred_check_branch
    %89 = sbr.rel (0) target = $region17
  $region16: #{clip_forward.21} parent=0 // pred_region
    _
  $region17: #{clip_forward.21} parent=0 // pred_fallthru
    _
  // Predicated region
  $region18: #{clip_forward.21} parent=0 // pred_check
    _
  $region19: #{clip_forward.21} parent=0 // pred_check_branch
    %91 = sbr.rel (0) target = $region21
  $region20: #{clip_forward.21} parent=0 // pred_region
    _
  $region21: #{clip_forward.21} parent=0 // pred_fallthru
    _

// kernel: clip_forward.13
$region0: #{clip_forward.13}
  #allocation0 [shape = 'u32[]', space=smem, size = 0x4, offset = 0x4, fixed_abs, tag = 'smem constant byte address 0x4 - core index']
  #allocation1 [shape = 'u32[72,128]{1,0:T(1,128)}', space=vmem, size = 0x9000, scoped, tag = 'internal scratch']
  #allocation2 [shape = 'bf16[1,8,64]{2,1,0:T(8,128)(2,1)}', space=vmem, size = 0x800, scoped, tag = 'scratch operand']
  #allocation3 [shape = 'bf16[1,8,64]{2,1,0:T(8,128)(2,1)}', space=vmem, size = 0x800, scoped, tag = 'scratch operand']
  #allocation4 [shape = 'bf16[8,64]{1,0:T(8,128)(2,1)}', space=vmem, size = 0x800, scoped, tag = 'scratch operand']
  %s0 = inlined_call_operand.vmem [shape: f32[2,8,64], index: 0, kind: input, shape index: {}]
  %s1 = inlined_call_operand.hbm [shape: f32[1,64], index: 1, kind: input, shape index: {}, may-alias: {1,3}]
  %s2 = inlined_call_operand.hbm [shape: f32[1,64], index: 2, kind: input, shape index: {}, may-alias: {2,4}]
  %s3 = inlined_call_operand.hbm [shape: f32[1,64], index: 3, kind: input, shape index: {}, may-alias: {1,3}]
  %s4 = inlined_call_operand.hbm [shape: f32[1,64], index: 4, kind: input, shape index: {}, may-alias: {2,4}]
  %s5 = inlined_call_operand.vmem [shape: bf16[1,64,192], index: 5, kind: input, shape index: {}]
  %s6 = inlined_call_operand.vmem [shape: f32[1,1,192], index: 6, kind: input, shape index: {}]
  %s7 = inlined_call_operand.vmem [shape: bf16[64,64], index: 7, kind: input, shape index: {}]
  %s8 = inlined_call_operand.hbm [shape: f32[1,64], index: 8, kind: input, shape index: {}]
  %s9 = inlined_call_operand.vmem [shape: f32[2,8,64], index: 9, kind: output, shape index: {}]
  %s10 = sld [smem:[#allocation0]]
  $region89: #{clip_forward.13} parent=0
    _
  %s12 = ssub.s32 1, %s10
  %s13 = scalar_select 0, %s12, %s10
  $region1: #{clip_forward.13} parent=0
    #allocation5 [shape = 'u8[512]{0}', space=vmem, size = 0x400, scoped, tag = 'input window, operand 1, single buffered']
    #allocation6 [shape = 's32[2]{0}', space=sflag, size = 0x8, scoped, tag = 'scoped memory for clip_forward.13']
    #allocation7 [shape = 'u8[512]{0}', space=vmem, size = 0x400, scoped, tag = 'input window, operand 2, single buffered']
    #allocation8 [shape = 's32[1]{0}', space=sflag, size = 0x4, scoped, tag = 'scoped memory for clip_forward.13']
    #allocation9 [shape = 'u8[512]{0}', space=vmem, size = 0x400, scoped, tag = 'input window, operand 3, single buffered']
    #allocation10 [shape = 'u8[512]{0}', space=vmem, size = 0x400, scoped, tag = 'input window, operand 4, single buffered']
    #allocation11 [shape = 's32[1]{0}', space=sflag, size = 0x4, scoped, tag = 'scoped memory for clip_forward.13']
    #allocation12 [shape = 'u8[512]{0}', space=vmem, size = 0x400, scoped, tag = 'input window, operand 8, single buffered']
    %14 = vsyncpa [#allocation6], 0
    %15 = vsyncpa [#allocation8], 0
    %16 = vsyncpa [#allocation11], 0
    loop: start=0, step=1, limit=4
    $region2: #{clip_forward.13} parent=1 // loop_pre_header
      _
    $region3: #{clip_forward.13} parent=1 // loop_header
      %s18 = sphi 0, %s22
      %p19 = scmp.ge.s32.totalorder %s18, 4
      %s28 = sphi 0, %s30
      %s31 = sphi 0, %s28
      %s32 = sphi 0, %s31
      %s48 = sphi 0, %s32
      %s52 = sphi 0, %s52
      %s54 = sphi 0, %s52
      %s55 = sphi 0, %s54
      %s69 = sphi 0, %s55
      %s73 = sphi 0, %s73
      %s75 = sphi 0, %s73
      %s76 = sphi 0, %s75
      %s90 = sphi 0, %s76
      %s94 = sphi 0, %s94
      %s96 = sphi 0, %s94
      %s97 = sphi 0, %s96
      %s111 = sphi 0, %s97
      %s115 = sphi 0, %s115
      %s117 = sphi 0, %s115
      %s118 = sphi 0, %s117
      %s132 = sphi 0, %s118
      %s136 = sphi 0, %s136
      %s138 = sphi 0, %s136
      %s139 = sphi 0, %s138
      %s153 = sphi 0, %s139
      %s157 = sphi 0, %s157
      %s159 = sphi 0, %s157
      %s160 = sphi 0, %s159
      %s174 = sphi 0, %s160
      %s178 = sphi 0, %s178
      %s180 = sphi 0, %s178
      %s181 = sphi 0, %s180
      %s195 = sphi 0, %s181
      %s199 = sphi 0, %s199
      %s201 = sphi 0, %s199
      %s202 = sphi 0, %s201
      %s216 = sphi 0, %s202
      %s222 = sphi 0, %s224
      %s225 = sphi 0, %s222
      %s226 = sphi 0, %s225
      %s242 = sphi 0, %s226
    $region4: #{clip_forward.13} parent=1 // loop_header_branch
      %21 = sbr.rel (%p19) target = $region8
    $region5: #{clip_forward.13} parent=1 // loop_body
      %s23 = ssub.s32 %s18, 1
      %s24 = ssub.s32 %s18, 2
      %s25 = sadd.s32 %s18, 1
      %s26 = ssub.s32 %s18, %s25
      %p27 = scmp.eq.s32.totalorder %s26, 0
      %s29 = sadd.s32 %s28, 1
      %s30 = scalar_select %p27, %s28, %s29
      %p33 = pneg %p27
      %p34 = scmp.eq.s32.totalorder %s18, 1
      %p35 = por %p33, %p34
      %p36 = scmp.ne.s32.totalorder %s28, %s31
      %p37 = scmp.eq.s32.totalorder %s18, 0
      %p38 = por %p36, %p37
      %p39 = scmp.ne.s32.totalorder %s28, %s31
      %p40 = scmp.eq.s32.totalorder %s23, 1
      %p41 = por %p39, %p40
      %p42 = scmp.ne.s32.totalorder %s31, %s32
      %p43 = scmp.eq.s32.totalorder %s23, 0
      %p44 = por %p42, %p43
      %p45 = scmp.ne.s32.totalorder %s31, %s32
      %p46 = scmp.eq.s32.totalorder %s24, 1
      %p47 = por %p45, %p46
      %p49 = scmp.ne.s32.totalorder %s32, %s48
      %p50 = scmp.eq.s32.totalorder %s24, 0
      %p51 = por %p49, %p50
      %s53 = sadd.s32 %s52, 1
      %p56 = scmp.eq.s32.totalorder %s18, 1
      %p57 = scmp.ne.s32.totalorder %s52, %s54
      %p58 = scmp.eq.s32.totalorder %s18, 0
      %p59 = por %p57, %p58
      %p60 = scmp.ne.s32.totalorder %s52, %s54
      %p61 = scmp.eq.s32.totalorder %s23, 1
      %p62 = por %p60, %p61
      %p63 = scmp.ne.s32.totalorder %s54, %s55
      %p64 = scmp.eq.s32.totalorder %s23, 0
      %p65 = por %p63, %p64
      %p66 = scmp.ne.s32.totalorder %s54, %s55
      %p67 = scmp.eq.s32.totalorder %s24, 1
      %p68 = por %p66, %p67
      %p70 = scmp.ne.s32.totalorder %s55, %s69
      %p71 = scmp.eq.s32.totalorder %s24, 0
      %p72 = por %p70, %p71
      %s74 = sadd.s32 %s73, 1
      %p77 = scmp.eq.s32.totalorder %s18, 1
      %p78 = scmp.ne.s32.totalorder %s73, %s75
      %p79 = scmp.eq.s32.totalorder %s18, 0
      %p80 = por %p78, %p79
      %p81 = scmp.ne.s32.totalorder %s73, %s75
      %p82 = scmp.eq.s32.totalorder %s23, 1
      %p83 = por %p81, %p82
      %p84 = scmp.ne.s32.totalorder %s75, %s76
      %p85 = scmp.eq.s32.totalorder %s23, 0
      %p86 = por %p84, %p85
      %p87 = scmp.ne.s32.totalorder %s75, %s76
      %p88 = scmp.eq.s32.totalorder %s24, 1
      %p89 = por %p87, %p88
      %p91 = scmp.ne.s32.totalorder %s76, %s90
      %p92 = scmp.eq.s32.totalorder %s24, 0
      %p93 = por %p91, %p92
      %s95 = sadd.s32 %s94, 1
      %p98 = scmp.eq.s32.totalorder %s18, 1
      %p99 = scmp.ne.s32.totalorder %s94, %s96
      %p100 = scmp.eq.s32.totalorder %s18, 0
      %p101 = por %p99, %p100
      %p102 = scmp.ne.s32.totalorder %s94, %s96
      %p103 = scmp.eq.s32.totalorder %s23, 1
      %p104 = por %p102, %p103
      %p105 = scmp.ne.s32.totalorder %s96, %s97
      %p106 = scmp.eq.s32.totalorder %s23, 0
      %p107 = por %p105, %p106
      %p108 = scmp.ne.s32.totalorder %s96, %s97
      %p109 = scmp.eq.s32.totalorder %s24, 1
      %p110 = por %p108, %p109
      %p112 = scmp.ne.s32.totalorder %s97, %s111
      %p113 = scmp.eq.s32.totalorder %s24, 0
      %p114 = por %p112, %p113
      %s116 = sadd.s32 %s115, 1
      %p119 = scmp.eq.s32.totalorder %s18, 1
      %p120 = scmp.ne.s32.totalorder %s115, %s117
      %p121 = scmp.eq.s32.totalorder %s18, 0
      %p122 = por %p120, %p121
      %p123 = scmp.ne.s32.totalorder %s115, %s117
      %p124 = scmp.eq.s32.totalorder %s23, 1
      %p125 = por %p123, %p124
      %p126 = scmp.ne.s32.totalorder %s117, %s118
      %p127 = scmp.eq.s32.totalorder %s23, 0
      %p128 = por %p126, %p127
      %p129 = scmp.ne.s32.totalorder %s117, %s118
      %p130 = scmp.eq.s32.totalorder %s24, 1
      %p131 = por %p129, %p130
      %p133 = scmp.ne.s32.totalorder %s118, %s132
      %p134 = scmp.eq.s32.totalorder %s24, 0
      %p135 = por %p133, %p134
      %s137 = sadd.s32 %s136, 1
      %p140 = scmp.eq.s32.totalorder %s18, 1
      %p141 = scmp.ne.s32.totalorder %s136, %s138
      %p142 = scmp.eq.s32.totalorder %s18, 0
      %p143 = por %p141, %p142
      %p144 = scmp.ne.s32.totalorder %s136, %s138
      %p145 = scmp.eq.s32.totalorder %s23, 1
      %p146 = por %p144, %p145
      %p147 = scmp.ne.s32.totalorder %s138, %s139
      %p148 = scmp.eq.s32.totalorder %s23, 0
      %p149 = por %p147, %p148
      %p150 = scmp.ne.s32.totalorder %s138, %s139
      %p151 = scmp.eq.s32.totalorder %s24, 1
      %p152 = por %p150, %p151
      %p154 = scmp.ne.s32.totalorder %s139, %s153
      %p155 = scmp.eq.s32.totalorder %s24, 0
      %p156 = por %p154, %p155
      %s158 = sadd.s32 %s157, 1
      %p161 = scmp.eq.s32.totalorder %s18, 1
      %p162 = scmp.ne.s32.totalorder %s157, %s159
      %p163 = scmp.eq.s32.totalorder %s18, 0
      %p164 = por %p162, %p163
      %p165 = scmp.ne.s32.totalorder %s157, %s159
      %p166 = scmp.eq.s32.totalorder %s23, 1
      %p167 = por %p165, %p166
      %p168 = scmp.ne.s32.totalorder %s159, %s160
      %p169 = scmp.eq.s32.totalorder %s23, 0
      %p170 = por %p168, %p169
      %p171 = scmp.ne.s32.totalorder %s159, %s160
      %p172 = scmp.eq.s32.totalorder %s24, 1
      %p173 = por %p171, %p172
      %p175 = scmp.ne.s32.totalorder %s160, %s174
      %p176 = scmp.eq.s32.totalorder %s24, 0
      %p177 = por %p175, %p176
      %s179 = sadd.s32 %s178, 1
      %p182 = scmp.eq.s32.totalorder %s18, 1
      %p183 = scmp.ne.s32.totalorder %s178, %s180
      %p184 = scmp.eq.s32.totalorder %s18, 0
      %p185 = por %p183, %p184
      %p186 = scmp.ne.s32.totalorder %s178, %s180
      %p187 = scmp.eq.s32.totalorder %s23, 1
      %p188 = por %p186, %p187
      %p189 = scmp.ne.s32.totalorder %s180, %s181
      %p190 = scmp.eq.s32.totalorder %s23, 0
      %p191 = por %p189, %p190
      %p192 = scmp.ne.s32.totalorder %s180, %s181
      %p193 = scmp.eq.s32.totalorder %s24, 1
      %p194 = por %p192, %p193
      %p196 = scmp.ne.s32.totalorder %s181, %s195
      %p197 = scmp.eq.s32.totalorder %s24, 0
      %p198 = por %p196, %p197
      %s200 = sadd.s32 %s199, 1
      %p203 = scmp.eq.s32.totalorder %s18, 1
      %p204 = scmp.ne.s32.totalorder %s199, %s201
      %p205 = scmp.eq.s32.totalorder %s18, 0
      %p206 = por %p204, %p205
      %p207 = scmp.ne.s32.totalorder %s199, %s201
      %p208 = scmp.eq.s32.totalorder %s23, 1
      %p209 = por %p207, %p208
      %p210 = scmp.ne.s32.totalorder %s201, %s202
      %p211 = scmp.eq.s32.totalorder %s23, 0
      %p212 = por %p210, %p211
      %p213 = scmp.ne.s32.totalorder %s201, %s202
      %p214 = scmp.eq.s32.totalorder %s24, 1
      %p215 = por %p213, %p214
      %p217 = scmp.ne.s32.totalorder %s202, %s216
      %p218 = scmp.eq.s32.totalorder %s24, 0
      %p219 = por %p217, %p218
      %s220 = ssub.s32 %s18, %s25
      %p221 = scmp.eq.s32.totalorder %s220, 0
      %s223 = sadd.s32 %s222, 1
      %s224 = scalar_select %p221, %s222, %s223
      %p227 = pneg %p221
      %p228 = scmp.eq.s32.totalorder %s18, 1
      %p229 = por %p227, %p228
      %p230 = scmp.ne.s32.totalorder %s222, %s225
      %p231 = scmp.eq.s32.totalorder %s18, 0
      %p232 = por %p230, %p231
      %p233 = scmp.ne.s32.totalorder %s222, %s225
      %p234 = scmp.eq.s32.totalorder %s23, 1
      %p235 = por %p233, %p234
      %p236 = scmp.ne.s32.totalorder %s225, %s226
      %p237 = scmp.eq.s32.totalorder %s23, 0
      %p238 = por %p236, %p237
      %p239 = scmp.ne.s32.totalorder %s225, %s226
      %p240 = scmp.eq.s32.totalorder %s24, 1
      %p241 = por %p239, %p240
      %p243 = scmp.ne.s32.totalorder %s226, %s242
      %p244 = scmp.eq.s32.totalorder %s24, 0
      %p245 = por %p243, %p244
      %p246 = scmp.le.s32.totalorder 1, %s18
      %p247 = scmp.lt.s32.totalorder %s18, 3
      %p248 = pnand %p246, %p247
      %p249 = pneg %p248
      // Predicated region
      $region9: #{clip_forward.13} parent=5 // pred_check
        _
      $region10: #{clip_forward.13} parent=5 // pred_check_branch
        %251 = sbr.rel (%p248) target = $region12
      $region11: #{clip_forward.13} parent=5 // pred_region
        %s252 = ssub.s32 %s18, 1
        // Predicated region
        $region13: #{clip_forward.13} parent=11 // pred_check
          %p253 = pneg %p65
        $region14: #{clip_forward.13} parent=11 // pred_check_branch
          %255 = sbr.rel (%p253) target = $region16
        $region15: #{clip_forward.13} parent=11 // pred_region
          %257 = vsyncadd [#allocation6], 0
          %s259 = sshll.u32 %s1, 4
          %s260 = int_to_ptr.hbm [resolvable:$true] %s259
          %s261 = sshll.u32 [#allocation5], 4
          %s262 = int_to_ptr.vmem [resolvable:$true] %s261
          %264 = dma.hbm_to_vmem [thread:$0]  %s260, 16, %s262, [#allocation6]
        $region16: #{clip_forward.13} parent=11 // pred_fallthru
          _
        // Predicated region
        $region17: #{clip_forward.13} parent=11 // pred_check
          %p265 = pneg %p86
        $region18: #{clip_forward.13} parent=11 // pred_check_branch
          %267 = sbr.rel (%p265) target = $region20
        $region19: #{clip_forward.13} parent=11 // pred_region
          %269 = vsyncadd [#allocation8], 0
          %s271 = sshll.u32 %s2, 4
          %s272 = int_to_ptr.hbm [resolvable:$true] %s271
          %s273 = sshll.u32 [#allocation7], 4
          %s274 = int_to_ptr.vmem [resolvable:$true] %s273
          %276 = dma.hbm_to_vmem [thread:$0]  %s272, 16, %s274, [#allocation8]
        $region20: #{clip_forward.13} parent=11 // pred_fallthru
          _
        // Predicated region
        $region21: #{clip_forward.13} parent=11 // pred_check
          %p277 = pneg %p107
        $region22: #{clip_forward.13} parent=11 // pred_check_branch
          %279 = sbr.rel (%p277) target = $region24
        $region23: #{clip_forward.13} parent=11 // pred_region
          %281 = vsyncadd [#allocation8], 0
          %s283 = sshll.u32 %s3, 4
          %s284 = int_to_ptr.hbm [resolvable:$true] %s283
          %s285 = sshll.u32 [#allocation9], 4
          %s286 = int_to_ptr.vmem [resolvable:$true] %s285
          %288 = dma.hbm_to_vmem [thread:$0]  %s284, 16, %s286, [#allocation8]
        $region24: #{clip_forward.13} parent=11 // pred_fallthru
          _
        // Predicated region
        $region25: #{clip_forward.13} parent=11 // pred_check
          %p289 = pneg %p128
        $region26: #{clip_forward.13} parent=11 // pred_check_branch
          %291 = sbr.rel (%p289) target = $region28
        $region27: #{clip_forward.13} parent=11 // pred_region
          %293 = vsyncadd [#allocation11], 0
          %s295 = sshll.u32 %s4, 4
          %s296 = int_to_ptr.hbm [resolvable:$true] %s295
          %s297 = sshll.u32 [#allocation10], 4
          %s298 = int_to_ptr.vmem [resolvable:$true] %s297
          %300 = dma.hbm_to_vmem [thread:$0]  %s296, 16, %s298, [#allocation11]
        $region28: #{clip_forward.13} parent=11 // pred_fallthru
          _
        // Predicated region
        $region29: #{clip_forward.13} parent=11 // pred_check
          %p301 = pneg %p149
        $region30: #{clip_forward.13} parent=11 // pred_check_branch
          %303 = sbr.rel (%p301) target = $region32
        $region31: #{clip_forward.13} parent=11 // pred_region
          _
        $region32: #{clip_forward.13} parent=11 // pred_fallthru
          _
        // Predicated region
        $region33: #{clip_forward.13} parent=11 // pred_check
          %p304 = pneg %p170
        $region34: #{clip_forward.13} parent=11 // pred_check_branch
          %306 = sbr.rel (%p304) target = $region36
        $region35: #{clip_forward.13} parent=11 // pred_region
          _
        $region36: #{clip_forward.13} parent=11 // pred_fallthru
          _
        // Predicated region
        $region37: #{clip_forward.13} parent=11 // pred_check
          %p307 = pneg %p191
        $region38: #{clip_forward.13} parent=11 // pred_check_branch
          %309 = sbr.rel (%p307) target = $region40
        $region39: #{clip_forward.13} parent=11 // pred_region
          _
        $region40: #{clip_forward.13} parent=11 // pred_fallthru
          _
        // Predicated region
        $region41: #{clip_forward.13} parent=11 // pred_check
          %p310 = pneg %p212
        $region42: #{clip_forward.13} parent=11 // pred_check_branch
          %312 = sbr.rel (%p310) target = $region44
        $region43: #{clip_forward.13} parent=11 // pred_region
          %314 = vsyncadd [#allocation11], 0
          %s316 = sshll.u32 %s8, 4
          %s317 = int_to_ptr.hbm [resolvable:$true] %s316
          %s318 = sshll.u32 [#allocation12], 4
          %s319 = int_to_ptr.vmem [resolvable:$true] %s318
          %321 = dma.hbm_to_vmem [thread:$0]  %s317, 16, %s319, [#allocation11]
        $region44: #{clip_forward.13} parent=11 // pred_fallthru
          _
      $region12: #{clip_forward.13} parent=5 // pred_fallthru
        _
      %p322 = scmp.lt.s32.totalorder %s18, 2
      // Predicated region
      $region45: #{clip_forward.13} parent=5 // pred_check
        %p323 = pneg %p322
      $region46: #{clip_forward.13} parent=5 // pred_check_branch
        %325 = sbr.rel (%p323) target = $region48
      $region47: #{clip_forward.13} parent=5 // pred_region
        // Predicated region
        $region49: #{clip_forward.13} parent=47 // pred_check
          %p326 = pneg %p38
        $region50: #{clip_forward.13} parent=47 // pred_check_branch
          %328 = sbr.rel (%p326) target = $region52
        $region51: #{clip_forward.13} parent=47 // pred_region
          %p329 = scmp.lt.s32.totalorder %s18, 1
          %s330 = scalar_select %p329, %s18, 1
          %s331 = smul.addr %s330, 8
          %s332 = scalar_lea.vmem %s0, %s331
        $region52: #{clip_forward.13} parent=47 // pred_fallthru
          _
      $region48: #{clip_forward.13} parent=5 // pred_fallthru
        _
      %p333 = scmp.le.s32.totalorder 1, %s18
      %p334 = scmp.lt.s32.totalorder %s18, 3
      %p335 = pnand %p333, %p334
      %p336 = pneg %p335
      // Predicated region
      $region53: #{clip_forward.13} parent=5 // pred_check
        _
      $region54: #{clip_forward.13} parent=5 // pred_check_branch
        %338 = sbr.rel (%p335) target = $region56
      $region55: #{clip_forward.13} parent=5 // pred_region
        %s339 = ssub.s32 %s18, 1
        // Predicated region
        $region57: #{clip_forward.13} parent=55 // pred_check
          %p340 = pneg %p65
        $region58: #{clip_forward.13} parent=55 // pred_check_branch
          %342 = sbr.rel (%p340) target = $region60
        $region59: #{clip_forward.13} parent=55 // pred_region
          %344 = dma.done [#allocation6], 16
        $region60: #{clip_forward.13} parent=55 // pred_fallthru
          _
        // Predicated region
        $region61: #{clip_forward.13} parent=55 // pred_check
          %p345 = pneg %p86
        $region62: #{clip_forward.13} parent=55 // pred_check_branch
          %347 = sbr.rel (%p345) target = $region64
        $region63: #{clip_forward.13} parent=55 // pred_region
          %349 = dma.done [#allocation8], 16
        $region64: #{clip_forward.13} parent=55 // pred_fallthru
          _
        // Predicated region
        $region65: #{clip_forward.13} parent=55 // pred_check
          %p350 = pneg %p107
        $region66: #{clip_forward.13} parent=55 // pred_check_branch
          %352 = sbr.rel (%p350) target = $region68
        $region67: #{clip_forward.13} parent=55 // pred_region
          %354 = dma.done [#allocation8], 16
        $region68: #{clip_forward.13} parent=55 // pred_fallthru
          _
        // Predicated region
        $region69: #{clip_forward.13} parent=55 // pred_check
          %p355 = pneg %p128
        $region70: #{clip_forward.13} parent=55 // pred_check_branch
          %357 = sbr.rel (%p355) target = $region72
        $region71: #{clip_forward.13} parent=55 // pred_region
          %359 = dma.done [#allocation11], 16
        $region72: #{clip_forward.13} parent=55 // pred_fallthru
          _
        // Predicated region
        $region73: #{clip_forward.13} parent=55 // pred_check
          %p360 = pneg %p212
        $region74: #{clip_forward.13} parent=55 // pred_check_branch
          %362 = sbr.rel (%p360) target = $region76
        $region75: #{clip_forward.13} parent=55 // pred_region
          %364 = dma.done [#allocation11], 16
        $region76: #{clip_forward.13} parent=55 // pred_fallthru
          _
        %p365 = scmp.lt.s32.totalorder %s23, 1
        %s366 = scalar_select %p365, %s23, 1
        %s367 = smul.addr %s366, 8
        %s368 = scalar_lea.vmem %s0, %s367
        %p369 = pneg %p44
        %p370 = pneg %p41
        %p371 = pneg %p65
        %p372 = pneg %p62
        %p373 = pneg %p86
        %p374 = pneg %p83
        %p375 = pneg %p107
        %p376 = pneg %p104
        %p377 = pneg %p128
        %p378 = pneg %p125
        %p379 = pneg %p149
        %p380 = pneg %p146
        %p381 = pneg %p170
        %p382 = pneg %p167
        %p383 = pneg %p191
        %p384 = pneg %p188
        %p385 = pneg %p212
        %p386 = pneg %p209
        %p387 = pneg %p238
        %p388 = pneg %p235
        %p389 = scmp.lt.s32.totalorder %s23, 1
        %s390 = scalar_select %p389, %s23, 1
        %s391 = smul.addr %s390, 8
        %s392 = scalar_lea.vmem %s9, %s391
        %p393 = scmp.lt.s32.totalorder %s23, 1
        %s394 = scalar_select %p393, %s23, 1
        %s395 = smul.addr %s394, 8
        %s396 = scalar_lea.vmem %s0, %s395
        %p397 = scmp.lt.s32.totalorder %s23, 1
        %s398 = scalar_select %p397, %s23, 1
        %s399 = smul.addr %s398, 8
        %s400 = scalar_lea.vmem %s9, %s399
        %v402 = vld [vmem:[%s396] sm:$0xff]
        %vm403 = vcmask 523264
        %v404 = vsel %vm403, %v402, 0.0
        %405 = vadd.xlane.f32.xlu0 %v404
        %v406 = vpop.xlane.xlu0 %405
        %v407 = vrcp.pop 64.0
        %v408 = vmul.f32 64.0, %v407
        %v409 = vsub.f32 1.0, %v408
        %v410 = vmul.f32 %v407, %v409
        %v411 = vadd.f32 %v407, %v410
        %vm412 = vweird.f32 %v407
        %v413 = vsel %vm412, %v407, %v411
        %v414 = vmul.f32 %v406, %v413
        %v415 = vsub.f32 %v402, %v414
        %v416 = vmul.f32 %v415, %v415
        %v417 = vsel %vm403, %v416, 0.0
        %418 = vadd.xlane.f32.xlu0 %v417
        %v419 = vpop.xlane.xlu0 %418
        %v420 = vmul.f32 %v419, %v413
        %v421 = vadd.f32 %v420, 1e-05
        %v422 = vrsqrt.pop %v421
        %v423 = vmul.f32 %v422, %v421
        %v424 = vmul.f32 %v423, %v422
        %v425 = vmul.f32 0.5, %v424
        %v426 = vsub.f32 1.5, %v425
        %v427 = vmul.f32 %v422, %v426
        %vm428 = vweird.f32 %v421
        %vm429 = vweird.f32 %v422
        %vm430 = vmor %vm428, %vm429
        %v431 = vsel %vm430, %v422, %v427
        %v432 = vmul.f32 %v415, %v431
        %v433 = vld [vmem:[#allocation9] sm:$0x1]
        %v435 = vperm.slane %v433, 0
        %v437 = vmul.f32 %v432, %v435
        %v438 = vld [vmem:[#allocation10] sm:$0x1]
        %v440 = vperm.slane %v438, 0
        %v442 = vadd.f32 %v437, %v440
        %v443 = vpack.c.bf16 %v442, %v442
        %v444 = vld [vmem:[%s5] sm:$0xff]
        %v445 = vld [vmem:[%s5 + $0x8] sm:$0xff]
        %v446 = vld [vmem:[%s5 + $0x10] sm:$0xff]
        %v447 = vld [vmem:[%s5 + $0x18] sm:$0xff]
        %v448 = vld [vmem:[%s5 + $0x20] sm:$0xff]
        %v449 = vld [vmem:[%s5 + $0x28] sm:$0xff]
        %v450 = vld [vmem:[%s5 + $0x30] sm:$0xff]
        %v451 = vld [vmem:[%s5 + $0x38] sm:$0xff]
        %v452 = vld [vmem:[%s6] sm:$0x3]
        %v454 = vperm.slane %v452, 0
        %v455 = vperm.slane %v452, 1
        %v466 = vunpack.c.l.b16 %v444
        %v467 = vunpack.c.h.b16 %v444
        %v468 = vunpack.c.l.b16 %v445
        %v469 = vunpack.c.h.b16 %v445
        %v470 = vunpack.c.l.b16 %v446
        %v471 = vunpack.c.h.b16 %v446
        %v472 = vunpack.c.l.b16 %v447
        %v473 = vunpack.c.h.b16 %v447
        %v474 = vunpack.c.l.b16 %v448
        %v475 = vunpack.c.h.b16 %v448
        %v476 = vunpack.c.l.b16 %v449
        %v477 = vunpack.c.h.b16 %v449
        %v478 = vunpack.c.l.b16 %v450
        %v479 = vunpack.c.h.b16 %v450
        %v480 = vunpack.c.l.b16 %v451
        %v481 = vunpack.c.h.b16 %v451
        %v482 = vpack.c.b16 %v468, %v466
        %v483 = vpack.c.b16 %v469, %v467
        %v484 = vpack.c.b16 %v472, %v470
        %v485 = vpack.c.b16 %v473, %v471
        %v486 = vpack.c.b16 %v476, %v474
        %v487 = vpack.c.b16 %v477, %v475
        %v488 = vpack.c.b16 %v480, %v478
        %v489 = vpack.c.b16 %v481, %v479
        %v499 = vsel %vm403, %v443, 0
        %501 = vmatpush.bf16.msra.mxu0 0
        %502 = vmatpush.bf16.msra.mxu0 0
        %503 = vmatpush.bf16.msra.mxu0 0
        %504 = vmatpush.bf16.msra.mxu0 0
        %505 = vmatpush.bf16.msra.mxu0 %v488
        %506 = vmatpush.bf16.msra.mxu0 %v486
        %507 = vmatpush.bf16.msra.mxu0 %v484
        %508 = vmatpush.bf16.msra.mxu0 %v482
        %509 = vmatmul.bf16.gmra.mxu0 %v499
        %v510 = vpop.f32.mrf.mxu0
        %v511 = vadd.f32 %v454, %v510
        %v512 = vpop.f32.mrf.mxu0
        %513 = vdwg.mxu0
        %514 = vmatpush.bf16.msra.mxu0 0
        %515 = vmatpush.bf16.msra.mxu0 0
        %516 = vmatpush.bf16.msra.mxu0 0
        %517 = vmatpush.bf16.msra.mxu0 0
        %518 = vmatpush.bf16.msra.mxu0 %v489
        %519 = vmatpush.bf16.msra.mxu0 %v487
        %520 = vmatpush.bf16.msra.mxu0 %v485
        %521 = vmatpush.bf16.msra.mxu0 %v483
        %522 = vmatmul.bf16.gmra.mxu0 %v499
        %v523 = vpop.f32.mrf.mxu0
        %v524 = vadd.f32 %v455, %v523
        %v525 = vpop.f32.mrf.mxu0
        %526 = vdwg.mxu0
        %v527 = vpack.c.bf16 %v511, %v511
        %v528 = vpack.c.bf16 %v524, %v524
        %530 = vrot.lane.b32.xlu0 %v527, 64
        %v531 = vpop.permute.xlu0 %530
        %vm533 = vcmask 519168
        %534 = vst.msk [vmem:[#allocation2] sm:$0xf] %vm533, %v531
        %535 = vst.msk [vmem:[#allocation3] sm:$0xf] %vm533, %v528
        %v536 = vld [vmem:[#allocation2] sm:$0xf]
        %v537 = vld [vmem:[#allocation3] sm:$0xf]
        %v539 = vsel %vm403, %v527, 0
        %v542 = vsel %vm403, %v536, 0
        %544 = vmatpush.bf16.xpose.msra.mxu0 0
        %545 = vmatpush.bf16.xpose.msra.mxu0 0
        %546 = vmatpush.bf16.xpose.msra.mxu0 0
        %547 = vmatpush.bf16.xpose.msra.mxu0 0
        %548 = vmatpush.bf16.xpose.msra.mxu0 0
        %549 = vmatpush.bf16.xpose.msra.mxu0 0
        %550 = vmatpush.bf16.xpose.msra.mxu0 0
        %551 = vmatpush.bf16.xpose.msra.mxu0 %v542
        %552 = vmatmul.bf16.gmra.mxu0 %v539
        %v553 = vpop.f32.mrf.mxu0
        %v554 = vadd.f32 0.0, %v553
        %v555 = vpop.f32.mrf.mxu0
        %556 = vdwg.mxu0
        %vm557 = vcmask 64512
        %v558 = vsel %vm557, %v554, -inf
        %559 = vmax.xlane.f32.xlu0 %v558
        %v560 = vpop.xlane.xlu0 %559
        %v561 = vsub.f32 -inf, %v560
        %v562 = vmul.f32 %v561, 1.442695
        %v563 = vpow.pop %v562
        %v564 = vsub.f32 %v554, %v560
        %v565 = vmul.f32 %v564, 1.442695
        %v566 = vpow.pop %v565
        %v567 = vmul.f32 %v563, 0.0
        %v568 = vsel %vm557, %v566, 0.0
        %569 = vadd.xlane.f32.xlu0 %v568
        %v570 = vpop.xlane.xlu0 %569
        %v571 = vadd.f32 %v567, %v570
        %v572 = vpack.c.bf16 %v566, %v566
        %v574 = vsel %vm557, %v572, 0
        %vm576 = vcmask 1043456
        %v578 = vsel %vm576, %v537, 0
        %580 = vmatpush.bf16.msra.mxu0 0
        %581 = vmatpush.bf16.msra.mxu0 0
        %582 = vmatpush.bf16.msra.mxu0 0
        %583 = vmatpush.bf16.msra.mxu0 0
        %584 = vmatpush.bf16.msra.mxu0 0
        %585 = vmatpush.bf16.msra.mxu0 0
        %586 = vmatpush.bf16.msra.mxu0 0
        %587 = vmatpush.bf16.msra.mxu0 %v578
        %588 = vmatmul.bf16.gmra.mxu0 %v574
        %v589 = vpop.f32.mrf.mxu0
        %v590 = vadd.f32 0.0, %v589
        %v591 = vpop.f32.mrf.mxu0
        %592 = vdwg.mxu0
        %v593 = vadd.f32 %v567, %v590
        %v594 = vrcp.pop %v571
        %v595 = vmul.f32 %v593, %v594
        %v596 = vpack.c.bf16 %v595, %v595
        %597 = vst.msk [vmem:[#allocation4] sm:$0xf] %vm533, %v596
        %v598 = vld [vmem:[#allocation4] sm:$0xf]
        %v599 = vld [vmem:[%s7] sm:$0xf]
        %v600 = vld [vmem:[%s7 + $0x4] sm:$0xf]
        %v601 = vld [vmem:[%s7 + $0x8] sm:$0xf]
        %v602 = vld [vmem:[%s7 + $0xc] sm:$0xf]
        %v603 = vld [vmem:[%s7 + $0x10] sm:$0xf]
        %v604 = vld [vmem:[%s7 + $0x14] sm:$0xf]
        %v605 = vld [vmem:[%s7 + $0x18] sm:$0xf]
        %v606 = vld [vmem:[%s7 + $0x1c] sm:$0xf]
        %v607 = vld [vmem:[#allocation12] sm:$0x1]
        %v609 = vperm.slane %v607, 0
        %v619 = vunpack.c.l.b16 %v599
        %v620 = vunpack.c.l.b16 %v600
        %v621 = vunpack.c.l.b16 %v601
        %v622 = vunpack.c.l.b16 %v602
        %v623 = vunpack.c.l.b16 %v603
        %v624 = vunpack.c.l.b16 %v604
        %v625 = vunpack.c.l.b16 %v605
        %v626 = vunpack.c.l.b16 %v606
        %v627 = vpack.c.b16 %v620, %v619
        %v628 = vpack.c.b16 %v622, %v621
        %v629 = vpack.c.b16 %v624, %v623
        %v630 = vpack.c.b16 %v626, %v625
        %v636 = vsel %vm403, %v598, 0
        %638 = vmatpush.bf16.msra.mxu0 0
        %639 = vmatpush.bf16.msra.mxu0 0
        %640 = vmatpush.bf16.msra.mxu0 0
        %641 = vmatpush.bf16.msra.mxu0 0
        %642 = vmatpush.bf16.msra.mxu0 %v630
        %643 = vmatpush.bf16.msra.mxu0 %v629
        %644 = vmatpush.bf16.msra.mxu0 %v628
        %645 = vmatpush.bf16.msra.mxu0 %v627
        %646 = vmatmul.bf16.gmra.mxu0 %v636
        %v647 = vpop.f32.mrf.mxu0
        %v648 = vadd.f32 %v609, %v647
        %v649 = vpop.f32.mrf.mxu0
        %650 = vdwg.mxu0
        %v651 = vadd.f32 %v402, %v648
        %652 = vst.msk [vmem:[%s400] sm:$0xff] %vm403, %v651
        %p653 = scmp.lt.s32.totalorder %s23, 1
        %s654 = scalar_select %p653, %s23, 1
        %s655 = smul.addr %s654, 8
        %s656 = scalar_lea.vmem %s9, %s655
        // Predicated region
        $region77: #{clip_forward.13} parent=55 // pred_check
          %p657 = pneg %p235
        $region78: #{clip_forward.13} parent=55 // pred_check_branch
          %659 = sbr.rel (%p657) target = $region80
        $region79: #{clip_forward.13} parent=55 // pred_region
          _
        $region80: #{clip_forward.13} parent=55 // pred_fallthru
          _
      $region56: #{clip_forward.13} parent=5 // pred_fallthru
        _
      %p660 = scmp.le.s32.totalorder 2, %s18
      // Predicated region
      $region81: #{clip_forward.13} parent=5 // pred_check
        %p661 = pneg %p660
      $region82: #{clip_forward.13} parent=5 // pred_check_branch
        %663 = sbr.rel (%p661) target = $region84
      $region83: #{clip_forward.13} parent=5 // pred_region
        %s664 = ssub.s32 %s18, 2
        // Predicated region
        $region85: #{clip_forward.13} parent=83 // pred_check
          %p665 = pneg %p241
        $region86: #{clip_forward.13} parent=83 // pred_check_branch
          %667 = sbr.rel (%p665) target = $region88
        $region87: #{clip_forward.13} parent=83 // pred_region
          %p668 = scmp.lt.s32.totalorder %s24, 1
          %s669 = scalar_select %p668, %s24, 1
          %s670 = smul.addr %s669, 8
          %s671 = scalar_lea.vmem %s9, %s670
        $region88: #{clip_forward.13} parent=83 // pred_fallthru
          _
      $region84: #{clip_forward.13} parent=5 // pred_fallthru
        _
    $region6: #{clip_forward.13} parent=1 // loop_footer
      %s22 = sadd.s32 1, %s18
    $region7: #{clip_forward.13} parent=1 // loop_footer_branch
      %17 = sbr.rel target = $region3
    $region8: #{clip_forward.13} parent=1 // loop_exit
      _
    %672 = vsyncpa [#allocation6], 1
    %s673 = scalar_lea.sflag [#allocation6], 1
    %674 = vsyncpa %s673, 1
    %675 = vsyncpa [#allocation8], 1
    %676 = vsyncpa [#allocation11], 1

</llo_original>
